<compile_context>
chip_gen: v6e
topology: v6e:2x2x1
jax: 0.10.0
libtpu: 0.0.40
codegen_flags: <defaults>
</compile_context>

<pallas_src>
import functools

import jax
import jax.numpy as jnp
import numpy as np
from jax.experimental import pallas as pl
from jax.experimental.pallas import tpu as pltpu


def _round_up(v, m):
    return (v + m - 1) // m * m


def _vmem_capacity_bytes():
    """Physical VMEM of the attached TPU (fallback: 64 MiB, v7x-safe)."""
    try:
        cap = getattr(pltpu.get_tpu_info(), "vmem_capacity_bytes", None)
        if cap:
            return int(cap)
    except Exception:
        pass
    return 64 * 1024 * 1024


# ----------------------------- recurrent kernel -------------------------------
def _lstm_chunk_kernel(gx_ref, m_ref, whh_ref, hseq_ref, hfin_ref, cfin_ref,
                       h_scr, c_scr, *, Tc, H_pad, reverse, mm_dtype,
                       last_store_lt):
    """One grid step == one chunk of Tc timesteps of the LSTM recurrence.

    gx_ref:    (Tc, Bt, 4*H_pad)  x@W_ih^T + b_ih + b_hh (gate-padded, bf16 fast path)
    m_ref:     (Tc, Bt, 1)        f32 sequence mask (0 on padded rows)
    whh_ref:   (H_pad, 4*H_pad)   W_hh^T, gate-padded, mm_dtype
    hseq_ref:  (Tc, Bt, H_pad)    per-timestep hidden output (stream dtype)
    hfin/cfin: (Bt, H_pad) f32    final hidden / cell state (written once)
    h_scr/c_scr: (Bt, H_pad) f32  carries, persist across time chunks
    """
    c_idx = pl.program_id(1)        # time-chunk grid index
    n_chunks = pl.num_programs(1)

    @pl.when(c_idx == 0)
    def _():                        # initial = None -> zeros
        h_scr[...] = jnp.zeros_like(h_scr)
        c_scr[...] = jnp.zeros_like(c_scr)

    h = h_scr[...]
    c = c_scr[...]
    whh = whh_ref[...]

    # Fully unrolled inner time loop (Tc is small and static -> constant indices).
    for step in range(Tc):
        lt = (Tc - 1 - step) if reverse else step     # local slot, original order
        gates = gx_ref[lt].astype(jnp.float32) + jnp.dot(
            h.astype(mm_dtype), whh, preferred_element_type=jnp.float32)
        # PyTorch LSTMCell gate order: i, f, g, o (lane-aligned, H_pad % 128 == 0)
        i_g = jax.nn.sigmoid(gates[:, 0 * H_pad:1 * H_pad])
        f_g = jax.nn.sigmoid(gates[:, 1 * H_pad:2 * H_pad])
        g_g = jnp.tanh(gates[:, 2 * H_pad:3 * H_pad])
        o_g = jax.nn.sigmoid(gates[:, 3 * H_pad:4 * H_pad])
        c_new = f_g * c + i_g * g_g
        h_new = o_g * jnp.tanh(c_new)
        m_t = m_ref[lt]                               # (Bt, 1)
        h = h_new * m_t                               # blend vs zero initial state
        c = c_new * m_t
        hseq_ref[lt] = h.astype(hseq_ref.dtype)

        # Final state is captured at the LAST REAL timestep of this direction
        # (forward: t = T-1, backward: t = 0) -> padded (mask==0) timesteps never
        # corrupt it and no per-step where(valid, ...) is needed.
        if lt == last_store_lt:                       # static Python condition
            h_fin, c_fin = h, c

            @pl.when(c_idx == n_chunks - 1)
            def _():
                hfin_ref[...] = h_fin
                cfin_ref[...] = c_fin

    h_scr[...] = h
    c_scr[...] = c


# ------------------------------ single direction ------------------------------
def lstm_direction(x_p, masks_p, W_ih, W_hh, b_ih, b_hh, *, reverse, T, Tc,
                   batch_block=None, mm_dtype=jnp.bfloat16):
    """Run one LSTM cell over a time-padded sequence.

    x_p:     (T_pad, B, D_in)  time-padded input (padded rows have mask == 0)
    masks_p: (T_pad, B, 1)     f32 mask
    W_ih: (4H, D), W_hh: (4H, H), b_*: (4H,)   (PyTorch LSTMCell layout, D <= D_in)
    Returns (h_seq (T_pad, B, H_pad) stream dtype, in original time order,
             h_final (B, H_pad) f32, c_final (B, H_pad) f32).
    """
    T_pad, B, D_in = x_p.shape
    H = W_hh.shape[1]
    D = W_ih.shape[1]
    assert D <= D_in and T_pad % Tc == 0 and 0 < T <= T_pad
    H_pad = _round_up(H, 128)                       # lane-aligned gates & h store
    nC = T_pad // Tc
    Bt = B if batch_block is None else batch_block
    assert B % Bt == 0
    # Bt is the sublane dim of every block: full batch, or a multiple of 8
    # (16 when the streamed blocks are sub-32-bit) per the (8,128)/packing rule.
    assert Bt == B or Bt % (16 if np.dtype(mm_dtype).itemsize < 4 else 8) == 0
    nB = B // Bt
    stream_dtype = mm_dtype          # dtype of the big streamed tensors (gx, h_seq)

    # -- gate-major padded weights / bias (pad the small tensors, not gates_x) --
    wih = jnp.pad(W_ih.reshape(4, H, D), ((0, 0), (0, H_pad - H), (0, D_in - D)))
    wih = wih.reshape(4 * H_pad, D_in).astype(mm_dtype)
    bias = jnp.pad((b_ih + b_hh).reshape(4, H), ((0, 0), (0, H_pad - H)))
    bias = bias.reshape(4 * H_pad).astype(jnp.float32)
    whh_t = jnp.transpose(W_hh.reshape(4, H, H), (2, 0, 1))   # (in_h, gate, out_h)
    whh_t = jnp.pad(whh_t, ((0, H_pad - H), (0, 0), (0, H_pad - H)))
    whh_t = whh_t.reshape(H_pad, 4 * H_pad).astype(mm_dtype)

    # -- hoisted input projection: one large (bf16) MXU matmul, f32 accumulate --
    gx = jnp.einsum("tbd,gd->tbg", x_p.astype(mm_dtype), wih,
                    preferred_element_type=jnp.float32) + bias
    gx = gx.astype(stream_dtype)     # streamed to the kernel in bf16 (fast path)

    if reverse:
        def time_idx(ci):                   # reversed addressing, no jnp.flip
            return nC - 1 - ci
    else:
        def time_idx(ci):
            return ci

    # Local slot of the last REAL timestep processed by this direction.
    last_store_lt = 0 if reverse else (T - 1) % Tc

    kernel = functools.partial(_lstm_chunk_kernel, Tc=Tc, H_pad=H_pad,
                               reverse=reverse, mm_dtype=mm_dtype,
                               last_store_lt=last_store_lt)

    grid_spec = pltpu.PrefetchScalarGridSpec(
        num_scalar_prefetch=0,
        grid=(nB, nC),
        in_specs=[
            pl.BlockSpec((Tc, Bt, 4 * H_pad), lambda b, ci: (time_idx(ci), b, 0)),
            pl.BlockSpec((Tc, Bt, 1), lambda b, ci: (time_idx(ci), b, 0)),
            # Grid-invariant weight block (DMA'd once).  TODO(synk): single-buffer
            # it (pipeline_mode=pl.Buffered(1)) once verified on the target build.
            pl.BlockSpec((H_pad, 4 * H_pad), lambda b, ci: (0, 0)),
        ],
        out_specs=[
            pl.BlockSpec((Tc, Bt, H_pad), lambda b, ci: (time_idx(ci), b, 0)),
            pl.BlockSpec((Bt, H_pad), lambda b, ci: (b, 0)),          # h_final
            pl.BlockSpec((Bt, H_pad), lambda b, ci: (b, 0)),          # c_final
        ],
        scratch_shapes=[pltpu.VMEM((Bt, H_pad), jnp.float32),         # h carry
                        pltpu.VMEM((Bt, H_pad), jnp.float32)],        # c carry
    )

    # Explicit VMEM budget: generation-aware cap (~56 MiB v7x, ~112 MiB v5e/v6e).
    s_b = np.dtype(stream_dtype).itemsize
    w_b = np.dtype(mm_dtype).itemsize
    est_bytes = (2 * Tc * Bt * 4 * H_pad * s_b        # gates_x block (x2 buffers)
                 + 2 * Tc * Bt * 1 * 4                # mask block
                 + 2 * H_pad * 4 * H_pad * w_b        # W_hh^T (conservative x2)
                 + 2 * Tc * Bt * H_pad * s_b          # h_seq out block
                 + 2 * 2 * Bt * H_pad * 4             # h_fin / c_fin
                 + 2 * Bt * H_pad * 4)                # f32 scratch carries
    cap = int(0.875 * _vmem_capacity_bytes())
    vmem_limit = int(min(cap, max(16 * 1024 * 1024, 2 * est_bytes)))

    h_seq, h_fin, c_fin = pl.pallas_call(
        kernel,
        out_shape=(jax.ShapeDtypeStruct((T_pad, B, H_pad), stream_dtype),
                   jax.ShapeDtypeStruct((B, H_pad), jnp.float32),
                   jax.ShapeDtypeStruct((B, H_pad), jnp.float32)),
        grid_spec=grid_spec,
        compiler_params=pltpu.CompilerParams(
            dimension_semantics=("parallel", "arbitrary"),  # time is sequential
            vmem_limit_bytes=vmem_limit),
    )(gx, masks_p, whh_t)

    return h_seq, h_fin, c_fin


# ------------------------------- full module ----------------------------------
def mylstm1_forward(x, masks, params, *, hidden_size, num_layers, bidirectional,
                    time_chunk=16, batch_block=None, mm_dtype=jnp.bfloat16):
    """Eval-mode forward of MyLSTM1 (batch_first=False, initial=None)."""
    T, B, _ = x.shape
    H = hidden_size
    Tc = max(1, min(T, time_chunk))
    nC = pl.cdiv(T, Tc)
    T_pad = nC * Tc

    # Time-pad once; padded rows carry mask == 0.  Inter-layer tensors stay in
    # the padded (T_pad, B, H_pad) layout; the final slice happens once below.
    x_p = jnp.pad(x, ((0, T_pad - T), (0, 0), (0, 0)))
    masks_p = jnp.pad(masks.astype(jnp.float32),
                      ((0, T_pad - T), (0, 0)))[:, :, None]

    run = functools.partial(lstm_direction, T=T, Tc=Tc,
                            batch_block=batch_block, mm_dtype=mm_dtype)

    h_n, c_n = [], []
    inp = x_p
    for layer in range(num_layers):
        Wih, Whh, bih, bhh = params["f"][layer]
        out_f, hF, cF = run(inp, masks_p, Wih, Whh, bih, bhh, reverse=False)
        h_n.append(hF); c_n.append(cF)
        if bidirectional:
            Wib, Whb, bib, bhb = params["b"][layer]
            out_b, hB, cB = run(out_f, masks_p, Wib, Whb, bib, bhb, reverse=True)
            h_n.append(hB); c_n.append(cB)
            inp = out_b          # module feeds ONLY the backward output forward
        else:
            inp = out_f

    out = inp[:T, :, :H].astype(x.dtype)
    h_n = jnp.stack([h[:, :H] for h in h_n], 0).astype(x.dtype)
    c_n = jnp.stack([c[:, :H] for c in c_n], 0).astype(x.dtype)
    return out, (h_n, c_n)


# ----------------------------- pure-JAX reference -----------------------------
def _ref_direction(x, masks3, W_ih, W_hh, b_ih, b_hh, *, reverse):
    B = x.shape[1]
    H = W_hh.shape[1]
    h0 = jnp.zeros((B, H), jnp.float32)
    c0 = jnp.zeros((B, H), jnp.float32)

    def step(carry, xs):
        h, c = carry
        xt, mt = xs
        gates = xt @ W_ih.T + b_ih + h @ W_hh.T + b_hh
        i, f, g, o = jnp.split(gates, 4, axis=-1)
        i, f, o = jax.nn.sigmoid(i), jax.nn.sigmoid(f), jax.nn.sigmoid(o)
        g = jnp.tanh(g)
        c_new = f * c + i * g
        h_new = o * jnp.tanh(c_new)
        h_new = h_new * mt + h0 * (1.0 - mt)
        c_new = c_new * mt + c0 * (1.0 - mt)
        return (h_new, c_new), h_new

    (hF, cF), hs = jax.lax.scan(step, (h0, c0), (x, masks3), reverse=reverse)
    return hs, hF, cF


def _ref_forward(x, masks, params, *, num_layers, bidirectional):
    masks3 = masks[:, :, None].astype(jnp.float32)
    h_n, c_n = [], []
    inp = x
    for layer in range(num_layers):
        out_f, hF, cF = _ref_direction(inp, masks3, *params["f"][layer],
                                       reverse=False)
        h_n.append(hF); c_n.append(cF)
        if bidirectional:
            out_b, hB, cB = _ref_direction(out_f, masks3, *params["b"][layer],
                                           reverse=True)
            h_n.append(hB); c_n.append(cB)
            inp = out_b
        else:
            inp = out_f
    return inp, (jnp.stack(h_n, 0), jnp.stack(c_n, 0))


# ------------------------------------ main ------------------------------------
if __name__ == "__main__":
    T, B = 10, 8                       # T not a multiple of the chunk: tests padding
    input_size, hidden_size = 16, 32
    num_layers, bidirectional = 2, True

    key = jax.random.PRNGKey(0)

    def make_cell_params(key, in_size, hid):
        k1, k2, k3, k4 = jax.random.split(key, 4)
        W_ih = 0.1 * jax.random.normal(k1, (4 * hid, in_size), jnp.float32)
        W_hh = 0.1 * jax.random.normal(k2, (4 * hid, hid), jnp.float32)
        b_ih = 0.1 * jax.random.normal(k3, (4 * hid,), jnp.float32)
        b_hh = 0.1 * jax.random.normal(k4, (4 * hid,), jnp.float32)
        return (W_ih, W_hh, b_ih, b_hh)

    params = {"f": [], "b": []}
    for layer in range(num_layers):
        key, kf, kb = jax.random.split(key, 3)
        layer_in = input_size if layer == 0 else hidden_size
        params["f"].append(make_cell_params(kf, layer_in, hidden_size))
        if bidirectional:
            # backward cell input_size == hidden_size (matches module __init__)
            params["b"].append(make_cell_params(kb, hidden_size, hidden_size))

    key, kx, km = jax.random.split(key, 3)
    x = jax.random.normal(kx, (T, B, input_size), jnp.float32)
    masks = (jax.random.uniform(km, (T, B)) > 0.2).astype(jnp.float32)

    # Reference at highest matmul precision so the tight f32 check is meaningful.
    with jax.default_matmul_precision("highest"):
        out_r, (h_r, c_r) = _ref_forward(x, masks, params, num_layers=num_layers,
                                         bidirectional=bidirectional)
        jax.block_until_ready((out_r, h_r, c_r))

    # f32 recurrent/stream path: tight check against the pure-f32 reference.
    fwd_f32 = functools.partial(mylstm1_forward, hidden_size=hidden_size,
                                num_layers=num_layers, bidirectional=bidirectional,
                                time_chunk=4, mm_dtype=jnp.float32)
    out, (h_n, c_n) = jax.jit(fwd_f32)(x, masks, params)
    jax.block_until_ready((out, h_n, c_n))
    np.testing.assert_allclose(np.asarray(out), np.asarray(out_r), rtol=1e-3, atol=1e-3)
    np.testing.assert_allclose(np.asarray(h_n), np.asarray(h_r), rtol=1e-3, atol=1e-3)
    np.testing.assert_allclose(np.asarray(c_n), np.asarray(c_r), rtol=1e-3, atol=1e-3)

    # bf16 streaming path (default fast path): looser tolerance vs f32 reference.
    fwd_bf16 = functools.partial(mylstm1_forward, hidden_size=hidden_size,
                                 num_layers=num_layers, bidirectional=bidirectional,
                                 time_chunk=4, mm_dtype=jnp.bfloat16)
    out_b16, (h_b16, c_b16) = jax.jit(fwd_bf16)(x, masks, params)
    jax.block_until_ready((out_b16, h_b16, c_b16))
    np.testing.assert_allclose(np.asarray(out_b16), np.asarray(out_r), rtol=3e-2, atol=3e-2)
    np.testing.assert_allclose(np.asarray(h_b16), np.asarray(h_r), rtol=3e-2, atol=3e-2)
    np.testing.assert_allclose(np.asarray(c_b16), np.asarray(c_r), rtol=3e-2, atol=3e-2)

    print("KERNEL_OK")
</pallas_src>

<mosaic_0001>
module attributes {stable_mosaic.version = 11 : i64} {
  func.func @_lstm_chunk_kernel(%arg0: i32, %arg1: i32, %arg2: memref<4x8x512xf32, #tpu.memory_space<vmem>>, %arg3: memref<4x8x1xf32, #tpu.memory_space<vmem>>, %arg4: memref<128x512xf32, #tpu.memory_space<vmem>>, %arg5: memref<4x8x128xf32, #tpu.memory_space<vmem>>, %arg6: memref<8x128xf32, #tpu.memory_space<vmem>>, %arg7: memref<8x128xf32, #tpu.memory_space<vmem>>, %arg8: memref<8x128xf32, #tpu.memory_space<vmem>>, %arg9: memref<8x128xf32, #tpu.memory_space<vmem>>) attributes {dimension_semantics = [#tpu.dimension_semantics<parallel>, #tpu.dimension_semantics<arbitrary>], iteration_bounds = array<i64: 1, 3>, scalar_prefetch = 0 : i64, scratch_operands = 2 : i64, tpu.core_type = #tpu.core_type<tc>, window_params = [{transform_indices = @transform_0, window_bounds = array<i64: 4, 8, 512>}, {transform_indices = @transform_1, window_bounds = array<i64: 4, 8, 1>}, {pipeline_mode = #tpu.pipeline_mode<synchronous>, transform_indices = @transform_2, window_bounds = array<i64: 128, 512>}, {transform_indices = @transform_3, window_bounds = array<i64: 4, 8, 128>}, {transform_indices = @transform_4, window_bounds = array<i64: 8, 128>}, {transform_indices = @transform_5, window_bounds = array<i64: 8, 128>}]} {
    %c0_i32 = arith.constant 0 : i32
    %0 = arith.cmpi eq, %arg1, %c0_i32 : i32
    %1 = arith.extui %0 : i1 to i32
    %c0_i32_0 = arith.constant 0 : i32
    %2 = arith.cmpi ne, %1, %c0_i32_0 : i32
    scf.if %2 {
      %cst_59 = arith.constant 0.000000e+00 : f32
      %163 = vector.broadcast %cst_59 : f32 to vector<8x128xf32>
      %c0_60 = arith.constant 0 : index
      %c0_61 = arith.constant 0 : index
      %164 = vector.load %arg8[%c0_60, %c0_61] : memref<8x128xf32, #tpu.memory_space<vmem>>, vector<8x128xf32>
      tpu.vector_store %arg8[%c0_60, %c0_61], %163 {strides = array<i32>} : memref<8x128xf32, #tpu.memory_space<vmem>>, vector<8x128xf32>,
      %cst_62 = arith.constant 0.000000e+00 : f32
      %165 = vector.broadcast %cst_62 : f32 to vector<8x128xf32>
      %c0_63 = arith.constant 0 : index
      %c0_64 = arith.constant 0 : index
      %166 = vector.load %arg9[%c0_63, %c0_64] : memref<8x128xf32, #tpu.memory_space<vmem>>, vector<8x128xf32>
      tpu.vector_store %arg9[%c0_63, %c0_64], %165 {strides = array<i32>} : memref<8x128xf32, #tpu.memory_space<vmem>>, vector<8x128xf32>,
    } else {
    }
    %c0 = arith.constant 0 : index
    %c0_1 = arith.constant 0 : index
    %3 = vector.load %arg8[%c0, %c0_1] : memref<8x128xf32, #tpu.memory_space<vmem>>, vector<8x128xf32>
    %c0_2 = arith.constant 0 : index
    %c0_3 = arith.constant 0 : index
    %4 = vector.load %arg9[%c0_2, %c0_3] : memref<8x128xf32, #tpu.memory_space<vmem>>, vector<8x128xf32>
    %c0_4 = arith.constant 0 : index
    %c0_5 = arith.constant 0 : index
    %5 = vector.load %arg4[%c0_4, %c0_5] : memref<128x512xf32, #tpu.memory_space<vmem>>, vector<128x512xf32>
    %c0_6 = arith.constant 0 : index
    %c0_7 = arith.constant 0 : index
    %c0_8 = arith.constant 0 : index
    %6 = vector.load %arg2[%c0_6, %c0_7, %c0_8] : memref<4x8x512xf32, #tpu.memory_space<vmem>>, vector<1x8x512xf32>
    %7 = vector.shape_cast %6 : vector<1x8x512xf32> to vector<8x512xf32>
    %cst = arith.constant dense<0.000000e+00> : vector<8x512xf32>
    %8 = tpu.matmul %3, %5, %cst {dimension_numbers = #tpu.dot_dimension_numbers<[1], [0], [0], [1], [0, 0, 1, 1], [], []>} : vector<8x128xf32>, vector<128x512xf32>, vector<8x512xf32> -> vector<8x512xf32>
    %9 = arith.addf %7, %8 : vector<8x512xf32>
    %10 = vector.extract_strided_slice %9 {offsets = [0, 0], sizes = [8, 128], strides = [1, 1]} : vector<8x512xf32> to vector<8x128xf32>
    %11 = arith.negf %10 : vector<8x128xf32>
    %12 = math.exp %11 : vector<8x128xf32>
    %cst_9 = arith.constant 1.000000e+00 : f32
    %13 = vector.broadcast %cst_9 : f32 to vector<8x128xf32>
    %14 = arith.addf %13, %12 : vector<8x128xf32>
    %15 = arith.divf %13, %14 : vector<8x128xf32>
    %16 = vector.extract_strided_slice %9 {offsets = [0, 128], sizes = [8, 128], strides = [1, 1]} : vector<8x512xf32> to vector<8x128xf32>
    %17 = arith.negf %16 : vector<8x128xf32>
    %18 = math.exp %17 : vector<8x128xf32>
    %cst_10 = arith.constant 1.000000e+00 : f32
    %19 = vector.broadcast %cst_10 : f32 to vector<8x128xf32>
    %20 = arith.addf %19, %18 : vector<8x128xf32>
    %21 = arith.divf %19, %20 : vector<8x128xf32>
    %22 = vector.extract_strided_slice %9 {offsets = [0, 256], sizes = [8, 128], strides = [1, 1]} : vector<8x512xf32> to vector<8x128xf32>
    %23 = math.tanh %22 : vector<8x128xf32>
    %24 = vector.extract_strided_slice %9 {offsets = [0, 384], sizes = [8, 128], strides = [1, 1]} : vector<8x512xf32> to vector<8x128xf32>
    %25 = arith.negf %24 : vector<8x128xf32>
    %26 = math.exp %25 : vector<8x128xf32>
    %cst_11 = arith.constant 1.000000e+00 : f32
    %27 = vector.broadcast %cst_11 : f32 to vector<8x128xf32>
    %28 = arith.addf %27, %26 : vector<8x128xf32>
    %29 = arith.divf %27, %28 : vector<8x128xf32>
    %30 = arith.mulf %21, %4 : vector<8x128xf32>
    %31 = arith.mulf %15, %23 : vector<8x128xf32>
    %32 = arith.addf %30, %31 : vector<8x128xf32>
    %33 = math.tanh %32 : vector<8x128xf32>
    %34 = arith.mulf %29, %33 : vector<8x128xf32>
    %c0_12 = arith.constant 0 : index
    %c0_13 = arith.constant 0 : index
    %c0_14 = arith.constant 0 : index
    %35 = vector.load %arg3[%c0_12, %c0_13, %c0_14] : memref<4x8x1xf32, #tpu.memory_space<vmem>>, vector<1x8x1xf32>
    %36 = vector.shape_cast %35 : vector<1x8x1xf32> to vector<8x1xf32>
    %37 = vector.broadcast %36 : vector<8x1xf32> to vector<8x128xf32>
    %38 = arith.mulf %34, %37 : vector<8x128xf32>
    %39 = vector.broadcast %36 : vector<8x1xf32> to vector<8x128xf32>
    %40 = arith.mulf %32, %39 : vector<8x128xf32>
    %c0_15 = arith.constant 0 : index
    %c0_16 = arith.constant 0 : index
    %c0_17 = arith.constant 0 : index
    %41 = vector.load %arg5[%c0_15, %c0_16, %c0_17] : memref<4x8x128xf32, #tpu.memory_space<vmem>>, vector<1x8x128xf32>
    %42 = vector.shape_cast %41 : vector<1x8x128xf32> to vector<8x128xf32>
    %43 = vector.shape_cast %38 : vector<8x128xf32> to vector<1x8x128xf32>
    tpu.vector_store %arg5[%c0_15, %c0_16, %c0_17], %43 {strides = array<i32>} : memref<4x8x128xf32, #tpu.memory_space<vmem>>, vector<1x8x128xf32>,
    %c1 = arith.constant 1 : index
    %c0_18 = arith.constant 0 : index
    %c0_19 = arith.constant 0 : index
    %44 = vector.load %arg2[%c1, %c0_18, %c0_19] : memref<4x8x512xf32, #tpu.memory_space<vmem>>, vector<1x8x512xf32>
    %45 = vector.shape_cast %44 : vector<1x8x512xf32> to vector<8x512xf32>
    %cst_20 = arith.constant dense<0.000000e+00> : vector<8x512xf32>
    %46 = tpu.matmul %38, %5, %cst_20 {dimension_numbers = #tpu.dot_dimension_numbers<[1], [0], [0], [1], [0, 0, 1, 1], [], []>} : vector<8x128xf32>, vector<128x512xf32>, vector<8x512xf32> -> vector<8x512xf32>
    %47 = arith.addf %45, %46 : vector<8x512xf32>
    %48 = vector.extract_strided_slice %47 {offsets = [0, 0], sizes = [8, 128], strides = [1, 1]} : vector<8x512xf32> to vector<8x128xf32>
    %49 = arith.negf %48 : vector<8x128xf32>
    %50 = math.exp %49 : vector<8x128xf32>
    %cst_21 = arith.constant 1.000000e+00 : f32
    %51 = vector.broadcast %cst_21 : f32 to vector<8x128xf32>
    %52 = arith.addf %51, %50 : vector<8x128xf32>
    %53 = arith.divf %51, %52 : vector<8x128xf32>
    %54 = vector.extract_strided_slice %47 {offsets = [0, 128], sizes = [8, 128], strides = [1, 1]} : vector<8x512xf32> to vector<8x128xf32>
    %55 = arith.negf %54 : vector<8x128xf32>
    %56 = math.exp %55 : vector<8x128xf32>
    %cst_22 = arith.constant 1.000000e+00 : f32
    %57 = vector.broadcast %cst_22 : f32 to vector<8x128xf32>
    %58 = arith.addf %57, %56 : vector<8x128xf32>
    %59 = arith.divf %57, %58 : vector<8x128xf32>
    %60 = vector.extract_strided_slice %47 {offsets = [0, 256], sizes = [8, 128], strides = [1, 1]} : vector<8x512xf32> to vector<8x128xf32>
    %61 = math.tanh %60 : vector<8x128xf32>
    %62 = vector.extract_strided_slice %47 {offsets = [0, 384], sizes = [8, 128], strides = [1, 1]} : vector<8x512xf32> to vector<8x128xf32>
    %63 = arith.negf %62 : vector<8x128xf32>
    %64 = math.exp %63 : vector<8x128xf32>
    %cst_23 = arith.constant 1.000000e+00 : f32
    %65 = vector.broadcast %cst_23 : f32 to vector<8x128xf32>
    %66 = arith.addf %65, %64 : vector<8x128xf32>
    %67 = arith.divf %65, %66 : vector<8x128xf32>
    %68 = arith.mulf %59, %40 : vector<8x128xf32>
    %69 = arith.mulf %53, %61 : vector<8x128xf32>
    %70 = arith.addf %68, %69 : vector<8x128xf32>
    %71 = math.tanh %70 : vector<8x128xf32>
    %72 = arith.mulf %67, %71 : vector<8x128xf32>
    %c1_24 = arith.constant 1 : index
    %c0_25 = arith.constant 0 : index
    %c0_26 = arith.constant 0 : index
    %73 = vector.load %arg3[%c1_24, %c0_25, %c0_26] : memref<4x8x1xf32, #tpu.memory_space<vmem>>, vector<1x8x1xf32>
    %74 = vector.shape_cast %73 : vector<1x8x1xf32> to vector<8x1xf32>
    %75 = vector.broadcast %74 : vector<8x1xf32> to vector<8x128xf32>
    %76 = arith.mulf %72, %75 : vector<8x128xf32>
    %77 = vector.broadcast %74 : vector<8x1xf32> to vector<8x128xf32>
    %78 = arith.mulf %70, %77 : vector<8x128xf32>
    %c1_27 = arith.constant 1 : index
    %c0_28 = arith.constant 0 : index
    %c0_29 = arith.constant 0 : index
    %79 = vector.load %arg5[%c1_27, %c0_28, %c0_29] : memref<4x8x128xf32, #tpu.memory_space<vmem>>, vector<1x8x128xf32>
    %80 = vector.shape_cast %79 : vector<1x8x128xf32> to vector<8x128xf32>
    %81 = vector.shape_cast %76 : vector<8x128xf32> to vector<1x8x128xf32>
    tpu.vector_store %arg5[%c1_27, %c0_28, %c0_29], %81 {strides = array<i32>} : memref<4x8x128xf32, #tpu.memory_space<vmem>>, vector<1x8x128xf32>,
    %c2_i32 = arith.constant 2 : i32
    %82 = arith.cmpi eq, %arg1, %c2_i32 : i32
    %83 = arith.extui %82 : i1 to i32
    %c0_i32_30 = arith.constant 0 : i32
    %84 = arith.cmpi ne, %83, %c0_i32_30 : i32
    scf.if %84 {
      %c0_59 = arith.constant 0 : index
      %c0_60 = arith.constant 0 : index
      %163 = vector.load %arg6[%c0_59, %c0_60] : memref<8x128xf32, #tpu.memory_space<vmem>>, vector<8x128xf32>
      tpu.vector_store %arg6[%c0_59, %c0_60], %76 {strides = array<i32>} : memref<8x128xf32, #tpu.memory_space<vmem>>, vector<8x128xf32>,
      %c0_61 = arith.constant 0 : index
      %c0_62 = arith.constant 0 : index
      %164 = vector.load %arg7[%c0_61, %c0_62] : memref<8x128xf32, #tpu.memory_space<vmem>>, vector<8x128xf32>
      tpu.vector_store %arg7[%c0_61, %c0_62], %78 {strides = array<i32>} : memref<8x128xf32, #tpu.memory_space<vmem>>, vector<8x128xf32>,
    } else {
    }
    %c2 = arith.constant 2 : index
    %c0_31 = arith.constant 0 : index
    %c0_32 = arith.constant 0 : index
    %85 = vector.load %arg2[%c2, %c0_31, %c0_32] : memref<4x8x512xf32, #tpu.memory_space<vmem>>, vector<1x8x512xf32>
    %86 = vector.shape_cast %85 : vector<1x8x512xf32> to vector<8x512xf32>
    %cst_33 = arith.constant dense<0.000000e+00> : vector<8x512xf32>
    %87 = tpu.matmul %76, %5, %cst_33 {dimension_numbers = #tpu.dot_dimension_numbers<[1], [0], [0], [1], [0, 0, 1, 1], [], []>} : vector<8x128xf32>, vector<128x512xf32>, vector<8x512xf32> -> vector<8x512xf32>
    %88 = arith.addf %86, %87 : vector<8x512xf32>
    %89 = vector.extract_strided_slice %88 {offsets = [0, 0], sizes = [8, 128], strides = [1, 1]} : vector<8x512xf32> to vector<8x128xf32>
    %90 = arith.negf %89 : vector<8x128xf32>
    %91 = math.exp %90 : vector<8x128xf32>
    %cst_34 = arith.constant 1.000000e+00 : f32
    %92 = vector.broadcast %cst_34 : f32 to vector<8x128xf32>
    %93 = arith.addf %92, %91 : vector<8x128xf32>
    %94 = arith.divf %92, %93 : vector<8x128xf32>
    %95 = vector.extract_strided_slice %88 {offsets = [0, 128], sizes = [8, 128], strides = [1, 1]} : vector<8x512xf32> to vector<8x128xf32>
    %96 = arith.negf %95 : vector<8x128xf32>
    %97 = math.exp %96 : vector<8x128xf32>
    %cst_35 = arith.constant 1.000000e+00 : f32
    %98 = vector.broadcast %cst_35 : f32 to vector<8x128xf32>
    %99 = arith.addf %98, %97 : vector<8x128xf32>
    %100 = arith.divf %98, %99 : vector<8x128xf32>
    %101 = vector.extract_strided_slice %88 {offsets = [0, 256], sizes = [8, 128], strides = [1, 1]} : vector<8x512xf32> to vector<8x128xf32>
    %102 = math.tanh %101 : vector<8x128xf32>
    %103 = vector.extract_strided_slice %88 {offsets = [0, 384], sizes = [8, 128], strides = [1, 1]} : vector<8x512xf32> to vector<8x128xf32>
    %104 = arith.negf %103 : vector<8x128xf32>
    %105 = math.exp %104 : vector<8x128xf32>
    %cst_36 = arith.constant 1.000000e+00 : f32
    %106 = vector.broadcast %cst_36 : f32 to vector<8x128xf32>
    %107 = arith.addf %106, %105 : vector<8x128xf32>
    %108 = arith.divf %106, %107 : vector<8x128xf32>
    %109 = arith.mulf %100, %78 : vector<8x128xf32>
    %110 = arith.mulf %94, %102 : vector<8x128xf32>
    %111 = arith.addf %109, %110 : vector<8x128xf32>
    %112 = math.tanh %111 : vector<8x128xf32>
    %113 = arith.mulf %108, %112 : vector<8x128xf32>
    %c2_37 = arith.constant 2 : index
    %c0_38 = arith.constant 0 : index
    %c0_39 = arith.constant 0 : index
    %114 = vector.load %arg3[%c2_37, %c0_38, %c0_39] : memref<4x8x1xf32, #tpu.memory_space<vmem>>, vector<1x8x1xf32>
    %115 = vector.shape_cast %114 : vector<1x8x1xf32> to vector<8x1xf32>
    %116 = vector.broadcast %115 : vector<8x1xf32> to vector<8x128xf32>
    %117 = arith.mulf %113, %116 : vector<8x128xf32>
    %118 = vector.broadcast %115 : vector<8x1xf32> to vector<8x128xf32>
    %119 = arith.mulf %111, %118 : vector<8x128xf32>
    %c2_40 = arith.constant 2 : index
    %c0_41 = arith.constant 0 : index
    %c0_42 = arith.constant 0 : index
    %120 = vector.load %arg5[%c2_40, %c0_41, %c0_42] : memref<4x8x128xf32, #tpu.memory_space<vmem>>, vector<1x8x128xf32>
    %121 = vector.shape_cast %120 : vector<1x8x128xf32> to vector<8x128xf32>
    %122 = vector.shape_cast %117 : vector<8x128xf32> to vector<1x8x128xf32>
    tpu.vector_store %arg5[%c2_40, %c0_41, %c0_42], %122 {strides = array<i32>} : memref<4x8x128xf32, #tpu.memory_space<vmem>>, vector<1x8x128xf32>,
    %c3 = arith.constant 3 : index
    %c0_43 = arith.constant 0 : index
    %c0_44 = arith.constant 0 : index
    %123 = vector.load %arg2[%c3, %c0_43, %c0_44] : memref<4x8x512xf32, #tpu.memory_space<vmem>>, vector<1x8x512xf32>
    %124 = vector.shape_cast %123 : vector<1x8x512xf32> to vector<8x512xf32>
    %cst_45 = arith.constant dense<0.000000e+00> : vector<8x512xf32>
    %125 = tpu.matmul %117, %5, %cst_45 {dimension_numbers = #tpu.dot_dimension_numbers<[1], [0], [0], [1], [0, 0, 1, 1], [], []>} : vector<8x128xf32>, vector<128x512xf32>, vector<8x512xf32> -> vector<8x512xf32>
    %126 = arith.addf %124, %125 : vector<8x512xf32>
    %127 = vector.extract_strided_slice %126 {offsets = [0, 0], sizes = [8, 128], strides = [1, 1]} : vector<8x512xf32> to vector<8x128xf32>
    %128 = arith.negf %127 : vector<8x128xf32>
    %129 = math.exp %128 : vector<8x128xf32>
    %cst_46 = arith.constant 1.000000e+00 : f32
    %130 = vector.broadcast %cst_46 : f32 to vector<8x128xf32>
    %131 = arith.addf %130, %129 : vector<8x128xf32>
    %132 = arith.divf %130, %131 : vector<8x128xf32>
    %133 = vector.extract_strided_slice %126 {offsets = [0, 128], sizes = [8, 128], strides = [1, 1]} : vector<8x512xf32> to vector<8x128xf32>
    %134 = arith.negf %133 : vector<8x128xf32>
    %135 = math.exp %134 : vector<8x128xf32>
    %cst_47 = arith.constant 1.000000e+00 : f32
    %136 = vector.broadcast %cst_47 : f32 to vector<8x128xf32>
    %137 = arith.addf %136, %135 : vector<8x128xf32>
    %138 = arith.divf %136, %137 : vector<8x128xf32>
    %139 = vector.extract_strided_slice %126 {offsets = [0, 256], sizes = [8, 128], strides = [1, 1]} : vector<8x512xf32> to vector<8x128xf32>
    %140 = math.tanh %139 : vector<8x128xf32>
    %141 = vector.extract_strided_slice %126 {offsets = [0, 384], sizes = [8, 128], strides = [1, 1]} : vector<8x512xf32> to vector<8x128xf32>
    %142 = arith.negf %141 : vector<8x128xf32>
    %143 = math.exp %142 : vector<8x128xf32>
    %cst_48 = arith.constant 1.000000e+00 : f32
    %144 = vector.broadcast %cst_48 : f32 to vector<8x128xf32>
    %145 = arith.addf %144, %143 : vector<8x128xf32>
    %146 = arith.divf %144, %145 : vector<8x128xf32>
    %147 = arith.mulf %138, %119 : vector<8x128xf32>
    %148 = arith.mulf %132, %140 : vector<8x128xf32>
    %149 = arith.addf %147, %148 : vector<8x128xf32>
    %150 = math.tanh %149 : vector<8x128xf32>
    %151 = arith.mulf %146, %150 : vector<8x128xf32>
    %c3_49 = arith.constant 3 : index
    %c0_50 = arith.constant 0 : index
    %c0_51 = arith.constant 0 : index
    %152 = vector.load %arg3[%c3_49, %c0_50, %c0_51] : memref<4x8x1xf32, #tpu.memory_space<vmem>>, vector<1x8x1xf32>
    %153 = vector.shape_cast %152 : vector<1x8x1xf32> to vector<8x1xf32>
    %154 = vector.broadcast %153 : vector<8x1xf32> to vector<8x128xf32>
    %155 = arith.mulf %151, %154 : vector<8x128xf32>
    %156 = vector.broadcast %153 : vector<8x1xf32> to vector<8x128xf32>
    %157 = arith.mulf %149, %156 : vector<8x128xf32>
    %c3_52 = arith.constant 3 : index
    %c0_53 = arith.constant 0 : index
    %c0_54 = arith.constant 0 : index
    %158 = vector.load %arg5[%c3_52, %c0_53, %c0_54] : memref<4x8x128xf32, #tpu.memory_space<vmem>>, vector<1x8x128xf32>
    %159 = vector.shape_cast %158 : vector<1x8x128xf32> to vector<8x128xf32>
    %160 = vector.shape_cast %155 : vector<8x128xf32> to vector<1x8x128xf32>
    tpu.vector_store %arg5[%c3_52, %c0_53, %c0_54], %160 {strides = array<i32>} : memref<4x8x128xf32, #tpu.memory_space<vmem>>, vector<1x8x128xf32>,
    %c0_55 = arith.constant 0 : index
    %c0_56 = arith.constant 0 : index
    %161 = vector.load %arg8[%c0_55, %c0_56] : memref<8x128xf32, #tpu.memory_space<vmem>>, vector<8x128xf32>
    tpu.vector_store %arg8[%c0_55, %c0_56], %155 {strides = array<i32>} : memref<8x128xf32, #tpu.memory_space<vmem>>, vector<8x128xf32>,
    %c0_57 = arith.constant 0 : index
    %c0_58 = arith.constant 0 : index
    %162 = vector.load %arg9[%c0_57, %c0_58] : memref<8x128xf32, #tpu.memory_space<vmem>>, vector<8x128xf32>
    tpu.vector_store %arg9[%c0_57, %c0_58], %157 {strides = array<i32>} : memref<8x128xf32, #tpu.memory_space<vmem>>, vector<8x128xf32>,
    return
  }
  func.func @transform_0(%arg0: i32, %arg1: i32) -> (i32, i32, i32) {
    %c0_i32 = arith.constant 0 : i32
    %c0_i32_0 = arith.constant 0 : i32
    return %arg1, %arg0, %c0_i32 : i32, i32, i32
  }
  func.func @transform_1(%arg0: i32, %arg1: i32) -> (i32, i32, i32) {
    %c0_i32 = arith.constant 0 : i32
    %c0_i32_0 = arith.constant 0 : i32
    return %arg1, %arg0, %c0_i32 : i32, i32, i32
  }
  func.func @transform_2(%arg0: i32, %arg1: i32) -> (i32, i32) {
    %c0_i32 = arith.constant 0 : i32
    %c0_i32_0 = arith.constant 0 : i32
    %c0_i32_1 = arith.constant 0 : i32
    return %c0_i32, %c0_i32_0 : i32, i32
  }
  func.func @transform_3(%arg0: i32, %arg1: i32) -> (i32, i32, i32) {
    %c0_i32 = arith.constant 0 : i32
    %c0_i32_0 = arith.constant 0 : i32
    return %arg1, %arg0, %c0_i32 : i32, i32, i32
  }
  func.func @transform_4(%arg0: i32, %arg1: i32) -> (i32, i32) {
    %c0_i32 = arith.constant 0 : i32
    %c0_i32_0 = arith.constant 0 : i32
    return %arg0, %c0_i32 : i32, i32
  }
  func.func @transform_5(%arg0: i32, %arg1: i32) -> (i32, i32) {
    %c0_i32 = arith.constant 0 : i32
    %c0_i32_0 = arith.constant 0 : i32
    return %arg0, %c0_i32 : i32, i32
  }
}

module attributes {stable_mosaic.version = 11 : i64} {
  func.func @_lstm_chunk_kernel(%arg0: i32, %arg1: i32, %arg2: memref<4x8x512xf32, #tpu.memory_space<vmem>>, %arg3: memref<4x8x1xf32, #tpu.memory_space<vmem>>, %arg4: memref<128x512xf32, #tpu.memory_space<vmem>>, %arg5: memref<4x8x128xf32, #tpu.memory_space<vmem>>, %arg6: memref<8x128xf32, #tpu.memory_space<vmem>>, %arg7: memref<8x128xf32, #tpu.memory_space<vmem>>, %arg8: memref<8x128xf32, #tpu.memory_space<vmem>>, %arg9: memref<8x128xf32, #tpu.memory_space<vmem>>) attributes {dimension_semantics = [#tpu.dimension_semantics<parallel>, #tpu.dimension_semantics<arbitrary>], iteration_bounds = array<i64: 1, 3>, scalar_prefetch = 0 : i64, scratch_operands = 2 : i64, tpu.core_type = #tpu.core_type<tc>, window_params = [{transform_indices = @transform_0, window_bounds = array<i64: 4, 8, 512>}, {transform_indices = @transform_1, window_bounds = array<i64: 4, 8, 1>}, {pipeline_mode = #tpu.pipeline_mode<synchronous>, transform_indices = @transform_2, window_bounds = array<i64: 128, 512>}, {transform_indices = @transform_3, window_bounds = array<i64: 4, 8, 128>}, {transform_indices = @transform_4, window_bounds = array<i64: 8, 128>}, {transform_indices = @transform_5, window_bounds = array<i64: 8, 128>}]} {
    %c0_i32 = arith.constant 0 : i32
    %0 = arith.cmpi eq, %arg1, %c0_i32 : i32
    %1 = arith.extui %0 : i1 to i32
    %c0_i32_0 = arith.constant 0 : i32
    %2 = arith.cmpi ne, %1, %c0_i32_0 : i32
    scf.if %2 {
      %cst_59 = arith.constant 0.000000e+00 : f32
      %163 = vector.broadcast %cst_59 : f32 to vector<8x128xf32>
      %c0_60 = arith.constant 0 : index
      %c0_61 = arith.constant 0 : index
      %164 = vector.load %arg8[%c0_60, %c0_61] : memref<8x128xf32, #tpu.memory_space<vmem>>, vector<8x128xf32>
      tpu.vector_store %arg8[%c0_60, %c0_61], %163 {strides = array<i32>} : memref<8x128xf32, #tpu.memory_space<vmem>>, vector<8x128xf32>,
      %cst_62 = arith.constant 0.000000e+00 : f32
      %165 = vector.broadcast %cst_62 : f32 to vector<8x128xf32>
      %c0_63 = arith.constant 0 : index
      %c0_64 = arith.constant 0 : index
      %166 = vector.load %arg9[%c0_63, %c0_64] : memref<8x128xf32, #tpu.memory_space<vmem>>, vector<8x128xf32>
      tpu.vector_store %arg9[%c0_63, %c0_64], %165 {strides = array<i32>} : memref<8x128xf32, #tpu.memory_space<vmem>>, vector<8x128xf32>,
    } else {
    }
    %c0 = arith.constant 0 : index
    %c0_1 = arith.constant 0 : index
    %3 = vector.load %arg8[%c0, %c0_1] : memref<8x128xf32, #tpu.memory_space<vmem>>, vector<8x128xf32>
    %c0_2 = arith.constant 0 : index
    %c0_3 = arith.constant 0 : index
    %4 = vector.load %arg9[%c0_2, %c0_3] : memref<8x128xf32, #tpu.memory_space<vmem>>, vector<8x128xf32>
    %c0_4 = arith.constant 0 : index
    %c0_5 = arith.constant 0 : index
    %5 = vector.load %arg4[%c0_4, %c0_5] : memref<128x512xf32, #tpu.memory_space<vmem>>, vector<128x512xf32>
    %c3 = arith.constant 3 : index
    %c0_6 = arith.constant 0 : index
    %c0_7 = arith.constant 0 : index
    %6 = vector.load %arg2[%c3, %c0_6, %c0_7] : memref<4x8x512xf32, #tpu.memory_space<vmem>>, vector<1x8x512xf32>
    %7 = vector.shape_cast %6 : vector<1x8x512xf32> to vector<8x512xf32>
    %cst = arith.constant dense<0.000000e+00> : vector<8x512xf32>
    %8 = tpu.matmul %3, %5, %cst {dimension_numbers = #tpu.dot_dimension_numbers<[1], [0], [0], [1], [0, 0, 1, 1], [], []>} : vector<8x128xf32>, vector<128x512xf32>, vector<8x512xf32> -> vector<8x512xf32>
    %9 = arith.addf %7, %8 : vector<8x512xf32>
    %10 = vector.extract_strided_slice %9 {offsets = [0, 0], sizes = [8, 128], strides = [1, 1]} : vector<8x512xf32> to vector<8x128xf32>
    %11 = arith.negf %10 : vector<8x128xf32>
    %12 = math.exp %11 : vector<8x128xf32>
    %cst_8 = arith.constant 1.000000e+00 : f32
    %13 = vector.broadcast %cst_8 : f32 to vector<8x128xf32>
    %14 = arith.addf %13, %12 : vector<8x128xf32>
    %15 = arith.divf %13, %14 : vector<8x128xf32>
    %16 = vector.extract_strided_slice %9 {offsets = [0, 128], sizes = [8, 128], strides = [1, 1]} : vector<8x512xf32> to vector<8x128xf32>
    %17 = arith.negf %16 : vector<8x128xf32>
    %18 = math.exp %17 : vector<8x128xf32>
    %cst_9 = arith.constant 1.000000e+00 : f32
    %19 = vector.broadcast %cst_9 : f32 to vector<8x128xf32>
    %20 = arith.addf %19, %18 : vector<8x128xf32>
    %21 = arith.divf %19, %20 : vector<8x128xf32>
    %22 = vector.extract_strided_slice %9 {offsets = [0, 256], sizes = [8, 128], strides = [1, 1]} : vector<8x512xf32> to vector<8x128xf32>
    %23 = math.tanh %22 : vector<8x128xf32>
    %24 = vector.extract_strided_slice %9 {offsets = [0, 384], sizes = [8, 128], strides = [1, 1]} : vector<8x512xf32> to vector<8x128xf32>
    %25 = arith.negf %24 : vector<8x128xf32>
    %26 = math.exp %25 : vector<8x128xf32>
    %cst_10 = arith.constant 1.000000e+00 : f32
    %27 = vector.broadcast %cst_10 : f32 to vector<8x128xf32>
    %28 = arith.addf %27, %26 : vector<8x128xf32>
    %29 = arith.divf %27, %28 : vector<8x128xf32>
    %30 = arith.mulf %21, %4 : vector<8x128xf32>
    %31 = arith.mulf %15, %23 : vector<8x128xf32>
    %32 = arith.addf %30, %31 : vector<8x128xf32>
    %33 = math.tanh %32 : vector<8x128xf32>
    %34 = arith.mulf %29, %33 : vector<8x128xf32>
    %c3_11 = arith.constant 3 : index
    %c0_12 = arith.constant 0 : index
    %c0_13 = arith.constant 0 : index
    %35 = vector.load %arg3[%c3_11, %c0_12, %c0_13] : memref<4x8x1xf32, #tpu.memory_space<vmem>>, vector<1x8x1xf32>
    %36 = vector.shape_cast %35 : vector<1x8x1xf32> to vector<8x1xf32>
    %37 = vector.broadcast %36 : vector<8x1xf32> to vector<8x128xf32>
    %38 = arith.mulf %34, %37 : vector<8x128xf32>
    %39 = vector.broadcast %36 : vector<8x1xf32> to vector<8x128xf32>
    %40 = arith.mulf %32, %39 : vector<8x128xf32>
    %c3_14 = arith.constant 3 : index
    %c0_15 = arith.constant 0 : index
    %c0_16 = arith.constant 0 : index
    %41 = vector.load %arg5[%c3_14, %c0_15, %c0_16] : memref<4x8x128xf32, #tpu.memory_space<vmem>>, vector<1x8x128xf32>
    %42 = vector.shape_cast %41 : vector<1x8x128xf32> to vector<8x128xf32>
    %43 = vector.shape_cast %38 : vector<8x128xf32> to vector<1x8x128xf32>
    tpu.vector_store %arg5[%c3_14, %c0_15, %c0_16], %43 {strides = array<i32>} : memref<4x8x128xf32, #tpu.memory_space<vmem>>, vector<1x8x128xf32>,
    %c2 = arith.constant 2 : index
    %c0_17 = arith.constant 0 : index
    %c0_18 = arith.constant 0 : index
    %44 = vector.load %arg2[%c2, %c0_17, %c0_18] : memref<4x8x512xf32, #tpu.memory_space<vmem>>, vector<1x8x512xf32>
    %45 = vector.shape_cast %44 : vector<1x8x512xf32> to vector<8x512xf32>
    %cst_19 = arith.constant dense<0.000000e+00> : vector<8x512xf32>
    %46 = tpu.matmul %38, %5, %cst_19 {dimension_numbers = #tpu.dot_dimension_numbers<[1], [0], [0], [1], [0, 0, 1, 1], [], []>} : vector<8x128xf32>, vector<128x512xf32>, vector<8x512xf32> -> vector<8x512xf32>
    %47 = arith.addf %45, %46 : vector<8x512xf32>
    %48 = vector.extract_strided_slice %47 {offsets = [0, 0], sizes = [8, 128], strides = [1, 1]} : vector<8x512xf32> to vector<8x128xf32>
    %49 = arith.negf %48 : vector<8x128xf32>
    %50 = math.exp %49 : vector<8x128xf32>
    %cst_20 = arith.constant 1.000000e+00 : f32
    %51 = vector.broadcast %cst_20 : f32 to vector<8x128xf32>
    %52 = arith.addf %51, %50 : vector<8x128xf32>
    %53 = arith.divf %51, %52 : vector<8x128xf32>
    %54 = vector.extract_strided_slice %47 {offsets = [0, 128], sizes = [8, 128], strides = [1, 1]} : vector<8x512xf32> to vector<8x128xf32>
    %55 = arith.negf %54 : vector<8x128xf32>
    %56 = math.exp %55 : vector<8x128xf32>
    %cst_21 = arith.constant 1.000000e+00 : f32
    %57 = vector.broadcast %cst_21 : f32 to vector<8x128xf32>
    %58 = arith.addf %57, %56 : vector<8x128xf32>
    %59 = arith.divf %57, %58 : vector<8x128xf32>
    %60 = vector.extract_strided_slice %47 {offsets = [0, 256], sizes = [8, 128], strides = [1, 1]} : vector<8x512xf32> to vector<8x128xf32>
    %61 = math.tanh %60 : vector<8x128xf32>
    %62 = vector.extract_strided_slice %47 {offsets = [0, 384], sizes = [8, 128], strides = [1, 1]} : vector<8x512xf32> to vector<8x128xf32>
    %63 = arith.negf %62 : vector<8x128xf32>
    %64 = math.exp %63 : vector<8x128xf32>
    %cst_22 = arith.constant 1.000000e+00 : f32
    %65 = vector.broadcast %cst_22 : f32 to vector<8x128xf32>
    %66 = arith.addf %65, %64 : vector<8x128xf32>
    %67 = arith.divf %65, %66 : vector<8x128xf32>
    %68 = arith.mulf %59, %40 : vector<8x128xf32>
    %69 = arith.mulf %53, %61 : vector<8x128xf32>
    %70 = arith.addf %68, %69 : vector<8x128xf32>
    %71 = math.tanh %70 : vector<8x128xf32>
    %72 = arith.mulf %67, %71 : vector<8x128xf32>
    %c2_23 = arith.constant 2 : index
    %c0_24 = arith.constant 0 : index
    %c0_25 = arith.constant 0 : index
    %73 = vector.load %arg3[%c2_23, %c0_24, %c0_25] : memref<4x8x1xf32, #tpu.memory_space<vmem>>, vector<1x8x1xf32>
    %74 = vector.shape_cast %73 : vector<1x8x1xf32> to vector<8x1xf32>
    %75 = vector.broadcast %74 : vector<8x1xf32> to vector<8x128xf32>
    %76 = arith.mulf %72, %75 : vector<8x128xf32>
    %77 = vector.broadcast %74 : vector<8x1xf32> to vector<8x128xf32>
    %78 = arith.mulf %70, %77 : vector<8x128xf32>
    %c2_26 = arith.constant 2 : index
    %c0_27 = arith.constant 0 : index
    %c0_28 = arith.constant 0 : index
    %79 = vector.load %arg5[%c2_26, %c0_27, %c0_28] : memref<4x8x128xf32, #tpu.memory_space<vmem>>, vector<1x8x128xf32>
    %80 = vector.shape_cast %79 : vector<1x8x128xf32> to vector<8x128xf32>
    %81 = vector.shape_cast %76 : vector<8x128xf32> to vector<1x8x128xf32>
    tpu.vector_store %arg5[%c2_26, %c0_27, %c0_28], %81 {strides = array<i32>} : memref<4x8x128xf32, #tpu.memory_space<vmem>>, vector<1x8x128xf32>,
    %c1 = arith.constant 1 : index
    %c0_29 = arith.constant 0 : index
    %c0_30 = arith.constant 0 : index
    %82 = vector.load %arg2[%c1, %c0_29, %c0_30] : memref<4x8x512xf32, #tpu.memory_space<vmem>>, vector<1x8x512xf32>
    %83 = vector.shape_cast %82 : vector<1x8x512xf32> to vector<8x512xf32>
    %cst_31 = arith.constant dense<0.000000e+00> : vector<8x512xf32>
    %84 = tpu.matmul %76, %5, %cst_31 {dimension_numbers = #tpu.dot_dimension_numbers<[1], [0], [0], [1], [0, 0, 1, 1], [], []>} : vector<8x128xf32>, vector<128x512xf32>, vector<8x512xf32> -> vector<8x512xf32>
    %85 = arith.addf %83, %84 : vector<8x512xf32>
    %86 = vector.extract_strided_slice %85 {offsets = [0, 0], sizes = [8, 128], strides = [1, 1]} : vector<8x512xf32> to vector<8x128xf32>
    %87 = arith.negf %86 : vector<8x128xf32>
    %88 = math.exp %87 : vector<8x128xf32>
    %cst_32 = arith.constant 1.000000e+00 : f32
    %89 = vector.broadcast %cst_32 : f32 to vector<8x128xf32>
    %90 = arith.addf %89, %88 : vector<8x128xf32>
    %91 = arith.divf %89, %90 : vector<8x128xf32>
    %92 = vector.extract_strided_slice %85 {offsets = [0, 128], sizes = [8, 128], strides = [1, 1]} : vector<8x512xf32> to vector<8x128xf32>
    %93 = arith.negf %92 : vector<8x128xf32>
    %94 = math.exp %93 : vector<8x128xf32>
    %cst_33 = arith.constant 1.000000e+00 : f32
    %95 = vector.broadcast %cst_33 : f32 to vector<8x128xf32>
    %96 = arith.addf %95, %94 : vector<8x128xf32>
    %97 = arith.divf %95, %96 : vector<8x128xf32>
    %98 = vector.extract_strided_slice %85 {offsets = [0, 256], sizes = [8, 128], strides = [1, 1]} : vector<8x512xf32> to vector<8x128xf32>
    %99 = math.tanh %98 : vector<8x128xf32>
    %100 = vector.extract_strided_slice %85 {offsets = [0, 384], sizes = [8, 128], strides = [1, 1]} : vector<8x512xf32> to vector<8x128xf32>
    %101 = arith.negf %100 : vector<8x128xf32>
    %102 = math.exp %101 : vector<8x128xf32>
    %cst_34 = arith.constant 1.000000e+00 : f32
    %103 = vector.broadcast %cst_34 : f32 to vector<8x128xf32>
    %104 = arith.addf %103, %102 : vector<8x128xf32>
    %105 = arith.divf %103, %104 : vector<8x128xf32>
    %106 = arith.mulf %97, %78 : vector<8x128xf32>
    %107 = arith.mulf %91, %99 : vector<8x128xf32>
    %108 = arith.addf %106, %107 : vector<8x128xf32>
    %109 = math.tanh %108 : vector<8x128xf32>
    %110 = arith.mulf %105, %109 : vector<8x128xf32>
    %c1_35 = arith.constant 1 : index
    %c0_36 = arith.constant 0 : index
    %c0_37 = arith.constant 0 : index
    %111 = vector.load %arg3[%c1_35, %c0_36, %c0_37] : memref<4x8x1xf32, #tpu.memory_space<vmem>>, vector<1x8x1xf32>
    %112 = vector.shape_cast %111 : vector<1x8x1xf32> to vector<8x1xf32>
    %113 = vector.broadcast %112 : vector<8x1xf32> to vector<8x128xf32>
    %114 = arith.mulf %110, %113 : vector<8x128xf32>
    %115 = vector.broadcast %112 : vector<8x1xf32> to vector<8x128xf32>
    %116 = arith.mulf %108, %115 : vector<8x128xf32>
    %c1_38 = arith.constant 1 : index
    %c0_39 = arith.constant 0 : index
    %c0_40 = arith.constant 0 : index
    %117 = vector.load %arg5[%c1_38, %c0_39, %c0_40] : memref<4x8x128xf32, #tpu.memory_space<vmem>>, vector<1x8x128xf32>
    %118 = vector.shape_cast %117 : vector<1x8x128xf32> to vector<8x128xf32>
    %119 = vector.shape_cast %114 : vector<8x128xf32> to vector<1x8x128xf32>
    tpu.vector_store %arg5[%c1_38, %c0_39, %c0_40], %119 {strides = array<i32>} : memref<4x8x128xf32, #tpu.memory_space<vmem>>, vector<1x8x128xf32>,
    %c0_41 = arith.constant 0 : index
    %c0_42 = arith.constant 0 : index
    %c0_43 = arith.constant 0 : index
    %120 = vector.load %arg2[%c0_41, %c0_42, %c0_43] : memref<4x8x512xf32, #tpu.memory_space<vmem>>, vector<1x8x512xf32>
    %121 = vector.shape_cast %120 : vector<1x8x512xf32> to vector<8x512xf32>
    %cst_44 = arith.constant dense<0.000000e+00> : vector<8x512xf32>
    %122 = tpu.matmul %114, %5, %cst_44 {dimension_numbers = #tpu.dot_dimension_numbers<[1], [0], [0], [1], [0, 0, 1, 1], [], []>} : vector<8x128xf32>, vector<128x512xf32>, vector<8x512xf32> -> vector<8x512xf32>
    %123 = arith.addf %121, %122 : vector<8x512xf32>
    %124 = vector.extract_strided_slice %123 {offsets = [0, 0], sizes = [8, 128], strides = [1, 1]} : vector<8x512xf32> to vector<8x128xf32>
    %125 = arith.negf %124 : vector<8x128xf32>
    %126 = math.exp %125 : vector<8x128xf32>
    %cst_45 = arith.constant 1.000000e+00 : f32
    %127 = vector.broadcast %cst_45 : f32 to vector<8x128xf32>
    %128 = arith.addf %127, %126 : vector<8x128xf32>
    %129 = arith.divf %127, %128 : vector<8x128xf32>
    %130 = vector.extract_strided_slice %123 {offsets = [0, 128], sizes = [8, 128], strides = [1, 1]} : vector<8x512xf32> to vector<8x128xf32>
    %131 = arith.negf %130 : vector<8x128xf32>
    %132 = math.exp %131 : vector<8x128xf32>
    %cst_46 = arith.constant 1.000000e+00 : f32
    %133 = vector.broadcast %cst_46 : f32 to vector<8x128xf32>
    %134 = arith.addf %133, %132 : vector<8x128xf32>
    %135 = arith.divf %133, %134 : vector<8x128xf32>
    %136 = vector.extract_strided_slice %123 {offsets = [0, 256], sizes = [8, 128], strides = [1, 1]} : vector<8x512xf32> to vector<8x128xf32>
    %137 = math.tanh %136 : vector<8x128xf32>
    %138 = vector.extract_strided_slice %123 {offsets = [0, 384], sizes = [8, 128], strides = [1, 1]} : vector<8x512xf32> to vector<8x128xf32>
    %139 = arith.negf %138 : vector<8x128xf32>
    %140 = math.exp %139 : vector<8x128xf32>
    %cst_47 = arith.constant 1.000000e+00 : f32
    %141 = vector.broadcast %cst_47 : f32 to vector<8x128xf32>
    %142 = arith.addf %141, %140 : vector<8x128xf32>
    %143 = arith.divf %141, %142 : vector<8x128xf32>
    %144 = arith.mulf %135, %116 : vector<8x128xf32>
    %145 = arith.mulf %129, %137 : vector<8x128xf32>
    %146 = arith.addf %144, %145 : vector<8x128xf32>
    %147 = math.tanh %146 : vector<8x128xf32>
    %148 = arith.mulf %143, %147 : vector<8x128xf32>
    %c0_48 = arith.constant 0 : index
    %c0_49 = arith.constant 0 : index
    %c0_50 = arith.constant 0 : index
    %149 = vector.load %arg3[%c0_48, %c0_49, %c0_50] : memref<4x8x1xf32, #tpu.memory_space<vmem>>, vector<1x8x1xf32>
    %150 = vector.shape_cast %149 : vector<1x8x1xf32> to vector<8x1xf32>
    %151 = vector.broadcast %150 : vector<8x1xf32> to vector<8x128xf32>
    %152 = arith.mulf %148, %151 : vector<8x128xf32>
    %153 = vector.broadcast %150 : vector<8x1xf32> to vector<8x128xf32>
    %154 = arith.mulf %146, %153 : vector<8x128xf32>
    %c0_51 = arith.constant 0 : index
    %c0_52 = arith.constant 0 : index
    %c0_53 = arith.constant 0 : index
    %155 = vector.load %arg5[%c0_51, %c0_52, %c0_53] : memref<4x8x128xf32, #tpu.memory_space<vmem>>, vector<1x8x128xf32>
    %156 = vector.shape_cast %155 : vector<1x8x128xf32> to vector<8x128xf32>
    %157 = vector.shape_cast %152 : vector<8x128xf32> to vector<1x8x128xf32>
    tpu.vector_store %arg5[%c0_51, %c0_52, %c0_53], %157 {strides = array<i32>} : memref<4x8x128xf32, #tpu.memory_space<vmem>>, vector<1x8x128xf32>,
    %c2_i32 = arith.constant 2 : i32
    %158 = arith.cmpi eq, %arg1, %c2_i32 : i32
    %159 = arith.extui %158 : i1 to i32
    %c0_i32_54 = arith.constant 0 : i32
    %160 = arith.cmpi ne, %159, %c0_i32_54 : i32
    scf.if %160 {
      %c0_59 = arith.constant 0 : index
      %c0_60 = arith.constant 0 : index
      %163 = vector.load %arg6[%c0_59, %c0_60] : memref<8x128xf32, #tpu.memory_space<vmem>>, vector<8x128xf32>
      tpu.vector_store %arg6[%c0_59, %c0_60], %152 {strides = array<i32>} : memref<8x128xf32, #tpu.memory_space<vmem>>, vector<8x128xf32>,
      %c0_61 = arith.constant 0 : index
      %c0_62 = arith.constant 0 : index
      %164 = vector.load %arg7[%c0_61, %c0_62] : memref<8x128xf32, #tpu.memory_space<vmem>>, vector<8x128xf32>
      tpu.vector_store %arg7[%c0_61, %c0_62], %154 {strides = array<i32>} : memref<8x128xf32, #tpu.memory_space<vmem>>, vector<8x128xf32>,
    } else {
    }
    %c0_55 = arith.constant 0 : index
    %c0_56 = arith.constant 0 : index
    %161 = vector.load %arg8[%c0_55, %c0_56] : memref<8x128xf32, #tpu.memory_space<vmem>>, vector<8x128xf32>
    tpu.vector_store %arg8[%c0_55, %c0_56], %152 {strides = array<i32>} : memref<8x128xf32, #tpu.memory_space<vmem>>, vector<8x128xf32>,
    %c0_57 = arith.constant 0 : index
    %c0_58 = arith.constant 0 : index
    %162 = vector.load %arg9[%c0_57, %c0_58] : memref<8x128xf32, #tpu.memory_space<vmem>>, vector<8x128xf32>
    tpu.vector_store %arg9[%c0_57, %c0_58], %154 {strides = array<i32>} : memref<8x128xf32, #tpu.memory_space<vmem>>, vector<8x128xf32>,
    return
  }
  func.func @transform_0(%arg0: i32, %arg1: i32) -> (i32, i32, i32) {
    %c2_i32 = arith.constant 2 : i32
    %0 = arith.subi %c2_i32, %arg1 : i32
    %c0_i32 = arith.constant 0 : i32
    %c0_i32_0 = arith.constant 0 : i32
    return %0, %arg0, %c0_i32 : i32, i32, i32
  }
  func.func @transform_1(%arg0: i32, %arg1: i32) -> (i32, i32, i32) {
    %c2_i32 = arith.constant 2 : i32
    %0 = arith.subi %c2_i32, %arg1 : i32
    %c0_i32 = arith.constant 0 : i32
    %c0_i32_0 = arith.constant 0 : i32
    return %0, %arg0, %c0_i32 : i32, i32, i32
  }
  func.func @transform_2(%arg0: i32, %arg1: i32) -> (i32, i32) {
    %c0_i32 = arith.constant 0 : i32
    %c0_i32_0 = arith.constant 0 : i32
    %c0_i32_1 = arith.constant 0 : i32
    return %c0_i32, %c0_i32_0 : i32, i32
  }
  func.func @transform_3(%arg0: i32, %arg1: i32) -> (i32, i32, i32) {
    %c2_i32 = arith.constant 2 : i32
    %0 = arith.subi %c2_i32, %arg1 : i32
    %c0_i32 = arith.constant 0 : i32
    %c0_i32_0 = arith.constant 0 : i32
    return %0, %arg0, %c0_i32 : i32, i32, i32
  }
  func.func @transform_4(%arg0: i32, %arg1: i32) -> (i32, i32) {
    %c0_i32 = arith.constant 0 : i32
    %c0_i32_0 = arith.constant 0 : i32
    return %arg0, %c0_i32 : i32, i32
  }
  func.func @transform_5(%arg0: i32, %arg1: i32) -> (i32, i32) {
    %c0_i32 = arith.constant 0 : i32
    %c0_i32_0 = arith.constant 0 : i32
    return %arg0, %c0_i32 : i32, i32
  }
}

</mosaic_0001>

<llo_original>
// kernel: mylstm1_forward.5
$region0: #{mylstm1_forward.5}
  #allocation0 [shape = 'u32[]', space=smem, size = 0x4, offset = 0x4, fixed_abs, tag = 'smem constant byte address 0x4 - core index']
  #allocation1 [shape = 'u32[144,128]{1,0:T(1,128)}', space=vmem, size = 0x12000, scoped, tag = 'internal scratch']
  #allocation2 [shape = 'f32[8,128]{1,0:T(8,128)}', space=vmem, size = 0x1000, scoped, tag = 'scratch operand']
  #allocation3 [shape = 'f32[8,128]{1,0:T(8,128)}', space=vmem, size = 0x1000, scoped, tag = 'scratch operand']
  %s0 = inlined_call_operand.vmem [shape: f32[12,8,512], index: 0, kind: input, shape index: {}]
  %s1 = inlined_call_operand.vmem [shape: f32[12,8,1], index: 1, kind: input, shape index: {}]
  %s2 = inlined_call_operand.vmem [shape: f32[128,512], index: 2, kind: input, shape index: {}]
  %s3 = inlined_call_operand.vmem [shape: f32[12,8,128], index: 3, kind: output, shape index: {0}]
  %s4 = inlined_call_operand.vmem [shape: f32[8,128], index: 4, kind: output, shape index: {1}]
  %s5 = inlined_call_operand.vmem [shape: f32[8,128], index: 5, kind: output, shape index: {2}]
  %6 = xla_tuple %s3, %s4, %s5
  %s7 = sld [smem:[#allocation0]]
  $region69: #{mylstm1_forward.5} parent=0
    _
  %s9 = ssub.s32 1, %s7
  %s10 = scalar_select 0, %s9, %s7
  loop: start=0, step=1, limit=5
  $region2: #{mylstm1_forward.5} parent=0 // loop_pre_header
    _
  $region3: #{mylstm1_forward.5} parent=0 // loop_header
    %s12 = sphi 0, %s16
    %p13 = scmp.ge.s32.totalorder %s12, 5
    %s19 = sphi 0, %s31
    %s20 = sphi 0, %s27
    %s21 = sphi 0, %s19
    %s22 = sphi 0, %s20
    %s23 = sphi 0, %s21
    %s24 = sphi 0, %s22
    %s38 = sphi 0, %s40
    %s41 = sphi 0, %s38
    %s42 = sphi 0, %s41
    %s58 = sphi 0, %s42
    %s68 = sphi 0, %s70
    %s71 = sphi 0, %s68
    %s72 = sphi 0, %s71
    %s88 = sphi 0, %s72
    %s92 = sphi 0, %s92
    %s94 = sphi 0, %s92
    %s95 = sphi 0, %s94
    %s109 = sphi 0, %s95
    %s119 = sphi 0, %s121
    %s122 = sphi 0, %s119
    %s123 = sphi 0, %s122
    %s139 = sphi 0, %s123
    %s145 = sphi 0, %s147
    %s148 = sphi 0, %s145
    %s149 = sphi 0, %s148
    %s165 = sphi 0, %s149
    %s171 = sphi 0, %s173
    %s174 = sphi 0, %s171
    %s175 = sphi 0, %s174
    %s191 = sphi 0, %s175
  $region4: #{mylstm1_forward.5} parent=0 // loop_header_branch
    %15 = sbr.rel (%p13) target = $region8
  $region5: #{mylstm1_forward.5} parent=0 // loop_body
    %s17 = ssub.s32 %s12, 1
    %s18 = ssub.s32 %s12, 2
    %s25 = sadd.s32 1, %s20
    %p26 = scmp.ge.s32.totalorder %s25, 3
    %s27 = scalar_select %p26, 0, %s25
    %s28 = sadd.s32 1, %s19
    %s29 = scalar_select %p26, %s28, %s19
    %p30 = scmp.ge.s32.totalorder %s29, 1
    %s31 = scalar_select %p30, 0, %s29
    %s32 = ssub.s32 2, %s20
    %s33 = ssub.s32 2, %s27
    %s34 = ssub.s32 %s32, %s33
    %s35 = ssub.s32 %s19, %s31
    %s36 = sor.u32 %s34, %s35
    %p37 = scmp.eq.s32.totalorder %s36, 0
    %s39 = sadd.s32 %s38, 1
    %s40 = scalar_select %p37, %s38, %s39
    %p43 = pneg %p37
    %p44 = scmp.eq.s32.totalorder %s12, 2
    %p45 = por %p43, %p44
    %p46 = scmp.ne.s32.totalorder %s38, %s41
    %p47 = scmp.eq.s32.totalorder %s12, 0
    %p48 = por %p46, %p47
    %p49 = scmp.ne.s32.totalorder %s38, %s41
    %p50 = scmp.eq.s32.totalorder %s17, 2
    %p51 = por %p49, %p50
    %p52 = scmp.ne.s32.totalorder %s41, %s42
    %p53 = scmp.eq.s32.totalorder %s17, 0
    %p54 = por %p52, %p53
    %p55 = scmp.ne.s32.totalorder %s41, %s42
    %p56 = scmp.eq.s32.totalorder %s18, 2
    %p57 = por %p55, %p56
    %p59 = scmp.ne.s32.totalorder %s42, %s58
    %p60 = scmp.eq.s32.totalorder %s18, 0
    %p61 = por %p59, %p60
    %s62 = ssub.s32 2, %s20
    %s63 = ssub.s32 2, %s27
    %s64 = ssub.s32 %s62, %s63
    %s65 = ssub.s32 %s19, %s31
    %s66 = sor.u32 %s64, %s65
    %p67 = scmp.eq.s32.totalorder %s66, 0
    %s69 = sadd.s32 %s68, 1
    %s70 = scalar_select %p67, %s68, %s69
    %p73 = pneg %p67
    %p74 = scmp.eq.s32.totalorder %s12, 2
    %p75 = por %p73, %p74
    %p76 = scmp.ne.s32.totalorder %s68, %s71
    %p77 = scmp.eq.s32.totalorder %s12, 0
    %p78 = por %p76, %p77
    %p79 = scmp.ne.s32.totalorder %s68, %s71
    %p80 = scmp.eq.s32.totalorder %s17, 2
    %p81 = por %p79, %p80
    %p82 = scmp.ne.s32.totalorder %s71, %s72
    %p83 = scmp.eq.s32.totalorder %s17, 0
    %p84 = por %p82, %p83
    %p85 = scmp.ne.s32.totalorder %s71, %s72
    %p86 = scmp.eq.s32.totalorder %s18, 2
    %p87 = por %p85, %p86
    %p89 = scmp.ne.s32.totalorder %s72, %s88
    %p90 = scmp.eq.s32.totalorder %s18, 0
    %p91 = por %p89, %p90
    %s93 = sadd.s32 %s92, 1
    %p96 = scmp.eq.s32.totalorder %s12, 2
    %p97 = scmp.ne.s32.totalorder %s92, %s94
    %p98 = scmp.eq.s32.totalorder %s12, 0
    %p99 = por %p97, %p98
    %p100 = scmp.ne.s32.totalorder %s92, %s94
    %p101 = scmp.eq.s32.totalorder %s17, 2
    %p102 = por %p100, %p101
    %p103 = scmp.ne.s32.totalorder %s94, %s95
    %p104 = scmp.eq.s32.totalorder %s17, 0
    %p105 = por %p103, %p104
    %p106 = scmp.ne.s32.totalorder %s94, %s95
    %p107 = scmp.eq.s32.totalorder %s18, 2
    %p108 = por %p106, %p107
    %p110 = scmp.ne.s32.totalorder %s95, %s109
    %p111 = scmp.eq.s32.totalorder %s18, 0
    %p112 = por %p110, %p111
    %s113 = ssub.s32 2, %s20
    %s114 = ssub.s32 2, %s27
    %s115 = ssub.s32 %s113, %s114
    %s116 = ssub.s32 %s19, %s31
    %s117 = sor.u32 %s115, %s116
    %p118 = scmp.eq.s32.totalorder %s117, 0
    %s120 = sadd.s32 %s119, 1
    %s121 = scalar_select %p118, %s119, %s120
    %p124 = pneg %p118
    %p125 = scmp.eq.s32.totalorder %s12, 2
    %p126 = por %p124, %p125
    %p127 = scmp.ne.s32.totalorder %s119, %s122
    %p128 = scmp.eq.s32.totalorder %s12, 0
    %p129 = por %p127, %p128
    %p130 = scmp.ne.s32.totalorder %s119, %s122
    %p131 = scmp.eq.s32.totalorder %s17, 2
    %p132 = por %p130, %p131
    %p133 = scmp.ne.s32.totalorder %s122, %s123
    %p134 = scmp.eq.s32.totalorder %s17, 0
    %p135 = por %p133, %p134
    %p136 = scmp.ne.s32.totalorder %s122, %s123
    %p137 = scmp.eq.s32.totalorder %s18, 2
    %p138 = por %p136, %p137
    %p140 = scmp.ne.s32.totalorder %s123, %s139
    %p141 = scmp.eq.s32.totalorder %s18, 0
    %p142 = por %p140, %p141
    %s143 = ssub.s32 %s19, %s31
    %p144 = scmp.eq.s32.totalorder %s143, 0
    %s146 = sadd.s32 %s145, 1
    %s147 = scalar_select %p144, %s145, %s146
    %p150 = pneg %p144
    %p151 = scmp.eq.s32.totalorder %s12, 2
    %p152 = por %p150, %p151
    %p153 = scmp.ne.s32.totalorder %s145, %s148
    %p154 = scmp.eq.s32.totalorder %s12, 0
    %p155 = por %p153, %p154
    %p156 = scmp.ne.s32.totalorder %s145, %s148
    %p157 = scmp.eq.s32.totalorder %s17, 2
    %p158 = por %p156, %p157
    %p159 = scmp.ne.s32.totalorder %s148, %s149
    %p160 = scmp.eq.s32.totalorder %s17, 0
    %p161 = por %p159, %p160
    %p162 = scmp.ne.s32.totalorder %s148, %s149
    %p163 = scmp.eq.s32.totalorder %s18, 2
    %p164 = por %p162, %p163
    %p166 = scmp.ne.s32.totalorder %s149, %s165
    %p167 = scmp.eq.s32.totalorder %s18, 0
    %p168 = por %p166, %p167
    %s169 = ssub.s32 %s19, %s31
    %p170 = scmp.eq.s32.totalorder %s169, 0
    %s172 = sadd.s32 %s171, 1
    %s173 = scalar_select %p170, %s171, %s172
    %p176 = pneg %p170
    %p177 = scmp.eq.s32.totalorder %s12, 2
    %p178 = por %p176, %p177
    %p179 = scmp.ne.s32.totalorder %s171, %s174
    %p180 = scmp.eq.s32.totalorder %s12, 0
    %p181 = por %p179, %p180
    %p182 = scmp.ne.s32.totalorder %s171, %s174
    %p183 = scmp.eq.s32.totalorder %s17, 2
    %p184 = por %p182, %p183
    %p185 = scmp.ne.s32.totalorder %s174, %s175
    %p186 = scmp.eq.s32.totalorder %s17, 0
    %p187 = por %p185, %p186
    %p188 = scmp.ne.s32.totalorder %s174, %s175
    %p189 = scmp.eq.s32.totalorder %s18, 2
    %p190 = por %p188, %p189
    %p192 = scmp.ne.s32.totalorder %s175, %s191
    %p193 = scmp.eq.s32.totalorder %s18, 0
    %p194 = por %p192, %p193
    %p195 = scmp.le.s32.totalorder 1, %s12
    %p196 = scmp.lt.s32.totalorder %s12, 4
    %p197 = pnand %p195, %p196
    %p198 = pneg %p197
    // Predicated region
    $region9: #{mylstm1_forward.5} parent=5 // pred_check
      _
    $region10: #{mylstm1_forward.5} parent=5 // pred_check_branch
      %200 = sbr.rel (%p197) target = $region12
    $region11: #{mylstm1_forward.5} parent=5 // pred_region
      %s201 = ssub.s32 %s12, 1
      // Predicated region
      $region13: #{mylstm1_forward.5} parent=11 // pred_check
        %p202 = pneg %p105
      $region14: #{mylstm1_forward.5} parent=11 // pred_check_branch
        %204 = sbr.rel (%p202) target = $region16
      $region15: #{mylstm1_forward.5} parent=11 // pred_region
        _
      $region16: #{mylstm1_forward.5} parent=11 // pred_fallthru
        _
    $region12: #{mylstm1_forward.5} parent=5 // pred_fallthru
      _
    %p205 = scmp.lt.s32.totalorder %s12, 3
    // Predicated region
    $region17: #{mylstm1_forward.5} parent=5 // pred_check
      %p206 = pneg %p205
    $region18: #{mylstm1_forward.5} parent=5 // pred_check_branch
      %208 = sbr.rel (%p206) target = $region20
    $region19: #{mylstm1_forward.5} parent=5 // pred_region
      // Predicated region
      $region21: #{mylstm1_forward.5} parent=19 // pred_check
        %p209 = pneg %p48
      $region22: #{mylstm1_forward.5} parent=19 // pred_check_branch
        %211 = sbr.rel (%p209) target = $region24
      $region23: #{mylstm1_forward.5} parent=19 // pred_region
        %s212 = ssub.s32 2, %s20
        %s213 = smul.u32 4, %s212
        %p214 = scmp.lt.s32.totalorder %s213, 11
        %s215 = scalar_select %p214, %s213, 11
        %p216 = scmp.lt.s32.totalorder %s19, 0
        %s217 = scalar_select %p216, %s19, 0
        %s218 = smul.addr %s217, 4
        %s219 = smul.addr %s215, 4
        %s220 = sadd.s32 %s218, %s219
        %s221 = smul.addr %s220, 8
        %s222 = scalar_lea.vmem %s0, %s221
        %s223 = ssub.s32 2, %s20
        %s224 = smul.u32 4, %s223
      $region24: #{mylstm1_forward.5} parent=19 // pred_fallthru
        _
      // Predicated region
      $region25: #{mylstm1_forward.5} parent=19 // pred_check
        %p225 = pneg %p78
      $region26: #{mylstm1_forward.5} parent=19 // pred_check_branch
        %227 = sbr.rel (%p225) target = $region28
      $region27: #{mylstm1_forward.5} parent=19 // pred_region
        %s228 = ssub.s32 2, %s20
        %s229 = smul.u32 4, %s228
        %p230 = scmp.lt.s32.totalorder %s229, 11
        %s231 = scalar_select %p230, %s229, 11
        %p232 = scmp.lt.s32.totalorder %s19, 0
        %s233 = scalar_select %p232, %s19, 0
        %s234 = sadd.s32 %s233, %s231
        %s235 = smul.addr %s234, 8
        %s236 = scalar_lea.vmem %s1, %s235
        %s237 = ssub.s32 2, %s20
        %s238 = smul.u32 4, %s237
      $region28: #{mylstm1_forward.5} parent=19 // pred_fallthru
        _
    $region20: #{mylstm1_forward.5} parent=5 // pred_fallthru
      _
    %p239 = scmp.le.s32.totalorder 1, %s12
    %p240 = scmp.lt.s32.totalorder %s12, 4
    %p241 = pnand %p239, %p240
    %p242 = pneg %p241
    // Predicated region
    $region29: #{mylstm1_forward.5} parent=5 // pred_check
      _
    $region30: #{mylstm1_forward.5} parent=5 // pred_check_branch
      %244 = sbr.rel (%p241) target = $region32
    $region31: #{mylstm1_forward.5} parent=5 // pred_region
      %s245 = ssub.s32 %s12, 1
      %s246 = ssub.s32 2, %s22
      %s247 = smul.u32 4, %s246
      %p248 = scmp.lt.s32.totalorder %s247, 11
      %s249 = scalar_select %p248, %s247, 11
      %p250 = scmp.lt.s32.totalorder %s21, 0
      %s251 = scalar_select %p250, %s21, 0
      %s252 = smul.addr %s251, 4
      %s253 = smul.addr %s249, 4
      %s254 = sadd.s32 %s252, %s253
      %s255 = smul.addr %s254, 8
      %s256 = scalar_lea.vmem %s0, %s255
      %p257 = pneg %p54
      %p258 = pneg %p51
      %s259 = ssub.s32 2, %s22
      %s260 = smul.u32 4, %s259
      %p261 = scmp.lt.s32.totalorder %s260, 11
      %s262 = scalar_select %p261, %s260, 11
      %p263 = scmp.lt.s32.totalorder %s21, 0
      %s264 = scalar_select %p263, %s21, 0
      %s265 = sadd.s32 %s264, %s262
      %s266 = smul.addr %s265, 8
      %s267 = scalar_lea.vmem %s1, %s266
      %p268 = pneg %p84
      %p269 = pneg %p81
      %p270 = pneg %p105
      %p271 = pneg %p102
      %p272 = pneg %p135
      %p273 = pneg %p132
      %s274 = ssub.s32 2, %s22
      %s275 = smul.u32 4, %s274
      %p276 = scmp.lt.s32.totalorder %s275, 11
      %s277 = scalar_select %p276, %s275, 11
      %p278 = scmp.lt.s32.totalorder %s21, 0
      %s279 = scalar_select %p278, %s21, 0
      %s280 = sadd.s32 %s279, %s277
      %s281 = smul.addr %s280, 8
      %s282 = scalar_lea.vmem %s3, %s281
      %p283 = pneg %p161
      %p284 = pneg %p158
      %p285 = scmp.lt.s32.totalorder %s21, 0
      %s286 = scalar_select %p285, %s21, 0
      %s287 = smul.addr %s286, 8
      %s288 = scalar_lea.vmem %s4, %s287
      %p289 = pneg %p187
      %p290 = pneg %p184
      %p291 = scmp.lt.s32.totalorder %s21, 0
      %s292 = scalar_select %p291, %s21, 0
      %s293 = smul.addr %s292, 8
      %s294 = scalar_lea.vmem %s5, %s293
      %s295 = ssub.s32 2, %s22
      %s296 = smul.u32 4, %s295
      %p297 = scmp.lt.s32.totalorder %s296, 11
      %s298 = scalar_select %p297, %s296, 11
      %p299 = scmp.lt.s32.totalorder %s21, 0
      %s300 = scalar_select %p299, %s21, 0
      %s301 = smul.addr %s300, 4
      %s302 = smul.addr %s298, 4
      %s303 = sadd.s32 %s301, %s302
      %s304 = smul.addr %s303, 8
      %s305 = scalar_lea.vmem %s0, %s304
      %s306 = ssub.s32 2, %s22
      %s307 = smul.u32 4, %s306
      %s308 = ssub.s32 2, %s22
      %s309 = smul.u32 4, %s308
      %p310 = scmp.lt.s32.totalorder %s309, 11
      %s311 = scalar_select %p310, %s309, 11
      %p312 = scmp.lt.s32.totalorder %s21, 0
      %s313 = scalar_select %p312, %s21, 0
      %s314 = sadd.s32 %s313, %s311
      %s315 = smul.addr %s314, 8
      %s316 = scalar_lea.vmem %s1, %s315
      %s317 = ssub.s32 2, %s22
      %s318 = smul.u32 4, %s317
      %s319 = ssub.s32 2, %s22
      %s320 = smul.u32 4, %s319
      %p321 = scmp.lt.s32.totalorder %s320, 11
      %s322 = scalar_select %p321, %s320, 11
      %p323 = scmp.lt.s32.totalorder %s21, 0
      %s324 = scalar_select %p323, %s21, 0
      %s325 = sadd.s32 %s324, %s322
      %s326 = smul.addr %s325, 8
      %s327 = scalar_lea.vmem %s3, %s326
      %s328 = ssub.s32 2, %s22
      %s329 = smul.u32 4, %s328
      %p330 = scmp.lt.s32.totalorder %s21, 0
      %s331 = scalar_select %p330, %s21, 0
      %s332 = smul.addr %s331, 8
      %s333 = scalar_lea.vmem %s4, %s332
      %p334 = scmp.lt.s32.totalorder %s21, 0
      %s335 = scalar_select %p334, %s21, 0
      %s336 = smul.addr %s335, 8
      %s337 = scalar_lea.vmem %s5, %s336
      %p338 = scmp.eq.s32.totalorder %s22, 0
      // Predicated region
      $region33: #{mylstm1_forward.5} parent=31 // pred_check
        %p339 = pneg %p338
      $region34: #{mylstm1_forward.5} parent=31 // pred_check_branch
        %341 = sbr.rel (%p339) target = $region36
      $region35: #{mylstm1_forward.5} parent=31 // pred_region
        %342 = vst [vmem:[#allocation2] sm:$0xff] 0.0
        %343 = vst [vmem:[#allocation3] sm:$0xff] 0.0
      $region36: #{mylstm1_forward.5} parent=31 // pred_fallthru
        _
      %v344 = vld [vmem:[#allocation2] sm:$0xff]
      %v345 = vld [vmem:[#allocation3] sm:$0xff]
      %v346 = vld [vmem:[%s2] sm:$0xff]
      %v347 = vld [vmem:[%s2 + $0x8] sm:$0xff]
      %v348 = vld [vmem:[%s2 + $0x10] sm:$0xff]
      %v349 = vld [vmem:[%s2 + $0x18] sm:$0xff]
      %v350 = vld [vmem:[%s2 + $0x20] sm:$0xff]
      %v351 = vld [vmem:[%s2 + $0x28] sm:$0xff]
      %v352 = vld [vmem:[%s2 + $0x30] sm:$0xff]
      %v353 = vld [vmem:[%s2 + $0x38] sm:$0xff]
      %v354 = vld [vmem:[%s2 + $0x40] sm:$0xff]
      %v355 = vld [vmem:[%s2 + $0x48] sm:$0xff]
      %v356 = vld [vmem:[%s2 + $0x50] sm:$0xff]
      %v357 = vld [vmem:[%s2 + $0x58] sm:$0xff]
      %v358 = vld [vmem:[%s2 + $0x60] sm:$0xff]
      %v359 = vld [vmem:[%s2 + $0x68] sm:$0xff]
      %v360 = vld [vmem:[%s2 + $0x70] sm:$0xff]
      %v361 = vld [vmem:[%s2 + $0x78] sm:$0xff]
      %v362 = vld [vmem:[%s2 + $0x80] sm:$0xff]
      %v363 = vld [vmem:[%s2 + $0x88] sm:$0xff]
      %v364 = vld [vmem:[%s2 + $0x90] sm:$0xff]
      %v365 = vld [vmem:[%s2 + $0x98] sm:$0xff]
      %v366 = vld [vmem:[%s2 + $0xa0] sm:$0xff]
      %v367 = vld [vmem:[%s2 + $0xa8] sm:$0xff]
      %v368 = vld [vmem:[%s2 + $0xb0] sm:$0xff]
      %v369 = vld [vmem:[%s2 + $0xb8] sm:$0xff]
      %v370 = vld [vmem:[%s2 + $0xc0] sm:$0xff]
      %v371 = vld [vmem:[%s2 + $0xc8] sm:$0xff]
      %v372 = vld [vmem:[%s2 + $0xd0] sm:$0xff]
      %v373 = vld [vmem:[%s2 + $0xd8] sm:$0xff]
      %v374 = vld [vmem:[%s2 + $0xe0] sm:$0xff]
      %v375 = vld [vmem:[%s2 + $0xe8] sm:$0xff]
      %v376 = vld [vmem:[%s2 + $0xf0] sm:$0xff]
      %v377 = vld [vmem:[%s2 + $0xf8] sm:$0xff]
      %v378 = vld [vmem:[%s2 + $0x100] sm:$0xff]
      %v379 = vld [vmem:[%s2 + $0x108] sm:$0xff]
      %v380 = vld [vmem:[%s2 + $0x110] sm:$0xff]
      %v381 = vld [vmem:[%s2 + $0x118] sm:$0xff]
      %v382 = vld [vmem:[%s2 + $0x120] sm:$0xff]
      %v383 = vld [vmem:[%s2 + $0x128] sm:$0xff]
      %v384 = vld [vmem:[%s2 + $0x130] sm:$0xff]
      %v385 = vld [vmem:[%s2 + $0x138] sm:$0xff]
      %v386 = vld [vmem:[%s2 + $0x140] sm:$0xff]
      %v387 = vld [vmem:[%s2 + $0x148] sm:$0xff]
      %v388 = vld [vmem:[%s2 + $0x150] sm:$0xff]
      %v389 = vld [vmem:[%s2 + $0x158] sm:$0xff]
      %v390 = vld [vmem:[%s2 + $0x160] sm:$0xff]
      %v391 = vld [vmem:[%s2 + $0x168] sm:$0xff]
      %v392 = vld [vmem:[%s2 + $0x170] sm:$0xff]
      %v393 = vld [vmem:[%s2 + $0x178] sm:$0xff]
      %v394 = vld [vmem:[%s2 + $0x180] sm:$0xff]
      %v395 = vld [vmem:[%s2 + $0x188] sm:$0xff]
      %v396 = vld [vmem:[%s2 + $0x190] sm:$0xff]
      %v397 = vld [vmem:[%s2 + $0x198] sm:$0xff]
      %v398 = vld [vmem:[%s2 + $0x1a0] sm:$0xff]
      %v399 = vld [vmem:[%s2 + $0x1a8] sm:$0xff]
      %v400 = vld [vmem:[%s2 + $0x1b0] sm:$0xff]
      %v401 = vld [vmem:[%s2 + $0x1b8] sm:$0xff]
      %v402 = vld [vmem:[%s2 + $0x1c0] sm:$0xff]
      %v403 = vld [vmem:[%s2 + $0x1c8] sm:$0xff]
      %v404 = vld [vmem:[%s2 + $0x1d0] sm:$0xff]
      %v405 = vld [vmem:[%s2 + $0x1d8] sm:$0xff]
      %v406 = vld [vmem:[%s2 + $0x1e0] sm:$0xff]
      %v407 = vld [vmem:[%s2 + $0x1e8] sm:$0xff]
      %v408 = vld [vmem:[%s2 + $0x1f0] sm:$0xff]
      %v409 = vld [vmem:[%s2 + $0x1f8] sm:$0xff]
      %s410 = scalar_lea.vmem %s305, 96
      %v411 = vld [vmem:[%s410] sm:$0xff]
      %v412 = vld [vmem:[%s410 + $0x8] sm:$0xff]
      %v413 = vld [vmem:[%s410 + $0x10] sm:$0xff]
      %v414 = vld [vmem:[%s410 + $0x18] sm:$0xff]
      %415 = vmatprep.subr.mxu0 %v407
      %416 = vmatpush1.msra.mxu0 %v406
      %417 = vmatprep.subr.mxu0 %v403
      %418 = vmatpush1.msra.mxu0 %v402
      %419 = vmatprep.subr.mxu0 %v399
      %420 = vmatpush1.msra.mxu0 %v398
      %421 = vmatprep.subr.mxu0 %v395
      %422 = vmatpush1.msra.mxu0 %v394
      %423 = vmatprep.subr.mxu0 %v391
      %424 = vmatpush1.msra.mxu0 %v390
      %425 = vmatprep.subr.mxu0 %v387
      %426 = vmatpush1.msra.mxu0 %v386
      %427 = vmatprep.subr.mxu0 %v383
      %428 = vmatpush1.msra.mxu0 %v382
      %429 = vmatprep.subr.mxu0 %v379
      %430 = vmatpush1.msra.mxu0 %v378
      %431 = vmatprep.subr.mxu0 %v375
      %432 = vmatpush1.msra.mxu0 %v374
      %433 = vmatprep.subr.mxu0 %v371
      %434 = vmatpush1.msra.mxu0 %v370
      %435 = vmatprep.subr.mxu0 %v367
      %436 = vmatpush1.msra.mxu0 %v366
      %437 = vmatprep.subr.mxu0 %v363
      %438 = vmatpush1.msra.mxu0 %v362
      %439 = vmatprep.subr.mxu0 %v359
      %440 = vmatpush1.msra.mxu0 %v358
      %441 = vmatprep.subr.mxu0 %v355
      %442 = vmatpush1.msra.mxu0 %v354
      %443 = vmatprep.subr.mxu0 %v351
      %444 = vmatpush1.msra.mxu0 %v350
      %445 = vmatprep.subr.mxu0 %v347
      %446 = vmatpush1.msra.mxu0 %v346
      %447 = vmatprep.subr.mxu0 0.0
      %448 = vmatpush2.msra.mxu0 0.0
      %449 = vmatprep.subr.mxu0 0.0
      %450 = vmatpush2.msra.mxu0 0.0
      %451 = vmatprep.subr.mxu0 0.0
      %452 = vmatpush2.msra.mxu0 0.0
      %453 = vmatprep.subr.mxu0 0.0
      %454 = vmatpush2.msra.mxu0 0.0
      %455 = vmatprep.subr.mxu0 0.0
      %456 = vmatpush2.msra.mxu0 0.0
      %457 = vmatprep.subr.mxu0 0.0
      %458 = vmatpush2.msra.mxu0 0.0
      %459 = vmatprep.subr.mxu0 0.0
      %460 = vmatpush2.msra.mxu0 0.0
      %461 = vmatprep.subr.mxu0 0.0
      %462 = vmatpush2.msra.mxu0 0.0
      %463 = vmatprep.subr.mxu0 0.0
      %464 = vmatpush2.msra.mxu0 0.0
      %465 = vmatprep.subr.mxu0 0.0
      %466 = vmatpush2.msra.mxu0 0.0
      %467 = vmatprep.subr.mxu0 0.0
      %468 = vmatpush2.msra.mxu0 0.0
      %469 = vmatprep.subr.mxu0 0.0
      %470 = vmatpush2.msra.mxu0 0.0
      %471 = vmatprep.subr.mxu0 0.0
      %472 = vmatpush2.msra.mxu0 0.0
      %473 = vmatprep.subr.mxu0 0.0
      %474 = vmatpush2.msra.mxu0 0.0
      %475 = vmatprep.subr.mxu0 0.0
      %476 = vmatpush2.msra.mxu0 0.0
      %477 = vmatprep.subr.mxu0 0.0
      %478 = vmatpush2.msra.mxu0 0.0
      %479 = vmatprep.mubr.f32.mxu0 0.0
      %480 = vmatmul.mubr.f32.gmra.mxu0 %v344
      %v481 = vpop.f32.mrf.mxu0
      %v482 = vadd.f32 0.0, %v481
      %v483 = vpop.f32.mrf.mxu0
      %v484 = vadd.f32 0.0, %v483
      %485 = vdwg.mxu0
      %486 = vmatprep.subr.mxu0 %v409
      %487 = vmatpush1.msra.mxu0 %v408
      %488 = vmatprep.subr.mxu0 %v405
      %489 = vmatpush1.msra.mxu0 %v404
      %490 = vmatprep.subr.mxu0 %v401
      %491 = vmatpush1.msra.mxu0 %v400
      %492 = vmatprep.subr.mxu0 %v397
      %493 = vmatpush1.msra.mxu0 %v396
      %494 = vmatprep.subr.mxu0 %v393
      %495 = vmatpush1.msra.mxu0 %v392
      %496 = vmatprep.subr.mxu0 %v389
      %497 = vmatpush1.msra.mxu0 %v388
      %498 = vmatprep.subr.mxu0 %v385
      %499 = vmatpush1.msra.mxu0 %v384
      %500 = vmatprep.subr.mxu0 %v381
      %501 = vmatpush1.msra.mxu0 %v380
      %502 = vmatprep.subr.mxu0 %v377
      %503 = vmatpush1.msra.mxu0 %v376
      %504 = vmatprep.subr.mxu0 %v373
      %505 = vmatpush1.msra.mxu0 %v372
      %506 = vmatprep.subr.mxu0 %v369
      %507 = vmatpush1.msra.mxu0 %v368
      %508 = vmatprep.subr.mxu0 %v365
      %509 = vmatpush1.msra.mxu0 %v364
      %510 = vmatprep.subr.mxu0 %v361
      %511 = vmatpush1.msra.mxu0 %v360
      %512 = vmatprep.subr.mxu0 %v357
      %513 = vmatpush1.msra.mxu0 %v356
      %514 = vmatprep.subr.mxu0 %v353
      %515 = vmatpush1.msra.mxu0 %v352
      %516 = vmatprep.subr.mxu0 %v349
      %517 = vmatpush1.msra.mxu0 %v348
      %518 = vmatprep.subr.mxu0 0.0
      %519 = vmatpush2.msra.mxu0 0.0
      %520 = vmatprep.subr.mxu0 0.0
      %521 = vmatpush2.msra.mxu0 0.0
      %522 = vmatprep.subr.mxu0 0.0
      %523 = vmatpush2.msra.mxu0 0.0
      %524 = vmatprep.subr.mxu0 0.0
      %525 = vmatpush2.msra.mxu0 0.0
      %526 = vmatprep.subr.mxu0 0.0
      %527 = vmatpush2.msra.mxu0 0.0
      %528 = vmatprep.subr.mxu0 0.0
      %529 = vmatpush2.msra.mxu0 0.0
      %530 = vmatprep.subr.mxu0 0.0
      %531 = vmatpush2.msra.mxu0 0.0
      %532 = vmatprep.subr.mxu0 0.0
      %533 = vmatpush2.msra.mxu0 0.0
      %534 = vmatprep.subr.mxu0 0.0
      %535 = vmatpush2.msra.mxu0 0.0
      %536 = vmatprep.subr.mxu0 0.0
      %537 = vmatpush2.msra.mxu0 0.0
      %538 = vmatprep.subr.mxu0 0.0
      %539 = vmatpush2.msra.mxu0 0.0
      %540 = vmatprep.subr.mxu0 0.0
      %541 = vmatpush2.msra.mxu0 0.0
      %542 = vmatprep.subr.mxu0 0.0
      %543 = vmatpush2.msra.mxu0 0.0
      %544 = vmatprep.subr.mxu0 0.0
      %545 = vmatpush2.msra.mxu0 0.0
      %546 = vmatprep.subr.mxu0 0.0
      %547 = vmatpush2.msra.mxu0 0.0
      %548 = vmatprep.subr.mxu0 0.0
      %549 = vmatpush2.msra.mxu0 0.0
      %550 = vmatprep.mubr.f32.mxu0 0.0
      %551 = vmatmul.mubr.f32.gmra.mxu0 %v344
      %v552 = vpop.f32.mrf.mxu0
      %v553 = vadd.f32 0.0, %v552
      %v554 = vpop.f32.mrf.mxu0
      %v555 = vadd.f32 0.0, %v554
      %556 = vdwg.mxu0
      %v557 = vadd.f32 %v411, %v482
      %v558 = vadd.f32 %v412, %v484
      %v559 = vadd.f32 %v413, %v553
      %v560 = vadd.f32 %v414, %v555
      %v561 = vxor.u32 %v557, 2147483648
      %v562 = vmul.f32 %v561, 1.442695
      %v563 = vpow.pop %v562
      %v564 = vadd.f32 %v563, 1.0
      %v565 = vrcp.pop %v564
      %v566 = vmul.f32 1.0, %v565
      %v567 = vxor.u32 %v558, 2147483648
      %v568 = vmul.f32 %v567, 1.442695
      %v569 = vpow.pop %v568
      %v570 = vadd.f32 %v569, 1.0
      %v571 = vrcp.pop %v570
      %v572 = vmul.f32 1.0, %v571
      %v573 = vtanh.pop %v559
      %v574 = vxor.u32 %v560, 2147483648
      %v575 = vmul.f32 %v574, 1.442695
      %v576 = vpow.pop %v575
      %v577 = vadd.f32 %v576, 1.0
      %v578 = vrcp.pop %v577
      %v579 = vmul.f32 1.0, %v578
      %v580 = vmul.f32 %v572, %v345
      %v581 = vmul.f32 %v566, %v573
      %v582 = vadd.f32 %v580, %v581
      %v583 = vtanh.pop %v582
      %v584 = vmul.f32 %v579, %v583
      %s585 = scalar_lea.vmem %s316, 24
      %v586 = vld [vmem:[%s585] sm:$0xff]
      %588 = vset.pattern.permute.xlu0 0
      %589 = vperm.xlu0 %588, %v586
      %v590 = vpop.permute.xlu0 %589
      %v592 = vmul.f32 %v584, %v590
      %v593 = vmul.f32 %v582, %v590
      %s594 = scalar_lea.vmem %s327, 24
      %595 = vst [vmem:[%s594] sm:$0xff] %v592
      %s596 = scalar_lea.vmem %s305, 64
      %v597 = vld [vmem:[%s596] sm:$0xff]
      %v598 = vld [vmem:[%s596 + $0x8] sm:$0xff]
      %v599 = vld [vmem:[%s596 + $0x10] sm:$0xff]
      %v600 = vld [vmem:[%s596 + $0x18] sm:$0xff]
      %601 = vmatprep.subr.mxu0 %v407
      %602 = vmatpush1.msra.mxu0 %v406
      %603 = vmatprep.subr.mxu0 %v403
      %604 = vmatpush1.msra.mxu0 %v402
      %605 = vmatprep.subr.mxu0 %v399
      %606 = vmatpush1.msra.mxu0 %v398
      %607 = vmatprep.subr.mxu0 %v395
      %608 = vmatpush1.msra.mxu0 %v394
      %609 = vmatprep.subr.mxu0 %v391
      %610 = vmatpush1.msra.mxu0 %v390
      %611 = vmatprep.subr.mxu0 %v387
      %612 = vmatpush1.msra.mxu0 %v386
      %613 = vmatprep.subr.mxu0 %v383
      %614 = vmatpush1.msra.mxu0 %v382
      %615 = vmatprep.subr.mxu0 %v379
      %616 = vmatpush1.msra.mxu0 %v378
      %617 = vmatprep.subr.mxu0 %v375
      %618 = vmatpush1.msra.mxu0 %v374
      %619 = vmatprep.subr.mxu0 %v371
      %620 = vmatpush1.msra.mxu0 %v370
      %621 = vmatprep.subr.mxu0 %v367
      %622 = vmatpush1.msra.mxu0 %v366
      %623 = vmatprep.subr.mxu0 %v363
      %624 = vmatpush1.msra.mxu0 %v362
      %625 = vmatprep.subr.mxu0 %v359
      %626 = vmatpush1.msra.mxu0 %v358
      %627 = vmatprep.subr.mxu0 %v355
      %628 = vmatpush1.msra.mxu0 %v354
      %629 = vmatprep.subr.mxu0 %v351
      %630 = vmatpush1.msra.mxu0 %v350
      %631 = vmatprep.subr.mxu0 %v347
      %632 = vmatpush1.msra.mxu0 %v346
      %633 = vmatprep.subr.mxu0 0.0
      %634 = vmatpush2.msra.mxu0 0.0
      %635 = vmatprep.subr.mxu0 0.0
      %636 = vmatpush2.msra.mxu0 0.0
      %637 = vmatprep.subr.mxu0 0.0
      %638 = vmatpush2.msra.mxu0 0.0
      %639 = vmatprep.subr.mxu0 0.0
      %640 = vmatpush2.msra.mxu0 0.0
      %641 = vmatprep.subr.mxu0 0.0
      %642 = vmatpush2.msra.mxu0 0.0
      %643 = vmatprep.subr.mxu0 0.0
      %644 = vmatpush2.msra.mxu0 0.0
      %645 = vmatprep.subr.mxu0 0.0
      %646 = vmatpush2.msra.mxu0 0.0
      %647 = vmatprep.subr.mxu0 0.0
      %648 = vmatpush2.msra.mxu0 0.0
      %649 = vmatprep.subr.mxu0 0.0
      %650 = vmatpush2.msra.mxu0 0.0
      %651 = vmatprep.subr.mxu0 0.0
      %652 = vmatpush2.msra.mxu0 0.0
      %653 = vmatprep.subr.mxu0 0.0
      %654 = vmatpush2.msra.mxu0 0.0
      %655 = vmatprep.subr.mxu0 0.0
      %656 = vmatpush2.msra.mxu0 0.0
      %657 = vmatprep.subr.mxu0 0.0
      %658 = vmatpush2.msra.mxu0 0.0
      %659 = vmatprep.subr.mxu0 0.0
      %660 = vmatpush2.msra.mxu0 0.0
      %661 = vmatprep.subr.mxu0 0.0
      %662 = vmatpush2.msra.mxu0 0.0
      %663 = vmatprep.subr.mxu0 0.0
      %664 = vmatpush2.msra.mxu0 0.0
      %665 = vmatprep.mubr.f32.mxu0 0.0
      %666 = vmatmul.mubr.f32.gmra.mxu0 %v592
      %v667 = vpop.f32.mrf.mxu0
      %v668 = vadd.f32 0.0, %v667
      %v669 = vpop.f32.mrf.mxu0
      %v670 = vadd.f32 0.0, %v669
      %671 = vdwg.mxu0
      %672 = vmatprep.subr.mxu0 %v409
      %673 = vmatpush1.msra.mxu0 %v408
      %674 = vmatprep.subr.mxu0 %v405
      %675 = vmatpush1.msra.mxu0 %v404
      %676 = vmatprep.subr.mxu0 %v401
      %677 = vmatpush1.msra.mxu0 %v400
      %678 = vmatprep.subr.mxu0 %v397
      %679 = vmatpush1.msra.mxu0 %v396
      %680 = vmatprep.subr.mxu0 %v393
      %681 = vmatpush1.msra.mxu0 %v392
      %682 = vmatprep.subr.mxu0 %v389
      %683 = vmatpush1.msra.mxu0 %v388
      %684 = vmatprep.subr.mxu0 %v385
      %685 = vmatpush1.msra.mxu0 %v384
      %686 = vmatprep.subr.mxu0 %v381
      %687 = vmatpush1.msra.mxu0 %v380
      %688 = vmatprep.subr.mxu0 %v377
      %689 = vmatpush1.msra.mxu0 %v376
      %690 = vmatprep.subr.mxu0 %v373
      %691 = vmatpush1.msra.mxu0 %v372
      %692 = vmatprep.subr.mxu0 %v369
      %693 = vmatpush1.msra.mxu0 %v368
      %694 = vmatprep.subr.mxu0 %v365
      %695 = vmatpush1.msra.mxu0 %v364
      %696 = vmatprep.subr.mxu0 %v361
      %697 = vmatpush1.msra.mxu0 %v360
      %698 = vmatprep.subr.mxu0 %v357
      %699 = vmatpush1.msra.mxu0 %v356
      %700 = vmatprep.subr.mxu0 %v353
      %701 = vmatpush1.msra.mxu0 %v352
      %702 = vmatprep.subr.mxu0 %v349
      %703 = vmatpush1.msra.mxu0 %v348
      %704 = vmatprep.subr.mxu0 0.0
      %705 = vmatpush2.msra.mxu0 0.0
      %706 = vmatprep.subr.mxu0 0.0
      %707 = vmatpush2.msra.mxu0 0.0
      %708 = vmatprep.subr.mxu0 0.0
      %709 = vmatpush2.msra.mxu0 0.0
      %710 = vmatprep.subr.mxu0 0.0
      %711 = vmatpush2.msra.mxu0 0.0
      %712 = vmatprep.subr.mxu0 0.0
      %713 = vmatpush2.msra.mxu0 0.0
      %714 = vmatprep.subr.mxu0 0.0
      %715 = vmatpush2.msra.mxu0 0.0
      %716 = vmatprep.subr.mxu0 0.0
      %717 = vmatpush2.msra.mxu0 0.0
      %718 = vmatprep.subr.mxu0 0.0
      %719 = vmatpush2.msra.mxu0 0.0
      %720 = vmatprep.subr.mxu0 0.0
      %721 = vmatpush2.msra.mxu0 0.0
      %722 = vmatprep.subr.mxu0 0.0
      %723 = vmatpush2.msra.mxu0 0.0
      %724 = vmatprep.subr.mxu0 0.0
      %725 = vmatpush2.msra.mxu0 0.0
      %726 = vmatprep.subr.mxu0 0.0
      %727 = vmatpush2.msra.mxu0 0.0
      %728 = vmatprep.subr.mxu0 0.0
      %729 = vmatpush2.msra.mxu0 0.0
      %730 = vmatprep.subr.mxu0 0.0
      %731 = vmatpush2.msra.mxu0 0.0
      %732 = vmatprep.subr.mxu0 0.0
      %733 = vmatpush2.msra.mxu0 0.0
      %734 = vmatprep.subr.mxu0 0.0
      %735 = vmatpush2.msra.mxu0 0.0
      %736 = vmatprep.mubr.f32.mxu0 0.0
      %737 = vmatmul.mubr.f32.gmra.mxu0 %v592
      %v738 = vpop.f32.mrf.mxu0
      %v739 = vadd.f32 0.0, %v738
      %v740 = vpop.f32.mrf.mxu0
      %v741 = vadd.f32 0.0, %v740
      %742 = vdwg.mxu0
      %v743 = vadd.f32 %v597, %v668
      %v744 = vadd.f32 %v598, %v670
      %v745 = vadd.f32 %v599, %v739
      %v746 = vadd.f32 %v600, %v741
      %v747 = vxor.u32 %v743, 2147483648
      %v748 = vmul.f32 %v747, 1.442695
      %v749 = vpow.pop %v748
      %v750 = vadd.f32 %v749, 1.0
      %v751 = vrcp.pop %v750
      %v752 = vmul.f32 1.0, %v751
      %v753 = vxor.u32 %v744, 2147483648
      %v754 = vmul.f32 %v753, 1.442695
      %v755 = vpow.pop %v754
      %v756 = vadd.f32 %v755, 1.0
      %v757 = vrcp.pop %v756
      %v758 = vmul.f32 1.0, %v757
      %v759 = vtanh.pop %v745
      %v760 = vxor.u32 %v746, 2147483648
      %v761 = vmul.f32 %v760, 1.442695
      %v762 = vpow.pop %v761
      %v763 = vadd.f32 %v762, 1.0
      %v764 = vrcp.pop %v763
      %v765 = vmul.f32 1.0, %v764
      %v766 = vmul.f32 %v758, %v593
      %v767 = vmul.f32 %v752, %v759
      %v768 = vadd.f32 %v766, %v767
      %v769 = vtanh.pop %v768
      %v770 = vmul.f32 %v765, %v769
      %s771 = scalar_lea.vmem %s316, 16
      %v772 = vld [vmem:[%s771] sm:$0xff]
      %774 = vset.pattern.permute.xlu0 0
      %775 = vperm.xlu0 %774, %v772
      %v776 = vpop.permute.xlu0 %775
      %v778 = vmul.f32 %v770, %v776
      %v779 = vmul.f32 %v768, %v776
      %s780 = scalar_lea.vmem %s327, 16
      %781 = vst [vmem:[%s780] sm:$0xff] %v778
      %s782 = scalar_lea.vmem %s305, 32
      %v783 = vld [vmem:[%s782] sm:$0xff]
      %v784 = vld [vmem:[%s782 + $0x8] sm:$0xff]
      %v785 = vld [vmem:[%s782 + $0x10] sm:$0xff]
      %v786 = vld [vmem:[%s782 + $0x18] sm:$0xff]
      %787 = vmatprep.subr.mxu0 %v407
      %788 = vmatpush1.msra.mxu0 %v406
      %789 = vmatprep.subr.mxu0 %v403
      %790 = vmatpush1.msra.mxu0 %v402
      %791 = vmatprep.subr.mxu0 %v399
      %792 = vmatpush1.msra.mxu0 %v398
      %793 = vmatprep.subr.mxu0 %v395
      %794 = vmatpush1.msra.mxu0 %v394
      %795 = vmatprep.subr.mxu0 %v391
      %796 = vmatpush1.msra.mxu0 %v390
      %797 = vmatprep.subr.mxu0 %v387
      %798 = vmatpush1.msra.mxu0 %v386
      %799 = vmatprep.subr.mxu0 %v383
      %800 = vmatpush1.msra.mxu0 %v382
      %801 = vmatprep.subr.mxu0 %v379
      %802 = vmatpush1.msra.mxu0 %v378
      %803 = vmatprep.subr.mxu0 %v375
      %804 = vmatpush1.msra.mxu0 %v374
      %805 = vmatprep.subr.mxu0 %v371
      %806 = vmatpush1.msra.mxu0 %v370
      %807 = vmatprep.subr.mxu0 %v367
      %808 = vmatpush1.msra.mxu0 %v366
      %809 = vmatprep.subr.mxu0 %v363
      %810 = vmatpush1.msra.mxu0 %v362
      %811 = vmatprep.subr.mxu0 %v359
      %812 = vmatpush1.msra.mxu0 %v358
      %813 = vmatprep.subr.mxu0 %v355
      %814 = vmatpush1.msra.mxu0 %v354
      %815 = vmatprep.subr.mxu0 %v351
      %816 = vmatpush1.msra.mxu0 %v350
      %817 = vmatprep.subr.mxu0 %v347
      %818 = vmatpush1.msra.mxu0 %v346
      %819 = vmatprep.subr.mxu0 0.0
      %820 = vmatpush2.msra.mxu0 0.0
      %821 = vmatprep.subr.mxu0 0.0
      %822 = vmatpush2.msra.mxu0 0.0
      %823 = vmatprep.subr.mxu0 0.0
      %824 = vmatpush2.msra.mxu0 0.0
      %825 = vmatprep.subr.mxu0 0.0
      %826 = vmatpush2.msra.mxu0 0.0
      %827 = vmatprep.subr.mxu0 0.0
      %828 = vmatpush2.msra.mxu0 0.0
      %829 = vmatprep.subr.mxu0 0.0
      %830 = vmatpush2.msra.mxu0 0.0
      %831 = vmatprep.subr.mxu0 0.0
      %832 = vmatpush2.msra.mxu0 0.0
      %833 = vmatprep.subr.mxu0 0.0
      %834 = vmatpush2.msra.mxu0 0.0
      %835 = vmatprep.subr.mxu0 0.0
      %836 = vmatpush2.msra.mxu0 0.0
      %837 = vmatprep.subr.mxu0 0.0
      %838 = vmatpush2.msra.mxu0 0.0
      %839 = vmatprep.subr.mxu0 0.0
      %840 = vmatpush2.msra.mxu0 0.0
      %841 = vmatprep.subr.mxu0 0.0
      %842 = vmatpush2.msra.mxu0 0.0
      %843 = vmatprep.subr.mxu0 0.0
      %844 = vmatpush2.msra.mxu0 0.0
      %845 = vmatprep.subr.mxu0 0.0
      %846 = vmatpush2.msra.mxu0 0.0
      %847 = vmatprep.subr.mxu0 0.0
      %848 = vmatpush2.msra.mxu0 0.0
      %849 = vmatprep.subr.mxu0 0.0
      %850 = vmatpush2.msra.mxu0 0.0
      %851 = vmatprep.mubr.f32.mxu0 0.0
      %852 = vmatmul.mubr.f32.gmra.mxu0 %v778
      %v853 = vpop.f32.mrf.mxu0
      %v854 = vadd.f32 0.0, %v853
      %v855 = vpop.f32.mrf.mxu0
      %v856 = vadd.f32 0.0, %v855
      %857 = vdwg.mxu0
      %858 = vmatprep.subr.mxu0 %v409
      %859 = vmatpush1.msra.mxu0 %v408
      %860 = vmatprep.subr.mxu0 %v405
      %861 = vmatpush1.msra.mxu0 %v404
      %862 = vmatprep.subr.mxu0 %v401
      %863 = vmatpush1.msra.mxu0 %v400
      %864 = vmatprep.subr.mxu0 %v397
      %865 = vmatpush1.msra.mxu0 %v396
      %866 = vmatprep.subr.mxu0 %v393
      %867 = vmatpush1.msra.mxu0 %v392
      %868 = vmatprep.subr.mxu0 %v389
      %869 = vmatpush1.msra.mxu0 %v388
      %870 = vmatprep.subr.mxu0 %v385
      %871 = vmatpush1.msra.mxu0 %v384
      %872 = vmatprep.subr.mxu0 %v381
      %873 = vmatpush1.msra.mxu0 %v380
      %874 = vmatprep.subr.mxu0 %v377
      %875 = vmatpush1.msra.mxu0 %v376
      %876 = vmatprep.subr.mxu0 %v373
      %877 = vmatpush1.msra.mxu0 %v372
      %878 = vmatprep.subr.mxu0 %v369
      %879 = vmatpush1.msra.mxu0 %v368
      %880 = vmatprep.subr.mxu0 %v365
      %881 = vmatpush1.msra.mxu0 %v364
      %882 = vmatprep.subr.mxu0 %v361
      %883 = vmatpush1.msra.mxu0 %v360
      %884 = vmatprep.subr.mxu0 %v357
      %885 = vmatpush1.msra.mxu0 %v356
      %886 = vmatprep.subr.mxu0 %v353
      %887 = vmatpush1.msra.mxu0 %v352
      %888 = vmatprep.subr.mxu0 %v349
      %889 = vmatpush1.msra.mxu0 %v348
      %890 = vmatprep.subr.mxu0 0.0
      %891 = vmatpush2.msra.mxu0 0.0
      %892 = vmatprep.subr.mxu0 0.0
      %893 = vmatpush2.msra.mxu0 0.0
      %894 = vmatprep.subr.mxu0 0.0
      %895 = vmatpush2.msra.mxu0 0.0
      %896 = vmatprep.subr.mxu0 0.0
      %897 = vmatpush2.msra.mxu0 0.0
      %898 = vmatprep.subr.mxu0 0.0
      %899 = vmatpush2.msra.mxu0 0.0
      %900 = vmatprep.subr.mxu0 0.0
      %901 = vmatpush2.msra.mxu0 0.0
      %902 = vmatprep.subr.mxu0 0.0
      %903 = vmatpush2.msra.mxu0 0.0
      %904 = vmatprep.subr.mxu0 0.0
      %905 = vmatpush2.msra.mxu0 0.0
      %906 = vmatprep.subr.mxu0 0.0
      %907 = vmatpush2.msra.mxu0 0.0
      %908 = vmatprep.subr.mxu0 0.0
      %909 = vmatpush2.msra.mxu0 0.0
      %910 = vmatprep.subr.mxu0 0.0
      %911 = vmatpush2.msra.mxu0 0.0
      %912 = vmatprep.subr.mxu0 0.0
      %913 = vmatpush2.msra.mxu0 0.0
      %914 = vmatprep.subr.mxu0 0.0
      %915 = vmatpush2.msra.mxu0 0.0
      %916 = vmatprep.subr.mxu0 0.0
      %917 = vmatpush2.msra.mxu0 0.0
      %918 = vmatprep.subr.mxu0 0.0
      %919 = vmatpush2.msra.mxu0 0.0
      %920 = vmatprep.subr.mxu0 0.0
      %921 = vmatpush2.msra.mxu0 0.0
      %922 = vmatprep.mubr.f32.mxu0 0.0
      %923 = vmatmul.mubr.f32.gmra.mxu0 %v778
      %v924 = vpop.f32.mrf.mxu0
      %v925 = vadd.f32 0.0, %v924
      %v926 = vpop.f32.mrf.mxu0
      %v927 = vadd.f32 0.0, %v926
      %928 = vdwg.mxu0
      %v929 = vadd.f32 %v783, %v854
      %v930 = vadd.f32 %v784, %v856
      %v931 = vadd.f32 %v785, %v925
      %v932 = vadd.f32 %v786, %v927
      %v933 = vxor.u32 %v929, 2147483648
      %v934 = vmul.f32 %v933, 1.442695
      %v935 = vpow.pop %v934
      %v936 = vadd.f32 %v935, 1.0
      %v937 = vrcp.pop %v936
      %v938 = vmul.f32 1.0, %v937
      %v939 = vxor.u32 %v930, 2147483648
      %v940 = vmul.f32 %v939, 1.442695
      %v941 = vpow.pop %v940
      %v942 = vadd.f32 %v941, 1.0
      %v943 = vrcp.pop %v942
      %v944 = vmul.f32 1.0, %v943
      %v945 = vtanh.pop %v931
      %v946 = vxor.u32 %v932, 2147483648
      %v947 = vmul.f32 %v946, 1.442695
      %v948 = vpow.pop %v947
      %v949 = vadd.f32 %v948, 1.0
      %v950 = vrcp.pop %v949
      %v951 = vmul.f32 1.0, %v950
      %v952 = vmul.f32 %v944, %v779
      %v953 = vmul.f32 %v938, %v945
      %v954 = vadd.f32 %v952, %v953
      %v955 = vtanh.pop %v954
      %v956 = vmul.f32 %v951, %v955
      %s957 = scalar_lea.vmem %s316, 8
      %v958 = vld [vmem:[%s957] sm:$0xff]
      %960 = vset.pattern.permute.xlu0 0
      %961 = vperm.xlu0 %960, %v958
      %v962 = vpop.permute.xlu0 %961
      %v964 = vmul.f32 %v956, %v962
      %v965 = vmul.f32 %v954, %v962
      %s966 = scalar_lea.vmem %s327, 8
      %967 = vst [vmem:[%s966] sm:$0xff] %v964
      %v968 = vld [vmem:[%s305] sm:$0xff]
      %v969 = vld [vmem:[%s305 + $0x8] sm:$0xff]
      %v970 = vld [vmem:[%s305 + $0x10] sm:$0xff]
      %v971 = vld [vmem:[%s305 + $0x18] sm:$0xff]
      %972 = vmatprep.subr.mxu0 %v407
      %973 = vmatpush1.msra.mxu0 %v406
      %974 = vmatprep.subr.mxu0 %v403
      %975 = vmatpush1.msra.mxu0 %v402
      %976 = vmatprep.subr.mxu0 %v399
      %977 = vmatpush1.msra.mxu0 %v398
      %978 = vmatprep.subr.mxu0 %v395
      %979 = vmatpush1.msra.mxu0 %v394
      %980 = vmatprep.subr.mxu0 %v391
      %981 = vmatpush1.msra.mxu0 %v390
      %982 = vmatprep.subr.mxu0 %v387
      %983 = vmatpush1.msra.mxu0 %v386
      %984 = vmatprep.subr.mxu0 %v383
      %985 = vmatpush1.msra.mxu0 %v382
      %986 = vmatprep.subr.mxu0 %v379
      %987 = vmatpush1.msra.mxu0 %v378
      %988 = vmatprep.subr.mxu0 %v375
      %989 = vmatpush1.msra.mxu0 %v374
      %990 = vmatprep.subr.mxu0 %v371
      %991 = vmatpush1.msra.mxu0 %v370
      %992 = vmatprep.subr.mxu0 %v367
      %993 = vmatpush1.msra.mxu0 %v366
      %994 = vmatprep.subr.mxu0 %v363
      %995 = vmatpush1.msra.mxu0 %v362
      %996 = vmatprep.subr.mxu0 %v359
      %997 = vmatpush1.msra.mxu0 %v358
      %998 = vmatprep.subr.mxu0 %v355
      %999 = vmatpush1.msra.mxu0 %v354
      %1000 = vmatprep.subr.mxu0 %v351
      %1001 = vmatpush1.msra.mxu0 %v350
      %1002 = vmatprep.subr.mxu0 %v347
      %1003 = vmatpush1.msra.mxu0 %v346
      %1004 = vmatprep.subr.mxu0 0.0
      %1005 = vmatpush2.msra.mxu0 0.0
      %1006 = vmatprep.subr.mxu0 0.0
      %1007 = vmatpush2.msra.mxu0 0.0
      %1008 = vmatprep.subr.mxu0 0.0
      %1009 = vmatpush2.msra.mxu0 0.0
      %1010 = vmatprep.subr.mxu0 0.0
      %1011 = vmatpush2.msra.mxu0 0.0
      %1012 = vmatprep.subr.mxu0 0.0
      %1013 = vmatpush2.msra.mxu0 0.0
      %1014 = vmatprep.subr.mxu0 0.0
      %1015 = vmatpush2.msra.mxu0 0.0
      %1016 = vmatprep.subr.mxu0 0.0
      %1017 = vmatpush2.msra.mxu0 0.0
      %1018 = vmatprep.subr.mxu0 0.0
      %1019 = vmatpush2.msra.mxu0 0.0
      %1020 = vmatprep.subr.mxu0 0.0
      %1021 = vmatpush2.msra.mxu0 0.0
      %1022 = vmatprep.subr.mxu0 0.0
      %1023 = vmatpush2.msra.mxu0 0.0
      %1024 = vmatprep.subr.mxu0 0.0
      %1025 = vmatpush2.msra.mxu0 0.0
      %1026 = vmatprep.subr.mxu0 0.0
      %1027 = vmatpush2.msra.mxu0 0.0
      %1028 = vmatprep.subr.mxu0 0.0
      %1029 = vmatpush2.msra.mxu0 0.0
      %1030 = vmatprep.subr.mxu0 0.0
      %1031 = vmatpush2.msra.mxu0 0.0
      %1032 = vmatprep.subr.mxu0 0.0
      %1033 = vmatpush2.msra.mxu0 0.0
      %1034 = vmatprep.subr.mxu0 0.0
      %1035 = vmatpush2.msra.mxu0 0.0
      %1036 = vmatprep.mubr.f32.mxu0 0.0
      %1037 = vmatmul.mubr.f32.gmra.mxu0 %v964
      %v1038 = vpop.f32.mrf.mxu0
      %v1039 = vadd.f32 0.0, %v1038
      %v1040 = vpop.f32.mrf.mxu0
      %v1041 = vadd.f32 0.0, %v1040
      %1042 = vdwg.mxu0
      %1043 = vmatprep.subr.mxu0 %v409
      %1044 = vmatpush1.msra.mxu0 %v408
      %1045 = vmatprep.subr.mxu0 %v405
      %1046 = vmatpush1.msra.mxu0 %v404
      %1047 = vmatprep.subr.mxu0 %v401
      %1048 = vmatpush1.msra.mxu0 %v400
      %1049 = vmatprep.subr.mxu0 %v397
      %1050 = vmatpush1.msra.mxu0 %v396
      %1051 = vmatprep.subr.mxu0 %v393
      %1052 = vmatpush1.msra.mxu0 %v392
      %1053 = vmatprep.subr.mxu0 %v389
      %1054 = vmatpush1.msra.mxu0 %v388
      %1055 = vmatprep.subr.mxu0 %v385
      %1056 = vmatpush1.msra.mxu0 %v384
      %1057 = vmatprep.subr.mxu0 %v381
      %1058 = vmatpush1.msra.mxu0 %v380
      %1059 = vmatprep.subr.mxu0 %v377
      %1060 = vmatpush1.msra.mxu0 %v376
      %1061 = vmatprep.subr.mxu0 %v373
      %1062 = vmatpush1.msra.mxu0 %v372
      %1063 = vmatprep.subr.mxu0 %v369
      %1064 = vmatpush1.msra.mxu0 %v368
      %1065 = vmatprep.subr.mxu0 %v365
      %1066 = vmatpush1.msra.mxu0 %v364
      %1067 = vmatprep.subr.mxu0 %v361
      %1068 = vmatpush1.msra.mxu0 %v360
      %1069 = vmatprep.subr.mxu0 %v357
      %1070 = vmatpush1.msra.mxu0 %v356
      %1071 = vmatprep.subr.mxu0 %v353
      %1072 = vmatpush1.msra.mxu0 %v352
      %1073 = vmatprep.subr.mxu0 %v349
      %1074 = vmatpush1.msra.mxu0 %v348
      %1075 = vmatprep.subr.mxu0 0.0
      %1076 = vmatpush2.msra.mxu0 0.0
      %1077 = vmatprep.subr.mxu0 0.0
      %1078 = vmatpush2.msra.mxu0 0.0
      %1079 = vmatprep.subr.mxu0 0.0
      %1080 = vmatpush2.msra.mxu0 0.0
      %1081 = vmatprep.subr.mxu0 0.0
      %1082 = vmatpush2.msra.mxu0 0.0
      %1083 = vmatprep.subr.mxu0 0.0
      %1084 = vmatpush2.msra.mxu0 0.0
      %1085 = vmatprep.subr.mxu0 0.0
      %1086 = vmatpush2.msra.mxu0 0.0
      %1087 = vmatprep.subr.mxu0 0.0
      %1088 = vmatpush2.msra.mxu0 0.0
      %1089 = vmatprep.subr.mxu0 0.0
      %1090 = vmatpush2.msra.mxu0 0.0
      %1091 = vmatprep.subr.mxu0 0.0
      %1092 = vmatpush2.msra.mxu0 0.0
      %1093 = vmatprep.subr.mxu0 0.0
      %1094 = vmatpush2.msra.mxu0 0.0
      %1095 = vmatprep.subr.mxu0 0.0
      %1096 = vmatpush2.msra.mxu0 0.0
      %1097 = vmatprep.subr.mxu0 0.0
      %1098 = vmatpush2.msra.mxu0 0.0
      %1099 = vmatprep.subr.mxu0 0.0
      %1100 = vmatpush2.msra.mxu0 0.0
      %1101 = vmatprep.subr.mxu0 0.0
      %1102 = vmatpush2.msra.mxu0 0.0
      %1103 = vmatprep.subr.mxu0 0.0
      %1104 = vmatpush2.msra.mxu0 0.0
      %1105 = vmatprep.subr.mxu0 0.0
      %1106 = vmatpush2.msra.mxu0 0.0
      %1107 = vmatprep.mubr.f32.mxu0 0.0
      %1108 = vmatmul.mubr.f32.gmra.mxu0 %v964
      %v1109 = vpop.f32.mrf.mxu0
      %v1110 = vadd.f32 0.0, %v1109
      %v1111 = vpop.f32.mrf.mxu0
      %v1112 = vadd.f32 0.0, %v1111
      %1113 = vdwg.mxu0
      %v1114 = vadd.f32 %v968, %v1039
      %v1115 = vadd.f32 %v969, %v1041
      %v1116 = vadd.f32 %v970, %v1110
      %v1117 = vadd.f32 %v971, %v1112
      %v1118 = vxor.u32 %v1114, 2147483648
      %v1119 = vmul.f32 %v1118, 1.442695
      %v1120 = vpow.pop %v1119
      %v1121 = vadd.f32 %v1120, 1.0
      %v1122 = vrcp.pop %v1121
      %v1123 = vmul.f32 1.0, %v1122
      %v1124 = vxor.u32 %v1115, 2147483648
      %v1125 = vmul.f32 %v1124, 1.442695
      %v1126 = vpow.pop %v1125
      %v1127 = vadd.f32 %v1126, 1.0
      %v1128 = vrcp.pop %v1127
      %v1129 = vmul.f32 1.0, %v1128
      %v1130 = vtanh.pop %v1116
      %v1131 = vxor.u32 %v1117, 2147483648
      %v1132 = vmul.f32 %v1131, 1.442695
      %v1133 = vpow.pop %v1132
      %v1134 = vadd.f32 %v1133, 1.0
      %v1135 = vrcp.pop %v1134
      %v1136 = vmul.f32 1.0, %v1135
      %v1137 = vmul.f32 %v1129, %v965
      %v1138 = vmul.f32 %v1123, %v1130
      %v1139 = vadd.f32 %v1137, %v1138
      %v1140 = vtanh.pop %v1139
      %v1141 = vmul.f32 %v1136, %v1140
      %v1142 = vld [vmem:[%s316] sm:$0xff]
      %1144 = vset.pattern.permute.xlu0 0
      %1145 = vperm.xlu0 %1144, %v1142
      %v1146 = vpop.permute.xlu0 %1145
      %v1148 = vmul.f32 %v1141, %v1146
      %v1149 = vmul.f32 %v1139, %v1146
      %1150 = vst [vmem:[%s327] sm:$0xff] %v1148
      %p1151 = scmp.eq.s32.totalorder %s22, 2
      // Predicated region
      $region37: #{mylstm1_forward.5} parent=31 // pred_check
        %p1152 = pneg %p1151
      $region38: #{mylstm1_forward.5} parent=31 // pred_check_branch
        %1154 = sbr.rel (%p1152) target = $region40
      $region39: #{mylstm1_forward.5} parent=31 // pred_region
        %1155 = vst [vmem:[%s333] sm:$0xff] %v1148
        %1156 = vst [vmem:[%s337] sm:$0xff] %v1149
      $region40: #{mylstm1_forward.5} parent=31 // pred_fallthru
        _
      %1157 = vst [vmem:[#allocation2] sm:$0xff] %v1148
      %1158 = vst [vmem:[#allocation3] sm:$0xff] %v1149
      %s1159 = ssub.s32 2, %s22
      %s1160 = smul.u32 4, %s1159
      %p1161 = scmp.lt.s32.totalorder %s1160, 11
      %s1162 = scalar_select %p1161, %s1160, 11
      %p1163 = scmp.lt.s32.totalorder %s21, 0
      %s1164 = scalar_select %p1163, %s21, 0
      %s1165 = sadd.s32 %s1164, %s1162
      %s1166 = smul.addr %s1165, 8
      %s1167 = scalar_lea.vmem %s3, %s1166
      %p1168 = scmp.lt.s32.totalorder %s21, 0
      %s1169 = scalar_select %p1168, %s21, 0
      %s1170 = smul.addr %s1169, 8
      %s1171 = scalar_lea.vmem %s4, %s1170
      %p1172 = scmp.lt.s32.totalorder %s21, 0
      %s1173 = scalar_select %p1172, %s21, 0
      %s1174 = smul.addr %s1173, 8
      %s1175 = scalar_lea.vmem %s5, %s1174
      // Predicated region
      $region41: #{mylstm1_forward.5} parent=31 // pred_check
        %p1176 = pneg %p132
      $region42: #{mylstm1_forward.5} parent=31 // pred_check_branch
        %1178 = sbr.rel (%p1176) target = $region44
      $region43: #{mylstm1_forward.5} parent=31 // pred_region
        %s1179 = ssub.s32 2, %s22
        %s1180 = smul.u32 4, %s1179
      $region44: #{mylstm1_forward.5} parent=31 // pred_fallthru
        _
      // Predicated region
      $region45: #{mylstm1_forward.5} parent=31 // pred_check
        %p1181 = pneg %p158
      $region46: #{mylstm1_forward.5} parent=31 // pred_check_branch
        %1183 = sbr.rel (%p1181) target = $region48
      $region47: #{mylstm1_forward.5} parent=31 // pred_region
        _
      $region48: #{mylstm1_forward.5} parent=31 // pred_fallthru
        _
      // Predicated region
      $region49: #{mylstm1_forward.5} parent=31 // pred_check
        %p1184 = pneg %p184
      $region50: #{mylstm1_forward.5} parent=31 // pred_check_branch
        %1186 = sbr.rel (%p1184) target = $region52
      $region51: #{mylstm1_forward.5} parent=31 // pred_region
        _
      $region52: #{mylstm1_forward.5} parent=31 // pred_fallthru
        _
      // Predicated region
      $region53: #{mylstm1_forward.5} parent=31 // pred_check
        %p1187 = pneg %p158
      $region54: #{mylstm1_forward.5} parent=31 // pred_check_branch
        %1189 = sbr.rel (%p1187) target = $region56
      $region55: #{mylstm1_forward.5} parent=31 // pred_region
        %p1190 = scmp.lt.s32.totalorder %s21, 0
        %s1191 = scalar_select %p1190, %s21, 0
        %s1192 = smul.addr %s1191, 8
        %s1193 = scalar_lea.vmem %s4, %s1192
      $region56: #{mylstm1_forward.5} parent=31 // pred_fallthru
        _
      // Predicated region
      $region57: #{mylstm1_forward.5} parent=31 // pred_check
        %p1194 = pneg %p184
      $region58: #{mylstm1_forward.5} parent=31 // pred_check_branch
        %1196 = sbr.rel (%p1194) target = $region60
      $region59: #{mylstm1_forward.5} parent=31 // pred_region
        %p1197 = scmp.lt.s32.totalorder %s21, 0
        %s1198 = scalar_select %p1197, %s21, 0
        %s1199 = smul.addr %s1198, 8
        %s1200 = scalar_lea.vmem %s5, %s1199
      $region60: #{mylstm1_forward.5} parent=31 // pred_fallthru
        _
    $region32: #{mylstm1_forward.5} parent=5 // pred_fallthru
      _
    %p1201 = scmp.le.s32.totalorder 2, %s12
    // Predicated region
    $region61: #{mylstm1_forward.5} parent=5 // pred_check
      %p1202 = pneg %p1201
    $region62: #{mylstm1_forward.5} parent=5 // pred_check_branch
      %1204 = sbr.rel (%p1202) target = $region64
    $region63: #{mylstm1_forward.5} parent=5 // pred_region
      %s1205 = ssub.s32 %s12, 2
      // Predicated region
      $region65: #{mylstm1_forward.5} parent=63 // pred_check
        %p1206 = pneg %p138
      $region66: #{mylstm1_forward.5} parent=63 // pred_check_branch
        %1208 = sbr.rel (%p1206) target = $region68
      $region67: #{mylstm1_forward.5} parent=63 // pred_region
        %s1209 = ssub.s32 2, %s24
        %s1210 = smul.u32 4, %s1209
        %p1211 = scmp.lt.s32.totalorder %s1210, 11
        %s1212 = scalar_select %p1211, %s1210, 11
        %p1213 = scmp.lt.s32.totalorder %s23, 0
        %s1214 = scalar_select %p1213, %s23, 0
        %s1215 = sadd.s32 %s1214, %s1212
        %s1216 = smul.addr %s1215, 8
        %s1217 = scalar_lea.vmem %s3, %s1216
      $region68: #{mylstm1_forward.5} parent=63 // pred_fallthru
        _
    $region64: #{mylstm1_forward.5} parent=5 // pred_fallthru
      _
  $region6: #{mylstm1_forward.5} parent=0 // loop_footer
    %s16 = sadd.s32 1, %s12
  $region7: #{mylstm1_forward.5} parent=0 // loop_footer_branch
    %11 = sbr.rel target = $region3
  $region8: #{mylstm1_forward.5} parent=0 // loop_exit
    _

// kernel: mylstm1_forward.4
$region0: #{mylstm1_forward.4}
  #allocation0 [shape = 'u32[]', space=smem, size = 0x4, offset = 0x4, fixed_abs, tag = 'smem constant byte address 0x4 - core index']
  #allocation1 [shape = 'u32[144,128]{1,0:T(1,128)}', space=vmem, size = 0x12000, scoped, tag = 'internal scratch']
  #allocation2 [shape = 'f32[8,128]{1,0:T(8,128)}', space=vmem, size = 0x1000, scoped, tag = 'scratch operand']
  #allocation3 [shape = 'f32[8,128]{1,0:T(8,128)}', space=vmem, size = 0x1000, scoped, tag = 'scratch operand']
  %s0 = inlined_call_operand.vmem [shape: f32[12,8,512], index: 0, kind: input, shape index: {}]
  %s1 = inlined_call_operand.vmem [shape: f32[12,8,1], index: 1, kind: input, shape index: {}]
  %s2 = inlined_call_operand.vmem [shape: f32[128,512], index: 2, kind: input, shape index: {}]
  %s3 = inlined_call_operand.vmem [shape: f32[12,8,128], index: 3, kind: output, shape index: {0}]
  %s4 = inlined_call_operand.vmem [shape: f32[8,128], index: 4, kind: output, shape index: {1}]
  %s5 = inlined_call_operand.vmem [shape: f32[8,128], index: 5, kind: output, shape index: {2}]
  %6 = xla_tuple %s3, %s4, %s5
  %s7 = sld [smem:[#allocation0]]
  $region69: #{mylstm1_forward.4} parent=0
    _
  %s9 = ssub.s32 1, %s7
  %s10 = scalar_select 0, %s9, %s7
  loop: start=0, step=1, limit=5
  $region2: #{mylstm1_forward.4} parent=0 // loop_pre_header
    _
  $region3: #{mylstm1_forward.4} parent=0 // loop_header
    %s12 = sphi 0, %s16
    %p13 = scmp.ge.s32.totalorder %s12, 5
    %s19 = sphi 0, %s31
    %s20 = sphi 0, %s27
    %s21 = sphi 0, %s19
    %s22 = sphi 0, %s20
    %s23 = sphi 0, %s21
    %s24 = sphi 0, %s22
    %s36 = sphi 0, %s38
    %s39 = sphi 0, %s36
    %s40 = sphi 0, %s39
    %s56 = sphi 0, %s40
    %s64 = sphi 0, %s66
    %s67 = sphi 0, %s64
    %s68 = sphi 0, %s67
    %s84 = sphi 0, %s68
    %s88 = sphi 0, %s88
    %s90 = sphi 0, %s88
    %s91 = sphi 0, %s90
    %s105 = sphi 0, %s91
    %s113 = sphi 0, %s115
    %s116 = sphi 0, %s113
    %s117 = sphi 0, %s116
    %s133 = sphi 0, %s117
    %s139 = sphi 0, %s141
    %s142 = sphi 0, %s139
    %s143 = sphi 0, %s142
    %s159 = sphi 0, %s143
    %s165 = sphi 0, %s167
    %s168 = sphi 0, %s165
    %s169 = sphi 0, %s168
    %s185 = sphi 0, %s169
  $region4: #{mylstm1_forward.4} parent=0 // loop_header_branch
    %15 = sbr.rel (%p13) target = $region8
  $region5: #{mylstm1_forward.4} parent=0 // loop_body
    %s17 = ssub.s32 %s12, 1
    %s18 = ssub.s32 %s12, 2
    %s25 = sadd.s32 1, %s20
    %p26 = scmp.ge.s32.totalorder %s25, 3
    %s27 = scalar_select %p26, 0, %s25
    %s28 = sadd.s32 1, %s19
    %s29 = scalar_select %p26, %s28, %s19
    %p30 = scmp.ge.s32.totalorder %s29, 1
    %s31 = scalar_select %p30, 0, %s29
    %s32 = ssub.s32 %s20, %s27
    %s33 = ssub.s32 %s19, %s31
    %s34 = sor.u32 %s32, %s33
    %p35 = scmp.eq.s32.totalorder %s34, 0
    %s37 = sadd.s32 %s36, 1
    %s38 = scalar_select %p35, %s36, %s37
    %p41 = pneg %p35
    %p42 = scmp.eq.s32.totalorder %s12, 2
    %p43 = por %p41, %p42
    %p44 = scmp.ne.s32.totalorder %s36, %s39
    %p45 = scmp.eq.s32.totalorder %s12, 0
    %p46 = por %p44, %p45
    %p47 = scmp.ne.s32.totalorder %s36, %s39
    %p48 = scmp.eq.s32.totalorder %s17, 2
    %p49 = por %p47, %p48
    %p50 = scmp.ne.s32.totalorder %s39, %s40
    %p51 = scmp.eq.s32.totalorder %s17, 0
    %p52 = por %p50, %p51
    %p53 = scmp.ne.s32.totalorder %s39, %s40
    %p54 = scmp.eq.s32.totalorder %s18, 2
    %p55 = por %p53, %p54
    %p57 = scmp.ne.s32.totalorder %s40, %s56
    %p58 = scmp.eq.s32.totalorder %s18, 0
    %p59 = por %p57, %p58
    %s60 = ssub.s32 %s20, %s27
    %s61 = ssub.s32 %s19, %s31
    %s62 = sor.u32 %s60, %s61
    %p63 = scmp.eq.s32.totalorder %s62, 0
    %s65 = sadd.s32 %s64, 1
    %s66 = scalar_select %p63, %s64, %s65
    %p69 = pneg %p63
    %p70 = scmp.eq.s32.totalorder %s12, 2
    %p71 = por %p69, %p70
    %p72 = scmp.ne.s32.totalorder %s64, %s67
    %p73 = scmp.eq.s32.totalorder %s12, 0
    %p74 = por %p72, %p73
    %p75 = scmp.ne.s32.totalorder %s64, %s67
    %p76 = scmp.eq.s32.totalorder %s17, 2
    %p77 = por %p75, %p76
    %p78 = scmp.ne.s32.totalorder %s67, %s68
    %p79 = scmp.eq.s32.totalorder %s17, 0
    %p80 = por %p78, %p79
    %p81 = scmp.ne.s32.totalorder %s67, %s68
    %p82 = scmp.eq.s32.totalorder %s18, 2
    %p83 = por %p81, %p82
    %p85 = scmp.ne.s32.totalorder %s68, %s84
    %p86 = scmp.eq.s32.totalorder %s18, 0
    %p87 = por %p85, %p86
    %s89 = sadd.s32 %s88, 1
    %p92 = scmp.eq.s32.totalorder %s12, 2
    %p93 = scmp.ne.s32.totalorder %s88, %s90
    %p94 = scmp.eq.s32.totalorder %s12, 0
    %p95 = por %p93, %p94
    %p96 = scmp.ne.s32.totalorder %s88, %s90
    %p97 = scmp.eq.s32.totalorder %s17, 2
    %p98 = por %p96, %p97
    %p99 = scmp.ne.s32.totalorder %s90, %s91
    %p100 = scmp.eq.s32.totalorder %s17, 0
    %p101 = por %p99, %p100
    %p102 = scmp.ne.s32.totalorder %s90, %s91
    %p103 = scmp.eq.s32.totalorder %s18, 2
    %p104 = por %p102, %p103
    %p106 = scmp.ne.s32.totalorder %s91, %s105
    %p107 = scmp.eq.s32.totalorder %s18, 0
    %p108 = por %p106, %p107
    %s109 = ssub.s32 %s20, %s27
    %s110 = ssub.s32 %s19, %s31
    %s111 = sor.u32 %s109, %s110
    %p112 = scmp.eq.s32.totalorder %s111, 0
    %s114 = sadd.s32 %s113, 1
    %s115 = scalar_select %p112, %s113, %s114
    %p118 = pneg %p112
    %p119 = scmp.eq.s32.totalorder %s12, 2
    %p120 = por %p118, %p119
    %p121 = scmp.ne.s32.totalorder %s113, %s116
    %p122 = scmp.eq.s32.totalorder %s12, 0
    %p123 = por %p121, %p122
    %p124 = scmp.ne.s32.totalorder %s113, %s116
    %p125 = scmp.eq.s32.totalorder %s17, 2
    %p126 = por %p124, %p125
    %p127 = scmp.ne.s32.totalorder %s116, %s117
    %p128 = scmp.eq.s32.totalorder %s17, 0
    %p129 = por %p127, %p128
    %p130 = scmp.ne.s32.totalorder %s116, %s117
    %p131 = scmp.eq.s32.totalorder %s18, 2
    %p132 = por %p130, %p131
    %p134 = scmp.ne.s32.totalorder %s117, %s133
    %p135 = scmp.eq.s32.totalorder %s18, 0
    %p136 = por %p134, %p135
    %s137 = ssub.s32 %s19, %s31
    %p138 = scmp.eq.s32.totalorder %s137, 0
    %s140 = sadd.s32 %s139, 1
    %s141 = scalar_select %p138, %s139, %s140
    %p144 = pneg %p138
    %p145 = scmp.eq.s32.totalorder %s12, 2
    %p146 = por %p144, %p145
    %p147 = scmp.ne.s32.totalorder %s139, %s142
    %p148 = scmp.eq.s32.totalorder %s12, 0
    %p149 = por %p147, %p148
    %p150 = scmp.ne.s32.totalorder %s139, %s142
    %p151 = scmp.eq.s32.totalorder %s17, 2
    %p152 = por %p150, %p151
    %p153 = scmp.ne.s32.totalorder %s142, %s143
    %p154 = scmp.eq.s32.totalorder %s17, 0
    %p155 = por %p153, %p154
    %p156 = scmp.ne.s32.totalorder %s142, %s143
    %p157 = scmp.eq.s32.totalorder %s18, 2
    %p158 = por %p156, %p157
    %p160 = scmp.ne.s32.totalorder %s143, %s159
    %p161 = scmp.eq.s32.totalorder %s18, 0
    %p162 = por %p160, %p161
    %s163 = ssub.s32 %s19, %s31
    %p164 = scmp.eq.s32.totalorder %s163, 0
    %s166 = sadd.s32 %s165, 1
    %s167 = scalar_select %p164, %s165, %s166
    %p170 = pneg %p164
    %p171 = scmp.eq.s32.totalorder %s12, 2
    %p172 = por %p170, %p171
    %p173 = scmp.ne.s32.totalorder %s165, %s168
    %p174 = scmp.eq.s32.totalorder %s12, 0
    %p175 = por %p173, %p174
    %p176 = scmp.ne.s32.totalorder %s165, %s168
    %p177 = scmp.eq.s32.totalorder %s17, 2
    %p178 = por %p176, %p177
    %p179 = scmp.ne.s32.totalorder %s168, %s169
    %p180 = scmp.eq.s32.totalorder %s17, 0
    %p181 = por %p179, %p180
    %p182 = scmp.ne.s32.totalorder %s168, %s169
    %p183 = scmp.eq.s32.totalorder %s18, 2
    %p184 = por %p182, %p183
    %p186 = scmp.ne.s32.totalorder %s169, %s185
    %p187 = scmp.eq.s32.totalorder %s18, 0
    %p188 = por %p186, %p187
    %p189 = scmp.le.s32.totalorder 1, %s12
    %p190 = scmp.lt.s32.totalorder %s12, 4
    %p191 = pnand %p189, %p190
    %p192 = pneg %p191
    // Predicated region
    $region9: #{mylstm1_forward.4} parent=5 // pred_check
      _
    $region10: #{mylstm1_forward.4} parent=5 // pred_check_branch
      %194 = sbr.rel (%p191) target = $region12
    $region11: #{mylstm1_forward.4} parent=5 // pred_region
      %s195 = ssub.s32 %s12, 1
      // Predicated region
      $region13: #{mylstm1_forward.4} parent=11 // pred_check
        %p196 = pneg %p101
      $region14: #{mylstm1_forward.4} parent=11 // pred_check_branch
        %198 = sbr.rel (%p196) target = $region16
      $region15: #{mylstm1_forward.4} parent=11 // pred_region
        _
      $region16: #{mylstm1_forward.4} parent=11 // pred_fallthru
        _
    $region12: #{mylstm1_forward.4} parent=5 // pred_fallthru
      _
    %p199 = scmp.lt.s32.totalorder %s12, 3
    // Predicated region
    $region17: #{mylstm1_forward.4} parent=5 // pred_check
      %p200 = pneg %p199
    $region18: #{mylstm1_forward.4} parent=5 // pred_check_branch
      %202 = sbr.rel (%p200) target = $region20
    $region19: #{mylstm1_forward.4} parent=5 // pred_region
      // Predicated region
      $region21: #{mylstm1_forward.4} parent=19 // pred_check
        %p203 = pneg %p46
      $region22: #{mylstm1_forward.4} parent=19 // pred_check_branch
        %205 = sbr.rel (%p203) target = $region24
      $region23: #{mylstm1_forward.4} parent=19 // pred_region
        %s206 = smul.u32 4, %s20
        %p207 = scmp.lt.s32.totalorder %s206, 11
        %s208 = scalar_select %p207, %s206, 11
        %p209 = scmp.lt.s32.totalorder %s19, 0
        %s210 = scalar_select %p209, %s19, 0
        %s211 = smul.addr %s210, 4
        %s212 = smul.addr %s208, 4
        %s213 = sadd.s32 %s211, %s212
        %s214 = smul.addr %s213, 8
        %s215 = scalar_lea.vmem %s0, %s214
        %s216 = smul.u32 4, %s20
      $region24: #{mylstm1_forward.4} parent=19 // pred_fallthru
        _
      // Predicated region
      $region25: #{mylstm1_forward.4} parent=19 // pred_check
        %p217 = pneg %p74
      $region26: #{mylstm1_forward.4} parent=19 // pred_check_branch
        %219 = sbr.rel (%p217) target = $region28
      $region27: #{mylstm1_forward.4} parent=19 // pred_region
        %s220 = smul.u32 4, %s20
        %p221 = scmp.lt.s32.totalorder %s220, 11
        %s222 = scalar_select %p221, %s220, 11
        %p223 = scmp.lt.s32.totalorder %s19, 0
        %s224 = scalar_select %p223, %s19, 0
        %s225 = sadd.s32 %s224, %s222
        %s226 = smul.addr %s225, 8
        %s227 = scalar_lea.vmem %s1, %s226
        %s228 = smul.u32 4, %s20
      $region28: #{mylstm1_forward.4} parent=19 // pred_fallthru
        _
    $region20: #{mylstm1_forward.4} parent=5 // pred_fallthru
      _
    %p229 = scmp.le.s32.totalorder 1, %s12
    %p230 = scmp.lt.s32.totalorder %s12, 4
    %p231 = pnand %p229, %p230
    %p232 = pneg %p231
    // Predicated region
    $region29: #{mylstm1_forward.4} parent=5 // pred_check
      _
    $region30: #{mylstm1_forward.4} parent=5 // pred_check_branch
      %234 = sbr.rel (%p231) target = $region32
    $region31: #{mylstm1_forward.4} parent=5 // pred_region
      %s235 = ssub.s32 %s12, 1
      %s236 = smul.u32 4, %s22
      %p237 = scmp.lt.s32.totalorder %s236, 11
      %s238 = scalar_select %p237, %s236, 11
      %p239 = scmp.lt.s32.totalorder %s21, 0
      %s240 = scalar_select %p239, %s21, 0
      %s241 = smul.addr %s240, 4
      %s242 = smul.addr %s238, 4
      %s243 = sadd.s32 %s241, %s242
      %s244 = smul.addr %s243, 8
      %s245 = scalar_lea.vmem %s0, %s244
      %p246 = pneg %p52
      %p247 = pneg %p49
      %s248 = smul.u32 4, %s22
      %p249 = scmp.lt.s32.totalorder %s248, 11
      %s250 = scalar_select %p249, %s248, 11
      %p251 = scmp.lt.s32.totalorder %s21, 0
      %s252 = scalar_select %p251, %s21, 0
      %s253 = sadd.s32 %s252, %s250
      %s254 = smul.addr %s253, 8
      %s255 = scalar_lea.vmem %s1, %s254
      %p256 = pneg %p80
      %p257 = pneg %p77
      %p258 = pneg %p101
      %p259 = pneg %p98
      %p260 = pneg %p129
      %p261 = pneg %p126
      %s262 = smul.u32 4, %s22
      %p263 = scmp.lt.s32.totalorder %s262, 11
      %s264 = scalar_select %p263, %s262, 11
      %p265 = scmp.lt.s32.totalorder %s21, 0
      %s266 = scalar_select %p265, %s21, 0
      %s267 = sadd.s32 %s266, %s264
      %s268 = smul.addr %s267, 8
      %s269 = scalar_lea.vmem %s3, %s268
      %p270 = pneg %p155
      %p271 = pneg %p152
      %p272 = scmp.lt.s32.totalorder %s21, 0
      %s273 = scalar_select %p272, %s21, 0
      %s274 = smul.addr %s273, 8
      %s275 = scalar_lea.vmem %s4, %s274
      %p276 = pneg %p181
      %p277 = pneg %p178
      %p278 = scmp.lt.s32.totalorder %s21, 0
      %s279 = scalar_select %p278, %s21, 0
      %s280 = smul.addr %s279, 8
      %s281 = scalar_lea.vmem %s5, %s280
      %s282 = smul.u32 4, %s22
      %p283 = scmp.lt.s32.totalorder %s282, 11
      %s284 = scalar_select %p283, %s282, 11
      %p285 = scmp.lt.s32.totalorder %s21, 0
      %s286 = scalar_select %p285, %s21, 0
      %s287 = smul.addr %s286, 4
      %s288 = smul.addr %s284, 4
      %s289 = sadd.s32 %s287, %s288
      %s290 = smul.addr %s289, 8
      %s291 = scalar_lea.vmem %s0, %s290
      %s292 = smul.u32 4, %s22
      %s293 = smul.u32 4, %s22
      %p294 = scmp.lt.s32.totalorder %s293, 11
      %s295 = scalar_select %p294, %s293, 11
      %p296 = scmp.lt.s32.totalorder %s21, 0
      %s297 = scalar_select %p296, %s21, 0
      %s298 = sadd.s32 %s297, %s295
      %s299 = smul.addr %s298, 8
      %s300 = scalar_lea.vmem %s1, %s299
      %s301 = smul.u32 4, %s22
      %s302 = smul.u32 4, %s22
      %p303 = scmp.lt.s32.totalorder %s302, 11
      %s304 = scalar_select %p303, %s302, 11
      %p305 = scmp.lt.s32.totalorder %s21, 0
      %s306 = scalar_select %p305, %s21, 0
      %s307 = sadd.s32 %s306, %s304
      %s308 = smul.addr %s307, 8
      %s309 = scalar_lea.vmem %s3, %s308
      %s310 = smul.u32 4, %s22
      %p311 = scmp.lt.s32.totalorder %s21, 0
      %s312 = scalar_select %p311, %s21, 0
      %s313 = smul.addr %s312, 8
      %s314 = scalar_lea.vmem %s4, %s313
      %p315 = scmp.lt.s32.totalorder %s21, 0
      %s316 = scalar_select %p315, %s21, 0
      %s317 = smul.addr %s316, 8
      %s318 = scalar_lea.vmem %s5, %s317
      %p319 = scmp.eq.s32.totalorder %s22, 0
      // Predicated region
      $region33: #{mylstm1_forward.4} parent=31 // pred_check
        %p320 = pneg %p319
      $region34: #{mylstm1_forward.4} parent=31 // pred_check_branch
        %322 = sbr.rel (%p320) target = $region36
      $region35: #{mylstm1_forward.4} parent=31 // pred_region
        %323 = vst [vmem:[#allocation2] sm:$0xff] 0.0
        %324 = vst [vmem:[#allocation3] sm:$0xff] 0.0
      $region36: #{mylstm1_forward.4} parent=31 // pred_fallthru
        _
      %v325 = vld [vmem:[#allocation2] sm:$0xff]
      %v326 = vld [vmem:[#allocation3] sm:$0xff]
      %v327 = vld [vmem:[%s2] sm:$0xff]
      %v328 = vld [vmem:[%s2 + $0x8] sm:$0xff]
      %v329 = vld [vmem:[%s2 + $0x10] sm:$0xff]
      %v330 = vld [vmem:[%s2 + $0x18] sm:$0xff]
      %v331 = vld [vmem:[%s2 + $0x20] sm:$0xff]
      %v332 = vld [vmem:[%s2 + $0x28] sm:$0xff]
      %v333 = vld [vmem:[%s2 + $0x30] sm:$0xff]
      %v334 = vld [vmem:[%s2 + $0x38] sm:$0xff]
      %v335 = vld [vmem:[%s2 + $0x40] sm:$0xff]
      %v336 = vld [vmem:[%s2 + $0x48] sm:$0xff]
      %v337 = vld [vmem:[%s2 + $0x50] sm:$0xff]
      %v338 = vld [vmem:[%s2 + $0x58] sm:$0xff]
      %v339 = vld [vmem:[%s2 + $0x60] sm:$0xff]
      %v340 = vld [vmem:[%s2 + $0x68] sm:$0xff]
      %v341 = vld [vmem:[%s2 + $0x70] sm:$0xff]
      %v342 = vld [vmem:[%s2 + $0x78] sm:$0xff]
      %v343 = vld [vmem:[%s2 + $0x80] sm:$0xff]
      %v344 = vld [vmem:[%s2 + $0x88] sm:$0xff]
      %v345 = vld [vmem:[%s2 + $0x90] sm:$0xff]
      %v346 = vld [vmem:[%s2 + $0x98] sm:$0xff]
      %v347 = vld [vmem:[%s2 + $0xa0] sm:$0xff]
      %v348 = vld [vmem:[%s2 + $0xa8] sm:$0xff]
      %v349 = vld [vmem:[%s2 + $0xb0] sm:$0xff]
      %v350 = vld [vmem:[%s2 + $0xb8] sm:$0xff]
      %v351 = vld [vmem:[%s2 + $0xc0] sm:$0xff]
      %v352 = vld [vmem:[%s2 + $0xc8] sm:$0xff]
      %v353 = vld [vmem:[%s2 + $0xd0] sm:$0xff]
      %v354 = vld [vmem:[%s2 + $0xd8] sm:$0xff]
      %v355 = vld [vmem:[%s2 + $0xe0] sm:$0xff]
      %v356 = vld [vmem:[%s2 + $0xe8] sm:$0xff]
      %v357 = vld [vmem:[%s2 + $0xf0] sm:$0xff]
      %v358 = vld [vmem:[%s2 + $0xf8] sm:$0xff]
      %v359 = vld [vmem:[%s2 + $0x100] sm:$0xff]
      %v360 = vld [vmem:[%s2 + $0x108] sm:$0xff]
      %v361 = vld [vmem:[%s2 + $0x110] sm:$0xff]
      %v362 = vld [vmem:[%s2 + $0x118] sm:$0xff]
      %v363 = vld [vmem:[%s2 + $0x120] sm:$0xff]
      %v364 = vld [vmem:[%s2 + $0x128] sm:$0xff]
      %v365 = vld [vmem:[%s2 + $0x130] sm:$0xff]
      %v366 = vld [vmem:[%s2 + $0x138] sm:$0xff]
      %v367 = vld [vmem:[%s2 + $0x140] sm:$0xff]
      %v368 = vld [vmem:[%s2 + $0x148] sm:$0xff]
      %v369 = vld [vmem:[%s2 + $0x150] sm:$0xff]
      %v370 = vld [vmem:[%s2 + $0x158] sm:$0xff]
      %v371 = vld [vmem:[%s2 + $0x160] sm:$0xff]
      %v372 = vld [vmem:[%s2 + $0x168] sm:$0xff]
      %v373 = vld [vmem:[%s2 + $0x170] sm:$0xff]
      %v374 = vld [vmem:[%s2 + $0x178] sm:$0xff]
      %v375 = vld [vmem:[%s2 + $0x180] sm:$0xff]
      %v376 = vld [vmem:[%s2 + $0x188] sm:$0xff]
      %v377 = vld [vmem:[%s2 + $0x190] sm:$0xff]
      %v378 = vld [vmem:[%s2 + $0x198] sm:$0xff]
      %v379 = vld [vmem:[%s2 + $0x1a0] sm:$0xff]
      %v380 = vld [vmem:[%s2 + $0x1a8] sm:$0xff]
      %v381 = vld [vmem:[%s2 + $0x1b0] sm:$0xff]
      %v382 = vld [vmem:[%s2 + $0x1b8] sm:$0xff]
      %v383 = vld [vmem:[%s2 + $0x1c0] sm:$0xff]
      %v384 = vld [vmem:[%s2 + $0x1c8] sm:$0xff]
      %v385 = vld [vmem:[%s2 + $0x1d0] sm:$0xff]
      %v386 = vld [vmem:[%s2 + $0x1d8] sm:$0xff]
      %v387 = vld [vmem:[%s2 + $0x1e0] sm:$0xff]
      %v388 = vld [vmem:[%s2 + $0x1e8] sm:$0xff]
      %v389 = vld [vmem:[%s2 + $0x1f0] sm:$0xff]
      %v390 = vld [vmem:[%s2 + $0x1f8] sm:$0xff]
      %v391 = vld [vmem:[%s291] sm:$0xff]
      %v392 = vld [vmem:[%s291 + $0x8] sm:$0xff]
      %v393 = vld [vmem:[%s291 + $0x10] sm:$0xff]
      %v394 = vld [vmem:[%s291 + $0x18] sm:$0xff]
      %395 = vmatprep.subr.mxu0 %v388
      %396 = vmatpush1.msra.mxu0 %v387
      %397 = vmatprep.subr.mxu0 %v384
      %398 = vmatpush1.msra.mxu0 %v383
      %399 = vmatprep.subr.mxu0 %v380
      %400 = vmatpush1.msra.mxu0 %v379
      %401 = vmatprep.subr.mxu0 %v376
      %402 = vmatpush1.msra.mxu0 %v375
      %403 = vmatprep.subr.mxu0 %v372
      %404 = vmatpush1.msra.mxu0 %v371
      %405 = vmatprep.subr.mxu0 %v368
      %406 = vmatpush1.msra.mxu0 %v367
      %407 = vmatprep.subr.mxu0 %v364
      %408 = vmatpush1.msra.mxu0 %v363
      %409 = vmatprep.subr.mxu0 %v360
      %410 = vmatpush1.msra.mxu0 %v359
      %411 = vmatprep.subr.mxu0 %v356
      %412 = vmatpush1.msra.mxu0 %v355
      %413 = vmatprep.subr.mxu0 %v352
      %414 = vmatpush1.msra.mxu0 %v351
      %415 = vmatprep.subr.mxu0 %v348
      %416 = vmatpush1.msra.mxu0 %v347
      %417 = vmatprep.subr.mxu0 %v344
      %418 = vmatpush1.msra.mxu0 %v343
      %419 = vmatprep.subr.mxu0 %v340
      %420 = vmatpush1.msra.mxu0 %v339
      %421 = vmatprep.subr.mxu0 %v336
      %422 = vmatpush1.msra.mxu0 %v335
      %423 = vmatprep.subr.mxu0 %v332
      %424 = vmatpush1.msra.mxu0 %v331
      %425 = vmatprep.subr.mxu0 %v328
      %426 = vmatpush1.msra.mxu0 %v327
      %427 = vmatprep.subr.mxu0 0.0
      %428 = vmatpush2.msra.mxu0 0.0
      %429 = vmatprep.subr.mxu0 0.0
      %430 = vmatpush2.msra.mxu0 0.0
      %431 = vmatprep.subr.mxu0 0.0
      %432 = vmatpush2.msra.mxu0 0.0
      %433 = vmatprep.subr.mxu0 0.0
      %434 = vmatpush2.msra.mxu0 0.0
      %435 = vmatprep.subr.mxu0 0.0
      %436 = vmatpush2.msra.mxu0 0.0
      %437 = vmatprep.subr.mxu0 0.0
      %438 = vmatpush2.msra.mxu0 0.0
      %439 = vmatprep.subr.mxu0 0.0
      %440 = vmatpush2.msra.mxu0 0.0
      %441 = vmatprep.subr.mxu0 0.0
      %442 = vmatpush2.msra.mxu0 0.0
      %443 = vmatprep.subr.mxu0 0.0
      %444 = vmatpush2.msra.mxu0 0.0
      %445 = vmatprep.subr.mxu0 0.0
      %446 = vmatpush2.msra.mxu0 0.0
      %447 = vmatprep.subr.mxu0 0.0
      %448 = vmatpush2.msra.mxu0 0.0
      %449 = vmatprep.subr.mxu0 0.0
      %450 = vmatpush2.msra.mxu0 0.0
      %451 = vmatprep.subr.mxu0 0.0
      %452 = vmatpush2.msra.mxu0 0.0
      %453 = vmatprep.subr.mxu0 0.0
      %454 = vmatpush2.msra.mxu0 0.0
      %455 = vmatprep.subr.mxu0 0.0
      %456 = vmatpush2.msra.mxu0 0.0
      %457 = vmatprep.subr.mxu0 0.0
      %458 = vmatpush2.msra.mxu0 0.0
      %459 = vmatprep.mubr.f32.mxu0 0.0
      %460 = vmatmul.mubr.f32.gmra.mxu0 %v325
      %v461 = vpop.f32.mrf.mxu0
      %v462 = vadd.f32 0.0, %v461
      %v463 = vpop.f32.mrf.mxu0
      %v464 = vadd.f32 0.0, %v463
      %465 = vdwg.mxu0
      %466 = vmatprep.subr.mxu0 %v390
      %467 = vmatpush1.msra.mxu0 %v389
      %468 = vmatprep.subr.mxu0 %v386
      %469 = vmatpush1.msra.mxu0 %v385
      %470 = vmatprep.subr.mxu0 %v382
      %471 = vmatpush1.msra.mxu0 %v381
      %472 = vmatprep.subr.mxu0 %v378
      %473 = vmatpush1.msra.mxu0 %v377
      %474 = vmatprep.subr.mxu0 %v374
      %475 = vmatpush1.msra.mxu0 %v373
      %476 = vmatprep.subr.mxu0 %v370
      %477 = vmatpush1.msra.mxu0 %v369
      %478 = vmatprep.subr.mxu0 %v366
      %479 = vmatpush1.msra.mxu0 %v365
      %480 = vmatprep.subr.mxu0 %v362
      %481 = vmatpush1.msra.mxu0 %v361
      %482 = vmatprep.subr.mxu0 %v358
      %483 = vmatpush1.msra.mxu0 %v357
      %484 = vmatprep.subr.mxu0 %v354
      %485 = vmatpush1.msra.mxu0 %v353
      %486 = vmatprep.subr.mxu0 %v350
      %487 = vmatpush1.msra.mxu0 %v349
      %488 = vmatprep.subr.mxu0 %v346
      %489 = vmatpush1.msra.mxu0 %v345
      %490 = vmatprep.subr.mxu0 %v342
      %491 = vmatpush1.msra.mxu0 %v341
      %492 = vmatprep.subr.mxu0 %v338
      %493 = vmatpush1.msra.mxu0 %v337
      %494 = vmatprep.subr.mxu0 %v334
      %495 = vmatpush1.msra.mxu0 %v333
      %496 = vmatprep.subr.mxu0 %v330
      %497 = vmatpush1.msra.mxu0 %v329
      %498 = vmatprep.subr.mxu0 0.0
      %499 = vmatpush2.msra.mxu0 0.0
      %500 = vmatprep.subr.mxu0 0.0
      %501 = vmatpush2.msra.mxu0 0.0
      %502 = vmatprep.subr.mxu0 0.0
      %503 = vmatpush2.msra.mxu0 0.0
      %504 = vmatprep.subr.mxu0 0.0
      %505 = vmatpush2.msra.mxu0 0.0
      %506 = vmatprep.subr.mxu0 0.0
      %507 = vmatpush2.msra.mxu0 0.0
      %508 = vmatprep.subr.mxu0 0.0
      %509 = vmatpush2.msra.mxu0 0.0
      %510 = vmatprep.subr.mxu0 0.0
      %511 = vmatpush2.msra.mxu0 0.0
      %512 = vmatprep.subr.mxu0 0.0
      %513 = vmatpush2.msra.mxu0 0.0
      %514 = vmatprep.subr.mxu0 0.0
      %515 = vmatpush2.msra.mxu0 0.0
      %516 = vmatprep.subr.mxu0 0.0
      %517 = vmatpush2.msra.mxu0 0.0
      %518 = vmatprep.subr.mxu0 0.0
      %519 = vmatpush2.msra.mxu0 0.0
      %520 = vmatprep.subr.mxu0 0.0
      %521 = vmatpush2.msra.mxu0 0.0
      %522 = vmatprep.subr.mxu0 0.0
      %523 = vmatpush2.msra.mxu0 0.0
      %524 = vmatprep.subr.mxu0 0.0
      %525 = vmatpush2.msra.mxu0 0.0
      %526 = vmatprep.subr.mxu0 0.0
      %527 = vmatpush2.msra.mxu0 0.0
      %528 = vmatprep.subr.mxu0 0.0
      %529 = vmatpush2.msra.mxu0 0.0
      %530 = vmatprep.mubr.f32.mxu0 0.0
      %531 = vmatmul.mubr.f32.gmra.mxu0 %v325
      %v532 = vpop.f32.mrf.mxu0
      %v533 = vadd.f32 0.0, %v532
      %v534 = vpop.f32.mrf.mxu0
      %v535 = vadd.f32 0.0, %v534
      %536 = vdwg.mxu0
      %v537 = vadd.f32 %v391, %v462
      %v538 = vadd.f32 %v392, %v464
      %v539 = vadd.f32 %v393, %v533
      %v540 = vadd.f32 %v394, %v535
      %v541 = vxor.u32 %v537, 2147483648
      %v542 = vmul.f32 %v541, 1.442695
      %v543 = vpow.pop %v542
      %v544 = vadd.f32 %v543, 1.0
      %v545 = vrcp.pop %v544
      %v546 = vmul.f32 1.0, %v545
      %v547 = vxor.u32 %v538, 2147483648
      %v548 = vmul.f32 %v547, 1.442695
      %v549 = vpow.pop %v548
      %v550 = vadd.f32 %v549, 1.0
      %v551 = vrcp.pop %v550
      %v552 = vmul.f32 1.0, %v551
      %v553 = vtanh.pop %v539
      %v554 = vxor.u32 %v540, 2147483648
      %v555 = vmul.f32 %v554, 1.442695
      %v556 = vpow.pop %v555
      %v557 = vadd.f32 %v556, 1.0
      %v558 = vrcp.pop %v557
      %v559 = vmul.f32 1.0, %v558
      %v560 = vmul.f32 %v552, %v326
      %v561 = vmul.f32 %v546, %v553
      %v562 = vadd.f32 %v560, %v561
      %v563 = vtanh.pop %v562
      %v564 = vmul.f32 %v559, %v563
      %v565 = vld [vmem:[%s300] sm:$0xff]
      %567 = vset.pattern.permute.xlu0 0
      %568 = vperm.xlu0 %567, %v565
      %v569 = vpop.permute.xlu0 %568
      %v571 = vmul.f32 %v564, %v569
      %v572 = vmul.f32 %v562, %v569
      %573 = vst [vmem:[%s309] sm:$0xff] %v571
      %s574 = scalar_lea.vmem %s291, 32
      %v575 = vld [vmem:[%s574] sm:$0xff]
      %v576 = vld [vmem:[%s574 + $0x8] sm:$0xff]
      %v577 = vld [vmem:[%s574 + $0x10] sm:$0xff]
      %v578 = vld [vmem:[%s574 + $0x18] sm:$0xff]
      %579 = vmatprep.subr.mxu0 %v388
      %580 = vmatpush1.msra.mxu0 %v387
      %581 = vmatprep.subr.mxu0 %v384
      %582 = vmatpush1.msra.mxu0 %v383
      %583 = vmatprep.subr.mxu0 %v380
      %584 = vmatpush1.msra.mxu0 %v379
      %585 = vmatprep.subr.mxu0 %v376
      %586 = vmatpush1.msra.mxu0 %v375
      %587 = vmatprep.subr.mxu0 %v372
      %588 = vmatpush1.msra.mxu0 %v371
      %589 = vmatprep.subr.mxu0 %v368
      %590 = vmatpush1.msra.mxu0 %v367
      %591 = vmatprep.subr.mxu0 %v364
      %592 = vmatpush1.msra.mxu0 %v363
      %593 = vmatprep.subr.mxu0 %v360
      %594 = vmatpush1.msra.mxu0 %v359
      %595 = vmatprep.subr.mxu0 %v356
      %596 = vmatpush1.msra.mxu0 %v355
      %597 = vmatprep.subr.mxu0 %v352
      %598 = vmatpush1.msra.mxu0 %v351
      %599 = vmatprep.subr.mxu0 %v348
      %600 = vmatpush1.msra.mxu0 %v347
      %601 = vmatprep.subr.mxu0 %v344
      %602 = vmatpush1.msra.mxu0 %v343
      %603 = vmatprep.subr.mxu0 %v340
      %604 = vmatpush1.msra.mxu0 %v339
      %605 = vmatprep.subr.mxu0 %v336
      %606 = vmatpush1.msra.mxu0 %v335
      %607 = vmatprep.subr.mxu0 %v332
      %608 = vmatpush1.msra.mxu0 %v331
      %609 = vmatprep.subr.mxu0 %v328
      %610 = vmatpush1.msra.mxu0 %v327
      %611 = vmatprep.subr.mxu0 0.0
      %612 = vmatpush2.msra.mxu0 0.0
      %613 = vmatprep.subr.mxu0 0.0
      %614 = vmatpush2.msra.mxu0 0.0
      %615 = vmatprep.subr.mxu0 0.0
      %616 = vmatpush2.msra.mxu0 0.0
      %617 = vmatprep.subr.mxu0 0.0
      %618 = vmatpush2.msra.mxu0 0.0
      %619 = vmatprep.subr.mxu0 0.0
      %620 = vmatpush2.msra.mxu0 0.0
      %621 = vmatprep.subr.mxu0 0.0
      %622 = vmatpush2.msra.mxu0 0.0
      %623 = vmatprep.subr.mxu0 0.0
      %624 = vmatpush2.msra.mxu0 0.0
      %625 = vmatprep.subr.mxu0 0.0
      %626 = vmatpush2.msra.mxu0 0.0
      %627 = vmatprep.subr.mxu0 0.0
      %628 = vmatpush2.msra.mxu0 0.0
      %629 = vmatprep.subr.mxu0 0.0
      %630 = vmatpush2.msra.mxu0 0.0
      %631 = vmatprep.subr.mxu0 0.0
      %632 = vmatpush2.msra.mxu0 0.0
      %633 = vmatprep.subr.mxu0 0.0
      %634 = vmatpush2.msra.mxu0 0.0
      %635 = vmatprep.subr.mxu0 0.0
      %636 = vmatpush2.msra.mxu0 0.0
      %637 = vmatprep.subr.mxu0 0.0
      %638 = vmatpush2.msra.mxu0 0.0
      %639 = vmatprep.subr.mxu0 0.0
      %640 = vmatpush2.msra.mxu0 0.0
      %641 = vmatprep.subr.mxu0 0.0
      %642 = vmatpush2.msra.mxu0 0.0
      %643 = vmatprep.mubr.f32.mxu0 0.0
      %644 = vmatmul.mubr.f32.gmra.mxu0 %v571
      %v645 = vpop.f32.mrf.mxu0
      %v646 = vadd.f32 0.0, %v645
      %v647 = vpop.f32.mrf.mxu0
      %v648 = vadd.f32 0.0, %v647
      %649 = vdwg.mxu0
      %650 = vmatprep.subr.mxu0 %v390
      %651 = vmatpush1.msra.mxu0 %v389
      %652 = vmatprep.subr.mxu0 %v386
      %653 = vmatpush1.msra.mxu0 %v385
      %654 = vmatprep.subr.mxu0 %v382
      %655 = vmatpush1.msra.mxu0 %v381
      %656 = vmatprep.subr.mxu0 %v378
      %657 = vmatpush1.msra.mxu0 %v377
      %658 = vmatprep.subr.mxu0 %v374
      %659 = vmatpush1.msra.mxu0 %v373
      %660 = vmatprep.subr.mxu0 %v370
      %661 = vmatpush1.msra.mxu0 %v369
      %662 = vmatprep.subr.mxu0 %v366
      %663 = vmatpush1.msra.mxu0 %v365
      %664 = vmatprep.subr.mxu0 %v362
      %665 = vmatpush1.msra.mxu0 %v361
      %666 = vmatprep.subr.mxu0 %v358
      %667 = vmatpush1.msra.mxu0 %v357
      %668 = vmatprep.subr.mxu0 %v354
      %669 = vmatpush1.msra.mxu0 %v353
      %670 = vmatprep.subr.mxu0 %v350
      %671 = vmatpush1.msra.mxu0 %v349
      %672 = vmatprep.subr.mxu0 %v346
      %673 = vmatpush1.msra.mxu0 %v345
      %674 = vmatprep.subr.mxu0 %v342
      %675 = vmatpush1.msra.mxu0 %v341
      %676 = vmatprep.subr.mxu0 %v338
      %677 = vmatpush1.msra.mxu0 %v337
      %678 = vmatprep.subr.mxu0 %v334
      %679 = vmatpush1.msra.mxu0 %v333
      %680 = vmatprep.subr.mxu0 %v330
      %681 = vmatpush1.msra.mxu0 %v329
      %682 = vmatprep.subr.mxu0 0.0
      %683 = vmatpush2.msra.mxu0 0.0
      %684 = vmatprep.subr.mxu0 0.0
      %685 = vmatpush2.msra.mxu0 0.0
      %686 = vmatprep.subr.mxu0 0.0
      %687 = vmatpush2.msra.mxu0 0.0
      %688 = vmatprep.subr.mxu0 0.0
      %689 = vmatpush2.msra.mxu0 0.0
      %690 = vmatprep.subr.mxu0 0.0
      %691 = vmatpush2.msra.mxu0 0.0
      %692 = vmatprep.subr.mxu0 0.0
      %693 = vmatpush2.msra.mxu0 0.0
      %694 = vmatprep.subr.mxu0 0.0
      %695 = vmatpush2.msra.mxu0 0.0
      %696 = vmatprep.subr.mxu0 0.0
      %697 = vmatpush2.msra.mxu0 0.0
      %698 = vmatprep.subr.mxu0 0.0
      %699 = vmatpush2.msra.mxu0 0.0
      %700 = vmatprep.subr.mxu0 0.0
      %701 = vmatpush2.msra.mxu0 0.0
      %702 = vmatprep.subr.mxu0 0.0
      %703 = vmatpush2.msra.mxu0 0.0
      %704 = vmatprep.subr.mxu0 0.0
      %705 = vmatpush2.msra.mxu0 0.0
      %706 = vmatprep.subr.mxu0 0.0
      %707 = vmatpush2.msra.mxu0 0.0
      %708 = vmatprep.subr.mxu0 0.0
      %709 = vmatpush2.msra.mxu0 0.0
      %710 = vmatprep.subr.mxu0 0.0
      %711 = vmatpush2.msra.mxu0 0.0
      %712 = vmatprep.subr.mxu0 0.0
      %713 = vmatpush2.msra.mxu0 0.0
      %714 = vmatprep.mubr.f32.mxu0 0.0
      %715 = vmatmul.mubr.f32.gmra.mxu0 %v571
      %v716 = vpop.f32.mrf.mxu0
      %v717 = vadd.f32 0.0, %v716
      %v718 = vpop.f32.mrf.mxu0
      %v719 = vadd.f32 0.0, %v718
      %720 = vdwg.mxu0
      %v721 = vadd.f32 %v575, %v646
      %v722 = vadd.f32 %v576, %v648
      %v723 = vadd.f32 %v577, %v717
      %v724 = vadd.f32 %v578, %v719
      %v725 = vxor.u32 %v721, 2147483648
      %v726 = vmul.f32 %v725, 1.442695
      %v727 = vpow.pop %v726
      %v728 = vadd.f32 %v727, 1.0
      %v729 = vrcp.pop %v728
      %v730 = vmul.f32 1.0, %v729
      %v731 = vxor.u32 %v722, 2147483648
      %v732 = vmul.f32 %v731, 1.442695
      %v733 = vpow.pop %v732
      %v734 = vadd.f32 %v733, 1.0
      %v735 = vrcp.pop %v734
      %v736 = vmul.f32 1.0, %v735
      %v737 = vtanh.pop %v723
      %v738 = vxor.u32 %v724, 2147483648
      %v739 = vmul.f32 %v738, 1.442695
      %v740 = vpow.pop %v739
      %v741 = vadd.f32 %v740, 1.0
      %v742 = vrcp.pop %v741
      %v743 = vmul.f32 1.0, %v742
      %v744 = vmul.f32 %v736, %v572
      %v745 = vmul.f32 %v730, %v737
      %v746 = vadd.f32 %v744, %v745
      %v747 = vtanh.pop %v746
      %v748 = vmul.f32 %v743, %v747
      %s749 = scalar_lea.vmem %s300, 8
      %v750 = vld [vmem:[%s749] sm:$0xff]
      %752 = vset.pattern.permute.xlu0 0
      %753 = vperm.xlu0 %752, %v750
      %v754 = vpop.permute.xlu0 %753
      %v756 = vmul.f32 %v748, %v754
      %v757 = vmul.f32 %v746, %v754
      %s758 = scalar_lea.vmem %s309, 8
      %759 = vst [vmem:[%s758] sm:$0xff] %v756
      %p760 = scmp.eq.s32.totalorder %s22, 2
      // Predicated region
      $region37: #{mylstm1_forward.4} parent=31 // pred_check
        %p761 = pneg %p760
      $region38: #{mylstm1_forward.4} parent=31 // pred_check_branch
        %763 = sbr.rel (%p761) target = $region40
      $region39: #{mylstm1_forward.4} parent=31 // pred_region
        %764 = vst [vmem:[%s314] sm:$0xff] %v756
        %765 = vst [vmem:[%s318] sm:$0xff] %v757
      $region40: #{mylstm1_forward.4} parent=31 // pred_fallthru
        _
      %s766 = scalar_lea.vmem %s291, 64
      %v767 = vld [vmem:[%s766] sm:$0xff]
      %v768 = vld [vmem:[%s766 + $0x8] sm:$0xff]
      %v769 = vld [vmem:[%s766 + $0x10] sm:$0xff]
      %v770 = vld [vmem:[%s766 + $0x18] sm:$0xff]
      %771 = vmatprep.subr.mxu0 %v388
      %772 = vmatpush1.msra.mxu0 %v387
      %773 = vmatprep.subr.mxu0 %v384
      %774 = vmatpush1.msra.mxu0 %v383
      %775 = vmatprep.subr.mxu0 %v380
      %776 = vmatpush1.msra.mxu0 %v379
      %777 = vmatprep.subr.mxu0 %v376
      %778 = vmatpush1.msra.mxu0 %v375
      %779 = vmatprep.subr.mxu0 %v372
      %780 = vmatpush1.msra.mxu0 %v371
      %781 = vmatprep.subr.mxu0 %v368
      %782 = vmatpush1.msra.mxu0 %v367
      %783 = vmatprep.subr.mxu0 %v364
      %784 = vmatpush1.msra.mxu0 %v363
      %785 = vmatprep.subr.mxu0 %v360
      %786 = vmatpush1.msra.mxu0 %v359
      %787 = vmatprep.subr.mxu0 %v356
      %788 = vmatpush1.msra.mxu0 %v355
      %789 = vmatprep.subr.mxu0 %v352
      %790 = vmatpush1.msra.mxu0 %v351
      %791 = vmatprep.subr.mxu0 %v348
      %792 = vmatpush1.msra.mxu0 %v347
      %793 = vmatprep.subr.mxu0 %v344
      %794 = vmatpush1.msra.mxu0 %v343
      %795 = vmatprep.subr.mxu0 %v340
      %796 = vmatpush1.msra.mxu0 %v339
      %797 = vmatprep.subr.mxu0 %v336
      %798 = vmatpush1.msra.mxu0 %v335
      %799 = vmatprep.subr.mxu0 %v332
      %800 = vmatpush1.msra.mxu0 %v331
      %801 = vmatprep.subr.mxu0 %v328
      %802 = vmatpush1.msra.mxu0 %v327
      %803 = vmatprep.subr.mxu0 0.0
      %804 = vmatpush2.msra.mxu0 0.0
      %805 = vmatprep.subr.mxu0 0.0
      %806 = vmatpush2.msra.mxu0 0.0
      %807 = vmatprep.subr.mxu0 0.0
      %808 = vmatpush2.msra.mxu0 0.0
      %809 = vmatprep.subr.mxu0 0.0
      %810 = vmatpush2.msra.mxu0 0.0
      %811 = vmatprep.subr.mxu0 0.0
      %812 = vmatpush2.msra.mxu0 0.0
      %813 = vmatprep.subr.mxu0 0.0
      %814 = vmatpush2.msra.mxu0 0.0
      %815 = vmatprep.subr.mxu0 0.0
      %816 = vmatpush2.msra.mxu0 0.0
      %817 = vmatprep.subr.mxu0 0.0
      %818 = vmatpush2.msra.mxu0 0.0
      %819 = vmatprep.subr.mxu0 0.0
      %820 = vmatpush2.msra.mxu0 0.0
      %821 = vmatprep.subr.mxu0 0.0
      %822 = vmatpush2.msra.mxu0 0.0
      %823 = vmatprep.subr.mxu0 0.0
      %824 = vmatpush2.msra.mxu0 0.0
      %825 = vmatprep.subr.mxu0 0.0
      %826 = vmatpush2.msra.mxu0 0.0
      %827 = vmatprep.subr.mxu0 0.0
      %828 = vmatpush2.msra.mxu0 0.0
      %829 = vmatprep.subr.mxu0 0.0
      %830 = vmatpush2.msra.mxu0 0.0
      %831 = vmatprep.subr.mxu0 0.0
      %832 = vmatpush2.msra.mxu0 0.0
      %833 = vmatprep.subr.mxu0 0.0
      %834 = vmatpush2.msra.mxu0 0.0
      %835 = vmatprep.mubr.f32.mxu0 0.0
      %836 = vmatmul.mubr.f32.gmra.mxu0 %v756
      %v837 = vpop.f32.mrf.mxu0
      %v838 = vadd.f32 0.0, %v837
      %v839 = vpop.f32.mrf.mxu0
      %v840 = vadd.f32 0.0, %v839
      %841 = vdwg.mxu0
      %842 = vmatprep.subr.mxu0 %v390
      %843 = vmatpush1.msra.mxu0 %v389
      %844 = vmatprep.subr.mxu0 %v386
      %845 = vmatpush1.msra.mxu0 %v385
      %846 = vmatprep.subr.mxu0 %v382
      %847 = vmatpush1.msra.mxu0 %v381
      %848 = vmatprep.subr.mxu0 %v378
      %849 = vmatpush1.msra.mxu0 %v377
      %850 = vmatprep.subr.mxu0 %v374
      %851 = vmatpush1.msra.mxu0 %v373
      %852 = vmatprep.subr.mxu0 %v370
      %853 = vmatpush1.msra.mxu0 %v369
      %854 = vmatprep.subr.mxu0 %v366
      %855 = vmatpush1.msra.mxu0 %v365
      %856 = vmatprep.subr.mxu0 %v362
      %857 = vmatpush1.msra.mxu0 %v361
      %858 = vmatprep.subr.mxu0 %v358
      %859 = vmatpush1.msra.mxu0 %v357
      %860 = vmatprep.subr.mxu0 %v354
      %861 = vmatpush1.msra.mxu0 %v353
      %862 = vmatprep.subr.mxu0 %v350
      %863 = vmatpush1.msra.mxu0 %v349
      %864 = vmatprep.subr.mxu0 %v346
      %865 = vmatpush1.msra.mxu0 %v345
      %866 = vmatprep.subr.mxu0 %v342
      %867 = vmatpush1.msra.mxu0 %v341
      %868 = vmatprep.subr.mxu0 %v338
      %869 = vmatpush1.msra.mxu0 %v337
      %870 = vmatprep.subr.mxu0 %v334
      %871 = vmatpush1.msra.mxu0 %v333
      %872 = vmatprep.subr.mxu0 %v330
      %873 = vmatpush1.msra.mxu0 %v329
      %874 = vmatprep.subr.mxu0 0.0
      %875 = vmatpush2.msra.mxu0 0.0
      %876 = vmatprep.subr.mxu0 0.0
      %877 = vmatpush2.msra.mxu0 0.0
      %878 = vmatprep.subr.mxu0 0.0
      %879 = vmatpush2.msra.mxu0 0.0
      %880 = vmatprep.subr.mxu0 0.0
      %881 = vmatpush2.msra.mxu0 0.0
      %882 = vmatprep.subr.mxu0 0.0
      %883 = vmatpush2.msra.mxu0 0.0
      %884 = vmatprep.subr.mxu0 0.0
      %885 = vmatpush2.msra.mxu0 0.0
      %886 = vmatprep.subr.mxu0 0.0
      %887 = vmatpush2.msra.mxu0 0.0
      %888 = vmatprep.subr.mxu0 0.0
      %889 = vmatpush2.msra.mxu0 0.0
      %890 = vmatprep.subr.mxu0 0.0
      %891 = vmatpush2.msra.mxu0 0.0
      %892 = vmatprep.subr.mxu0 0.0
      %893 = vmatpush2.msra.mxu0 0.0
      %894 = vmatprep.subr.mxu0 0.0
      %895 = vmatpush2.msra.mxu0 0.0
      %896 = vmatprep.subr.mxu0 0.0
      %897 = vmatpush2.msra.mxu0 0.0
      %898 = vmatprep.subr.mxu0 0.0
      %899 = vmatpush2.msra.mxu0 0.0
      %900 = vmatprep.subr.mxu0 0.0
      %901 = vmatpush2.msra.mxu0 0.0
      %902 = vmatprep.subr.mxu0 0.0
      %903 = vmatpush2.msra.mxu0 0.0
      %904 = vmatprep.subr.mxu0 0.0
      %905 = vmatpush2.msra.mxu0 0.0
      %906 = vmatprep.mubr.f32.mxu0 0.0
      %907 = vmatmul.mubr.f32.gmra.mxu0 %v756
      %v908 = vpop.f32.mrf.mxu0
      %v909 = vadd.f32 0.0, %v908
      %v910 = vpop.f32.mrf.mxu0
      %v911 = vadd.f32 0.0, %v910
      %912 = vdwg.mxu0
      %v913 = vadd.f32 %v767, %v838
      %v914 = vadd.f32 %v768, %v840
      %v915 = vadd.f32 %v769, %v909
      %v916 = vadd.f32 %v770, %v911
      %v917 = vxor.u32 %v913, 2147483648
      %v918 = vmul.f32 %v917, 1.442695
      %v919 = vpow.pop %v918
      %v920 = vadd.f32 %v919, 1.0
      %v921 = vrcp.pop %v920
      %v922 = vmul.f32 1.0, %v921
      %v923 = vxor.u32 %v914, 2147483648
      %v924 = vmul.f32 %v923, 1.442695
      %v925 = vpow.pop %v924
      %v926 = vadd.f32 %v925, 1.0
      %v927 = vrcp.pop %v926
      %v928 = vmul.f32 1.0, %v927
      %v929 = vtanh.pop %v915
      %v930 = vxor.u32 %v916, 2147483648
      %v931 = vmul.f32 %v930, 1.442695
      %v932 = vpow.pop %v931
      %v933 = vadd.f32 %v932, 1.0
      %v934 = vrcp.pop %v933
      %v935 = vmul.f32 1.0, %v934
      %v936 = vmul.f32 %v928, %v757
      %v937 = vmul.f32 %v922, %v929
      %v938 = vadd.f32 %v936, %v937
      %v939 = vtanh.pop %v938
      %v940 = vmul.f32 %v935, %v939
      %s941 = scalar_lea.vmem %s300, 16
      %v942 = vld [vmem:[%s941] sm:$0xff]
      %944 = vset.pattern.permute.xlu0 0
      %945 = vperm.xlu0 %944, %v942
      %v946 = vpop.permute.xlu0 %945
      %v948 = vmul.f32 %v940, %v946
      %v949 = vmul.f32 %v938, %v946
      %s950 = scalar_lea.vmem %s309, 16
      %951 = vst [vmem:[%s950] sm:$0xff] %v948
      %s952 = scalar_lea.vmem %s291, 96
      %v953 = vld [vmem:[%s952] sm:$0xff]
      %v954 = vld [vmem:[%s952 + $0x8] sm:$0xff]
      %v955 = vld [vmem:[%s952 + $0x10] sm:$0xff]
      %v956 = vld [vmem:[%s952 + $0x18] sm:$0xff]
      %957 = vmatprep.subr.mxu0 %v388
      %958 = vmatpush1.msra.mxu0 %v387
      %959 = vmatprep.subr.mxu0 %v384
      %960 = vmatpush1.msra.mxu0 %v383
      %961 = vmatprep.subr.mxu0 %v380
      %962 = vmatpush1.msra.mxu0 %v379
      %963 = vmatprep.subr.mxu0 %v376
      %964 = vmatpush1.msra.mxu0 %v375
      %965 = vmatprep.subr.mxu0 %v372
      %966 = vmatpush1.msra.mxu0 %v371
      %967 = vmatprep.subr.mxu0 %v368
      %968 = vmatpush1.msra.mxu0 %v367
      %969 = vmatprep.subr.mxu0 %v364
      %970 = vmatpush1.msra.mxu0 %v363
      %971 = vmatprep.subr.mxu0 %v360
      %972 = vmatpush1.msra.mxu0 %v359
      %973 = vmatprep.subr.mxu0 %v356
      %974 = vmatpush1.msra.mxu0 %v355
      %975 = vmatprep.subr.mxu0 %v352
      %976 = vmatpush1.msra.mxu0 %v351
      %977 = vmatprep.subr.mxu0 %v348
      %978 = vmatpush1.msra.mxu0 %v347
      %979 = vmatprep.subr.mxu0 %v344
      %980 = vmatpush1.msra.mxu0 %v343
      %981 = vmatprep.subr.mxu0 %v340
      %982 = vmatpush1.msra.mxu0 %v339
      %983 = vmatprep.subr.mxu0 %v336
      %984 = vmatpush1.msra.mxu0 %v335
      %985 = vmatprep.subr.mxu0 %v332
      %986 = vmatpush1.msra.mxu0 %v331
      %987 = vmatprep.subr.mxu0 %v328
      %988 = vmatpush1.msra.mxu0 %v327
      %989 = vmatprep.subr.mxu0 0.0
      %990 = vmatpush2.msra.mxu0 0.0
      %991 = vmatprep.subr.mxu0 0.0
      %992 = vmatpush2.msra.mxu0 0.0
      %993 = vmatprep.subr.mxu0 0.0
      %994 = vmatpush2.msra.mxu0 0.0
      %995 = vmatprep.subr.mxu0 0.0
      %996 = vmatpush2.msra.mxu0 0.0
      %997 = vmatprep.subr.mxu0 0.0
      %998 = vmatpush2.msra.mxu0 0.0
      %999 = vmatprep.subr.mxu0 0.0
      %1000 = vmatpush2.msra.mxu0 0.0
      %1001 = vmatprep.subr.mxu0 0.0
      %1002 = vmatpush2.msra.mxu0 0.0
      %1003 = vmatprep.subr.mxu0 0.0
      %1004 = vmatpush2.msra.mxu0 0.0
      %1005 = vmatprep.subr.mxu0 0.0
      %1006 = vmatpush2.msra.mxu0 0.0
      %1007 = vmatprep.subr.mxu0 0.0
      %1008 = vmatpush2.msra.mxu0 0.0
      %1009 = vmatprep.subr.mxu0 0.0
      %1010 = vmatpush2.msra.mxu0 0.0
      %1011 = vmatprep.subr.mxu0 0.0
      %1012 = vmatpush2.msra.mxu0 0.0
      %1013 = vmatprep.subr.mxu0 0.0
      %1014 = vmatpush2.msra.mxu0 0.0
      %1015 = vmatprep.subr.mxu0 0.0
      %1016 = vmatpush2.msra.mxu0 0.0
      %1017 = vmatprep.subr.mxu0 0.0
      %1018 = vmatpush2.msra.mxu0 0.0
      %1019 = vmatprep.subr.mxu0 0.0
      %1020 = vmatpush2.msra.mxu0 0.0
      %1021 = vmatprep.mubr.f32.mxu0 0.0
      %1022 = vmatmul.mubr.f32.gmra.mxu0 %v948
      %v1023 = vpop.f32.mrf.mxu0
      %v1024 = vadd.f32 0.0, %v1023
      %v1025 = vpop.f32.mrf.mxu0
      %v1026 = vadd.f32 0.0, %v1025
      %1027 = vdwg.mxu0
      %1028 = vmatprep.subr.mxu0 %v390
      %1029 = vmatpush1.msra.mxu0 %v389
      %1030 = vmatprep.subr.mxu0 %v386
      %1031 = vmatpush1.msra.mxu0 %v385
      %1032 = vmatprep.subr.mxu0 %v382
      %1033 = vmatpush1.msra.mxu0 %v381
      %1034 = vmatprep.subr.mxu0 %v378
      %1035 = vmatpush1.msra.mxu0 %v377
      %1036 = vmatprep.subr.mxu0 %v374
      %1037 = vmatpush1.msra.mxu0 %v373
      %1038 = vmatprep.subr.mxu0 %v370
      %1039 = vmatpush1.msra.mxu0 %v369
      %1040 = vmatprep.subr.mxu0 %v366
      %1041 = vmatpush1.msra.mxu0 %v365
      %1042 = vmatprep.subr.mxu0 %v362
      %1043 = vmatpush1.msra.mxu0 %v361
      %1044 = vmatprep.subr.mxu0 %v358
      %1045 = vmatpush1.msra.mxu0 %v357
      %1046 = vmatprep.subr.mxu0 %v354
      %1047 = vmatpush1.msra.mxu0 %v353
      %1048 = vmatprep.subr.mxu0 %v350
      %1049 = vmatpush1.msra.mxu0 %v349
      %1050 = vmatprep.subr.mxu0 %v346
      %1051 = vmatpush1.msra.mxu0 %v345
      %1052 = vmatprep.subr.mxu0 %v342
      %1053 = vmatpush1.msra.mxu0 %v341
      %1054 = vmatprep.subr.mxu0 %v338
      %1055 = vmatpush1.msra.mxu0 %v337
      %1056 = vmatprep.subr.mxu0 %v334
      %1057 = vmatpush1.msra.mxu0 %v333
      %1058 = vmatprep.subr.mxu0 %v330
      %1059 = vmatpush1.msra.mxu0 %v329
      %1060 = vmatprep.subr.mxu0 0.0
      %1061 = vmatpush2.msra.mxu0 0.0
      %1062 = vmatprep.subr.mxu0 0.0
      %1063 = vmatpush2.msra.mxu0 0.0
      %1064 = vmatprep.subr.mxu0 0.0
      %1065 = vmatpush2.msra.mxu0 0.0
      %1066 = vmatprep.subr.mxu0 0.0
      %1067 = vmatpush2.msra.mxu0 0.0
      %1068 = vmatprep.subr.mxu0 0.0
      %1069 = vmatpush2.msra.mxu0 0.0
      %1070 = vmatprep.subr.mxu0 0.0
      %1071 = vmatpush2.msra.mxu0 0.0
      %1072 = vmatprep.subr.mxu0 0.0
      %1073 = vmatpush2.msra.mxu0 0.0
      %1074 = vmatprep.subr.mxu0 0.0
      %1075 = vmatpush2.msra.mxu0 0.0
      %1076 = vmatprep.subr.mxu0 0.0
      %1077 = vmatpush2.msra.mxu0 0.0
      %1078 = vmatprep.subr.mxu0 0.0
      %1079 = vmatpush2.msra.mxu0 0.0
      %1080 = vmatprep.subr.mxu0 0.0
      %1081 = vmatpush2.msra.mxu0 0.0
      %1082 = vmatprep.subr.mxu0 0.0
      %1083 = vmatpush2.msra.mxu0 0.0
      %1084 = vmatprep.subr.mxu0 0.0
      %1085 = vmatpush2.msra.mxu0 0.0
      %1086 = vmatprep.subr.mxu0 0.0
      %1087 = vmatpush2.msra.mxu0 0.0
      %1088 = vmatprep.subr.mxu0 0.0
      %1089 = vmatpush2.msra.mxu0 0.0
      %1090 = vmatprep.subr.mxu0 0.0
      %1091 = vmatpush2.msra.mxu0 0.0
      %1092 = vmatprep.mubr.f32.mxu0 0.0
      %1093 = vmatmul.mubr.f32.gmra.mxu0 %v948
      %v1094 = vpop.f32.mrf.mxu0
      %v1095 = vadd.f32 0.0, %v1094
      %v1096 = vpop.f32.mrf.mxu0
      %v1097 = vadd.f32 0.0, %v1096
      %1098 = vdwg.mxu0
      %v1099 = vadd.f32 %v953, %v1024
      %v1100 = vadd.f32 %v954, %v1026
      %v1101 = vadd.f32 %v955, %v1095
      %v1102 = vadd.f32 %v956, %v1097
      %v1103 = vxor.u32 %v1099, 2147483648
      %v1104 = vmul.f32 %v1103, 1.442695
      %v1105 = vpow.pop %v1104
      %v1106 = vadd.f32 %v1105, 1.0
      %v1107 = vrcp.pop %v1106
      %v1108 = vmul.f32 1.0, %v1107
      %v1109 = vxor.u32 %v1100, 2147483648
      %v1110 = vmul.f32 %v1109, 1.442695
      %v1111 = vpow.pop %v1110
      %v1112 = vadd.f32 %v1111, 1.0
      %v1113 = vrcp.pop %v1112
      %v1114 = vmul.f32 1.0, %v1113
      %v1115 = vtanh.pop %v1101
      %v1116 = vxor.u32 %v1102, 2147483648
      %v1117 = vmul.f32 %v1116, 1.442695
      %v1118 = vpow.pop %v1117
      %v1119 = vadd.f32 %v1118, 1.0
      %v1120 = vrcp.pop %v1119
      %v1121 = vmul.f32 1.0, %v1120
      %v1122 = vmul.f32 %v1114, %v949
      %v1123 = vmul.f32 %v1108, %v1115
      %v1124 = vadd.f32 %v1122, %v1123
      %v1125 = vtanh.pop %v1124
      %v1126 = vmul.f32 %v1121, %v1125
      %s1127 = scalar_lea.vmem %s300, 24
      %v1128 = vld [vmem:[%s1127] sm:$0xff]
      %1130 = vset.pattern.permute.xlu0 0
      %1131 = vperm.xlu0 %1130, %v1128
      %v1132 = vpop.permute.xlu0 %1131
      %v1134 = vmul.f32 %v1126, %v1132
      %v1135 = vmul.f32 %v1124, %v1132
      %s1136 = scalar_lea.vmem %s309, 24
      %1137 = vst [vmem:[%s1136] sm:$0xff] %v1134
      %1138 = vst [vmem:[#allocation2] sm:$0xff] %v1134
      %1139 = vst [vmem:[#allocation3] sm:$0xff] %v1135
      %s1140 = smul.u32 4, %s22
      %p1141 = scmp.lt.s32.totalorder %s1140, 11
      %s1142 = scalar_select %p1141, %s1140, 11
      %p1143 = scmp.lt.s32.totalorder %s21, 0
      %s1144 = scalar_select %p1143, %s21, 0
      %s1145 = sadd.s32 %s1144, %s1142
      %s1146 = smul.addr %s1145, 8
      %s1147 = scalar_lea.vmem %s3, %s1146
      %p1148 = scmp.lt.s32.totalorder %s21, 0
      %s1149 = scalar_select %p1148, %s21, 0
      %s1150 = smul.addr %s1149, 8
      %s1151 = scalar_lea.vmem %s4, %s1150
      %p1152 = scmp.lt.s32.totalorder %s21, 0
      %s1153 = scalar_select %p1152, %s21, 0
      %s1154 = smul.addr %s1153, 8
      %s1155 = scalar_lea.vmem %s5, %s1154
      // Predicated region
      $region41: #{mylstm1_forward.4} parent=31 // pred_check
        %p1156 = pneg %p126
      $region42: #{mylstm1_forward.4} parent=31 // pred_check_branch
        %1158 = sbr.rel (%p1156) target = $region44
      $region43: #{mylstm1_forward.4} parent=31 // pred_region
        %s1159 = smul.u32 4, %s22
      $region44: #{mylstm1_forward.4} parent=31 // pred_fallthru
        _
      // Predicated region
      $region45: #{mylstm1_forward.4} parent=31 // pred_check
        %p1160 = pneg %p152
      $region46: #{mylstm1_forward.4} parent=31 // pred_check_branch
        %1162 = sbr.rel (%p1160) target = $region48
      $region47: #{mylstm1_forward.4} parent=31 // pred_region
        _
      $region48: #{mylstm1_forward.4} parent=31 // pred_fallthru
        _
      // Predicated region
      $region49: #{mylstm1_forward.4} parent=31 // pred_check
        %p1163 = pneg %p178
      $region50: #{mylstm1_forward.4} parent=31 // pred_check_branch
        %1165 = sbr.rel (%p1163) target = $region52
      $region51: #{mylstm1_forward.4} parent=31 // pred_region
        _
      $region52: #{mylstm1_forward.4} parent=31 // pred_fallthru
        _
      // Predicated region
      $region53: #{mylstm1_forward.4} parent=31 // pred_check
        %p1166 = pneg %p152
      $region54: #{mylstm1_forward.4} parent=31 // pred_check_branch
        %1168 = sbr.rel (%p1166) target = $region56
      $region55: #{mylstm1_forward.4} parent=31 // pred_region
        %p1169 = scmp.lt.s32.totalorder %s21, 0
        %s1170 = scalar_select %p1169, %s21, 0
        %s1171 = smul.addr %s1170, 8
        %s1172 = scalar_lea.vmem %s4, %s1171
      $region56: #{mylstm1_forward.4} parent=31 // pred_fallthru
        _
      // Predicated region
      $region57: #{mylstm1_forward.4} parent=31 // pred_check
        %p1173 = pneg %p178
      $region58: #{mylstm1_forward.4} parent=31 // pred_check_branch
        %1175 = sbr.rel (%p1173) target = $region60
      $region59: #{mylstm1_forward.4} parent=31 // pred_region
        %p1176 = scmp.lt.s32.totalorder %s21, 0
        %s1177 = scalar_select %p1176, %s21, 0
        %s1178 = smul.addr %s1177, 8
        %s1179 = scalar_lea.vmem %s5, %s1178
      $region60: #{mylstm1_forward.4} parent=31 // pred_fallthru
        _
    $region32: #{mylstm1_forward.4} parent=5 // pred_fallthru
      _
    %p1180 = scmp.le.s32.totalorder 2, %s12
    // Predicated region
    $region61: #{mylstm1_forward.4} parent=5 // pred_check
      %p1181 = pneg %p1180
    $region62: #{mylstm1_forward.4} parent=5 // pred_check_branch
      %1183 = sbr.rel (%p1181) target = $region64
    $region63: #{mylstm1_forward.4} parent=5 // pred_region
      %s1184 = ssub.s32 %s12, 2
      // Predicated region
      $region65: #{mylstm1_forward.4} parent=63 // pred_check
        %p1185 = pneg %p132
      $region66: #{mylstm1_forward.4} parent=63 // pred_check_branch
        %1187 = sbr.rel (%p1185) target = $region68
      $region67: #{mylstm1_forward.4} parent=63 // pred_region
        %s1188 = smul.u32 4, %s24
        %p1189 = scmp.lt.s32.totalorder %s1188, 11
        %s1190 = scalar_select %p1189, %s1188, 11
        %p1191 = scmp.lt.s32.totalorder %s23, 0
        %s1192 = scalar_select %p1191, %s23, 0
        %s1193 = sadd.s32 %s1192, %s1190
        %s1194 = smul.addr %s1193, 8
        %s1195 = scalar_lea.vmem %s3, %s1194
      $region68: #{mylstm1_forward.4} parent=63 // pred_fallthru
        _
    $region64: #{mylstm1_forward.4} parent=5 // pred_fallthru
      _
  $region6: #{mylstm1_forward.4} parent=0 // loop_footer
    %s16 = sadd.s32 1, %s12
  $region7: #{mylstm1_forward.4} parent=0 // loop_footer_branch
    %11 = sbr.rel target = $region3
  $region8: #{mylstm1_forward.4} parent=0 // loop_exit
    _

</llo_original>
